<compile_context>
chip_gen: v7x
topology: tpu7x:2x2x1
jax: 0.10.0
libtpu: 0.0.40
codegen_flags: <defaults>
</compile_context>

<pallas_src>
import functools

import jax
import jax.numpy as jnp
from jax.experimental import pallas as pl
from jax.experimental.pallas import tpu as pltpu


def _upconcat_kernel(x_ref, w_ref, b_ref, skip_ref, out_ref, y_ref,
                     *, c_skip, c_out):
    """One (batch*depth)-band per grid step.

    x_ref    : (Mb, Cin)                     bf16 flattened input voxels
    w_ref    : (Cin, 8*Cout)                 bf16, taps folded into lanes
    b_ref    : (1, 8*Cout)                   f32 bias (tiled per tap)
    skip_ref : (d_band, 2, H, 2, W, 2*Cs)    parity-folded channels-last skip
    out_ref  : (d_band, 2, H, 2, W, 2*Ct)    parity-folded channels-last output
    y_ref    : (Mb, 8*Cout) f32 VMEM scratch (matmul result)
    """
    c_tot = c_skip + c_out
    d_band, _, H, _, W, _ = out_ref.shape

    # Deconv as a single large-M MXU matmul (bf16 in, f32 accumulate).
    y_ref[...] = (
        jnp.dot(x_ref[...], w_ref[...], preferred_element_type=jnp.float32)
        + b_ref[...]
    )

    # Fused channel concat: skip channels occupy lanes [0:Cs] (w-even) and
    # [Ct:Ct+Cs] (w-odd) of the parity-folded lane axis.
    skip = skip_ref[...]
    out_ref[:, :, :, :, :, 0:c_skip] = (
        skip[:, :, :, :, :, 0:c_skip].astype(out_ref.dtype))
    out_ref[:, :, :, :, :, c_tot:c_tot + c_skip] = (
        skip[:, :, :, :, :, c_skip:2 * c_skip].astype(out_ref.dtype))

    # Scatter the 8 taps: (kd, kh) are static indices above the (sublane, lane)
    # tile, kw is a contiguous lane slice, W (sublanes) stays dense.
    for kd in range(2):
        for kh in range(2):
            for kw in range(2):
                t = (kd * 2 + kh) * 2 + kw
                ytap = y_ref[:, t * c_out:(t + 1) * c_out].reshape(
                    d_band, H, W, c_out)
                out_ref[:, kd, :, kh, :,
                        kw * c_tot + c_skip:kw * c_tot + c_tot] = (
                    ytap.astype(out_ref.dtype))


def upconcat(inputs, down_outputs, weight, bias, *, d_band=None):
    """UpConcat forward.

    inputs       : (B, Cin, D, H, W)        NCDHW (like PyTorch)
    down_outputs : (B, Cs, 2D, 2H, 2W)      NCDHW skip connection
    weight       : (Cin, Cout, 2, 2, 2)     PyTorch ConvTranspose3d layout
    bias         : (Cout,)
    returns        (B, Cs + Cout, 2D, 2H, 2W)
    """
    B, c_in, D, H, W = inputs.shape
    assert weight.shape[0] == c_in and weight.shape[2:] == (2, 2, 2)
    c_out = weight.shape[1]
    Bs, c_skip, D2, H2, W2 = down_outputs.shape
    assert (Bs, D2, H2, W2) == (B, 2 * D, 2 * H, 2 * W)
    c_tot = c_skip + c_out
    out_dtype = jnp.promote_types(inputs.dtype, down_outputs.dtype)

    if d_band is None:
        # Aim for ~512 matmul rows per grid step; must divide D (bounds VMEM on
        # large volumes, keeps the MXU M-dim large).
        d_band = min(D, max(1, 512 // max(1, H * W)))
        while D % d_band:
            d_band -= 1
    assert D % d_band == 0
    n_bands = (B * D) // d_band
    mb = d_band * H * W

    # NCDHW -> channels-last; all reshapes below are contiguous (free).
    x_flat = jnp.transpose(inputs, (0, 2, 3, 4, 1)).reshape(
        B * D * H * W, c_in).astype(jnp.bfloat16)
    skip_f = jnp.transpose(down_outputs, (0, 2, 3, 4, 1)).reshape(
        B * D, 2, H, 2, W, 2 * c_skip)
    # (Cin, Cout, kd, kh, kw) -> (Cin, 8*Cout), tap-major columns, bf16 for MXU.
    w_all = jnp.transpose(weight, (0, 2, 3, 4, 1)).reshape(
        c_in, 8 * c_out).astype(jnp.bfloat16)
    b_all = jnp.tile(bias.astype(jnp.float32), 8).reshape(1, 8 * c_out)

    kern = functools.partial(_upconcat_kernel, c_skip=c_skip, c_out=c_out)

    out_k = pl.pallas_call(
        kern,
        out_shape=jax.ShapeDtypeStruct((B * D, 2, H, 2, W, 2 * c_tot),
                                       out_dtype),
        grid=(n_bands,),
        in_specs=[
            pl.BlockSpec((mb, c_in), lambda j: (j, 0)),
            pl.BlockSpec((c_in, 8 * c_out), lambda j: (0, 0)),
            pl.BlockSpec((1, 8 * c_out), lambda j: (0, 0)),
            pl.BlockSpec((d_band, 2, H, 2, W, 2 * c_skip),
                         lambda j: (j, 0, 0, 0, 0, 0)),
        ],
        out_specs=pl.BlockSpec((d_band, 2, H, 2, W, 2 * c_tot),
                               lambda j: (j, 0, 0, 0, 0, 0)),
        scratch_shapes=[pltpu.VMEM((mb, 8 * c_out), jnp.float32)],
        compiler_params=pltpu.CompilerParams(
            dimension_semantics=("parallel",)),
    )(x_flat, w_all, b_all, skip_f)

    # Parity-folded channels-last -> NDHWC (free reshape) -> NCDHW (one transpose).
    out_cl = out_k.reshape(B, 2 * D, 2 * H, 2 * W, c_tot)
    return jnp.transpose(out_cl, (0, 4, 1, 2, 3))


def _reference(inputs, down_outputs, weight, bias):
    """Pure-JAX reference matching the PyTorch forward (f32 math)."""
    B, c_in, D, H, W = inputs.shape
    c_out = weight.shape[1]
    # out[b,o,2d+x,2h+y,2w+z] = sum_i inputs[b,i,d,h,w] * weight[i,o,x,y,z] + bias[o]
    y = jnp.einsum('bidhw,ioxyz->bodxhywz', inputs, weight)
    y = y.reshape(B, c_out, 2 * D, 2 * H, 2 * W)
    y = y + bias[None, :, None, None, None]
    return jnp.concatenate([down_outputs, y], axis=1)


if __name__ == "__main__":
    # Small shapes consistent with the module: batch=2, in_feat=32, out_feat=16,
    # skip channels=16, input spatial 8^3 -> output spatial 16^3.
    B, Cin, Cout, Cs = 2, 32, 16, 16
    D, H, W = 8, 8, 8

    key = jax.random.PRNGKey(0)
    kx, ks, kw, kb = jax.random.split(key, 4)

    x = jax.random.normal(kx, (B, Cin, D, H, W), jnp.float32)
    down = jax.random.normal(ks, (B, Cs, 2 * D, 2 * H, 2 * W), jnp.float32)

    bound = float(1.0 / (Cin * 2 * 2 * 2) ** 0.5)
    weight = jax.random.uniform(kw, (Cin, Cout, 2, 2, 2), jnp.float32,
                                -bound, bound)
    bias = jax.random.uniform(kb, (Cout,), jnp.float32, -bound, bound)

    out = jax.jit(upconcat)(x, down, weight, bias)
    jax.block_until_ready(out)

    ref = _reference(x, down, weight, bias)
    assert out.shape == (B, Cs + Cout, 2 * D, 2 * H, 2 * W)
    # Skip channels are a pure copy -> exact.
    assert jnp.array_equal(out[:, :Cs], down)
    # Deconv channels use bf16 matmul inputs with f32 accumulation.
    max_err = float(jnp.max(jnp.abs(out - ref)))
    assert jnp.allclose(out, ref, atol=3e-2, rtol=3e-2), max_err

    print("KERNEL_OK")
</pallas_src>

<mosaic_0001>
module attributes {stable_mosaic.version = 11 : i64} {
  func.func @_upconcat_kernel(%arg0: i32, %arg1: memref<512x32xbf16, #tpu.memory_space<vmem>>, %arg2: memref<32x128xbf16, #tpu.memory_space<vmem>>, %arg3: memref<1x128xf32, #tpu.memory_space<vmem>>, %arg4: memref<8x2x8x2x8x32xf32, #tpu.memory_space<vmem>>, %arg5: memref<8x2x8x2x8x64xf32, #tpu.memory_space<vmem>>, %arg6: memref<512x128xf32, #tpu.memory_space<vmem>>) attributes {dimension_semantics = [#tpu.dimension_semantics<parallel>], iteration_bounds = array<i64: 2>, scalar_prefetch = 0 : i64, scratch_operands = 1 : i64, tpu.core_type = #tpu.core_type<tc>, window_params = [{transform_indices = @transform_0, window_bounds = array<i64: 512, 32>}, {pipeline_mode = #tpu.pipeline_mode<synchronous>, transform_indices = @transform_1, window_bounds = array<i64: 32, 128>}, {pipeline_mode = #tpu.pipeline_mode<synchronous>, transform_indices = @transform_2, window_bounds = array<i64: 1, 128>}, {transform_indices = @transform_3, window_bounds = array<i64: 8, 2, 8, 2, 8, 32>}, {transform_indices = @transform_4, window_bounds = array<i64: 8, 2, 8, 2, 8, 64>}]} {
    %c0 = arith.constant 0 : index
    %c0_0 = arith.constant 0 : index
    %0 = vector.load %arg1[%c0, %c0_0] : memref<512x32xbf16, #tpu.memory_space<vmem>>, vector<512x32xbf16>
    %c0_1 = arith.constant 0 : index
    %c0_2 = arith.constant 0 : index
    %1 = vector.load %arg2[%c0_1, %c0_2] : memref<32x128xbf16, #tpu.memory_space<vmem>>, vector<32x128xbf16>
    %cst = arith.constant dense<0.000000e+00> : vector<512x128xf32>
    %2 = tpu.matmul %0, %1, %cst {dimension_numbers = #tpu.dot_dimension_numbers<[1], [0], [0], [1], [0, 0, 1, 1], [], []>} : vector<512x32xbf16>, vector<32x128xbf16>, vector<512x128xf32> -> vector<512x128xf32>
    %c0_3 = arith.constant 0 : index
    %c0_4 = arith.constant 0 : index
    %3 = vector.load %arg3[%c0_3, %c0_4] : memref<1x128xf32, #tpu.memory_space<vmem>>, vector<1x128xf32>
    %4 = vector.broadcast %3 : vector<1x128xf32> to vector<512x128xf32>
    %5 = arith.addf %2, %4 : vector<512x128xf32>
    %c0_5 = arith.constant 0 : index
    %c0_6 = arith.constant 0 : index
    %6 = vector.load %arg6[%c0_5, %c0_6] : memref<512x128xf32, #tpu.memory_space<vmem>>, vector<512x128xf32>
    tpu.vector_store %arg6[%c0_5, %c0_6], %5 {strides = array<i32>} : memref<512x128xf32, #tpu.memory_space<vmem>>, vector<512x128xf32>,
    %c0_7 = arith.constant 0 : index
    %c0_8 = arith.constant 0 : index
    %c0_9 = arith.constant 0 : index
    %c0_10 = arith.constant 0 : index
    %c0_11 = arith.constant 0 : index
    %c0_12 = arith.constant 0 : index
    %7 = vector.load %arg4[%c0_7, %c0_8, %c0_9, %c0_10, %c0_11, %c0_12] : memref<8x2x8x2x8x32xf32, #tpu.memory_space<vmem>>, vector<8x2x8x2x8x32xf32>
    %8 = vector.extract_strided_slice %7 {offsets = [0, 0, 0, 0, 0, 0], sizes = [8, 2, 8, 2, 8, 16], strides = [1, 1, 1, 1, 1, 1]} : vector<8x2x8x2x8x32xf32> to vector<8x2x8x2x8x16xf32>
    %c0_13 = arith.constant 0 : index
    %c0_14 = arith.constant 0 : index
    %c0_15 = arith.constant 0 : index
    %c0_16 = arith.constant 0 : index
    %c0_17 = arith.constant 0 : index
    %c0_18 = arith.constant 0 : index
    %9 = vector.load %arg5[%c0_13, %c0_14, %c0_15, %c0_16, %c0_17, %c0_18] : memref<8x2x8x2x8x64xf32, #tpu.memory_space<vmem>>, vector<8x2x8x2x8x16xf32>
    tpu.vector_store %arg5[%c0_13, %c0_14, %c0_15, %c0_16, %c0_17, %c0_18], %8 {strides = array<i32>} : memref<8x2x8x2x8x64xf32, #tpu.memory_space<vmem>>, vector<8x2x8x2x8x16xf32>,
    %10 = vector.extract_strided_slice %7 {offsets = [0, 0, 0, 0, 0, 16], sizes = [8, 2, 8, 2, 8, 16], strides = [1, 1, 1, 1, 1, 1]} : vector<8x2x8x2x8x32xf32> to vector<8x2x8x2x8x16xf32>
    %c0_19 = arith.constant 0 : index
    %c0_20 = arith.constant 0 : index
    %c0_21 = arith.constant 0 : index
    %c0_22 = arith.constant 0 : index
    %c0_23 = arith.constant 0 : index
    %c32 = arith.constant 32 : index
    %11 = vector.load %arg5[%c0_19, %c0_20, %c0_21, %c0_22, %c0_23, %c32] : memref<8x2x8x2x8x64xf32, #tpu.memory_space<vmem>>, vector<8x2x8x2x8x16xf32>
    tpu.vector_store %arg5[%c0_19, %c0_20, %c0_21, %c0_22, %c0_23, %c32], %10 {strides = array<i32>} : memref<8x2x8x2x8x64xf32, #tpu.memory_space<vmem>>, vector<8x2x8x2x8x16xf32>,
    %c0_24 = arith.constant 0 : index
    %c0_25 = arith.constant 0 : index
    %12 = vector.load %arg6[%c0_24, %c0_25] : memref<512x128xf32, #tpu.memory_space<vmem>>, vector<512x16xf32>
    %13 = vector.shape_cast %12 : vector<512x16xf32> to vector<8x8x8x16xf32>
    %c0_26 = arith.constant 0 : index
    %c0_27 = arith.constant 0 : index
    %c0_28 = arith.constant 0 : index
    %c0_29 = arith.constant 0 : index
    %c0_30 = arith.constant 0 : index
    %c16 = arith.constant 16 : index
    %14 = vector.load %arg5[%c0_26, %c0_27, %c0_28, %c0_29, %c0_30, %c16] : memref<8x2x8x2x8x64xf32, #tpu.memory_space<vmem>>, vector<8x1x8x1x8x16xf32>
    %15 = vector.shape_cast %14 : vector<8x1x8x1x8x16xf32> to vector<8x8x8x16xf32>
    %16 = vector.shape_cast %13 : vector<8x8x8x16xf32> to vector<8x1x8x1x8x16xf32>
    tpu.vector_store %arg5[%c0_26, %c0_27, %c0_28, %c0_29, %c0_30, %c16], %16 {strides = array<i32>} : memref<8x2x8x2x8x64xf32, #tpu.memory_space<vmem>>, vector<8x1x8x1x8x16xf32>,
    %c0_31 = arith.constant 0 : index
    %c16_32 = arith.constant 16 : index
    %17 = vector.load %arg6[%c0_31, %c16_32] : memref<512x128xf32, #tpu.memory_space<vmem>>, vector<512x16xf32>
    %18 = vector.shape_cast %17 : vector<512x16xf32> to vector<8x8x8x16xf32>
    %c0_33 = arith.constant 0 : index
    %c0_34 = arith.constant 0 : index
    %c0_35 = arith.constant 0 : index
    %c0_36 = arith.constant 0 : index
    %c0_37 = arith.constant 0 : index
    %c48 = arith.constant 48 : index
    %19 = vector.load %arg5[%c0_33, %c0_34, %c0_35, %c0_36, %c0_37, %c48] : memref<8x2x8x2x8x64xf32, #tpu.memory_space<vmem>>, vector<8x1x8x1x8x16xf32>
    %20 = vector.shape_cast %19 : vector<8x1x8x1x8x16xf32> to vector<8x8x8x16xf32>
    %21 = vector.shape_cast %18 : vector<8x8x8x16xf32> to vector<8x1x8x1x8x16xf32>
    tpu.vector_store %arg5[%c0_33, %c0_34, %c0_35, %c0_36, %c0_37, %c48], %21 {strides = array<i32>} : memref<8x2x8x2x8x64xf32, #tpu.memory_space<vmem>>, vector<8x1x8x1x8x16xf32>,
    %c0_38 = arith.constant 0 : index
    %c32_39 = arith.constant 32 : index
    %22 = vector.load %arg6[%c0_38, %c32_39] : memref<512x128xf32, #tpu.memory_space<vmem>>, vector<512x16xf32>
    %23 = vector.shape_cast %22 : vector<512x16xf32> to vector<8x8x8x16xf32>
    %c0_40 = arith.constant 0 : index
    %c0_41 = arith.constant 0 : index
    %c0_42 = arith.constant 0 : index
    %c1 = arith.constant 1 : index
    %c0_43 = arith.constant 0 : index
    %c16_44 = arith.constant 16 : index
    %24 = vector.load %arg5[%c0_40, %c0_41, %c0_42, %c1, %c0_43, %c16_44] : memref<8x2x8x2x8x64xf32, #tpu.memory_space<vmem>>, vector<8x1x8x1x8x16xf32>
    %25 = vector.shape_cast %24 : vector<8x1x8x1x8x16xf32> to vector<8x8x8x16xf32>
    %26 = vector.shape_cast %23 : vector<8x8x8x16xf32> to vector<8x1x8x1x8x16xf32>
    tpu.vector_store %arg5[%c0_40, %c0_41, %c0_42, %c1, %c0_43, %c16_44], %26 {strides = array<i32>} : memref<8x2x8x2x8x64xf32, #tpu.memory_space<vmem>>, vector<8x1x8x1x8x16xf32>,
    %c0_45 = arith.constant 0 : index
    %c48_46 = arith.constant 48 : index
    %27 = vector.load %arg6[%c0_45, %c48_46] : memref<512x128xf32, #tpu.memory_space<vmem>>, vector<512x16xf32>
    %28 = vector.shape_cast %27 : vector<512x16xf32> to vector<8x8x8x16xf32>
    %c0_47 = arith.constant 0 : index
    %c0_48 = arith.constant 0 : index
    %c0_49 = arith.constant 0 : index
    %c1_50 = arith.constant 1 : index
    %c0_51 = arith.constant 0 : index
    %c48_52 = arith.constant 48 : index
    %29 = vector.load %arg5[%c0_47, %c0_48, %c0_49, %c1_50, %c0_51, %c48_52] : memref<8x2x8x2x8x64xf32, #tpu.memory_space<vmem>>, vector<8x1x8x1x8x16xf32>
    %30 = vector.shape_cast %29 : vector<8x1x8x1x8x16xf32> to vector<8x8x8x16xf32>
    %31 = vector.shape_cast %28 : vector<8x8x8x16xf32> to vector<8x1x8x1x8x16xf32>
    tpu.vector_store %arg5[%c0_47, %c0_48, %c0_49, %c1_50, %c0_51, %c48_52], %31 {strides = array<i32>} : memref<8x2x8x2x8x64xf32, #tpu.memory_space<vmem>>, vector<8x1x8x1x8x16xf32>,
    %c0_53 = arith.constant 0 : index
    %c64 = arith.constant 64 : index
    %32 = vector.load %arg6[%c0_53, %c64] : memref<512x128xf32, #tpu.memory_space<vmem>>, vector<512x16xf32>
    %33 = vector.shape_cast %32 : vector<512x16xf32> to vector<8x8x8x16xf32>
    %c0_54 = arith.constant 0 : index
    %c1_55 = arith.constant 1 : index
    %c0_56 = arith.constant 0 : index
    %c0_57 = arith.constant 0 : index
    %c0_58 = arith.constant 0 : index
    %c16_59 = arith.constant 16 : index
    %34 = vector.load %arg5[%c0_54, %c1_55, %c0_56, %c0_57, %c0_58, %c16_59] : memref<8x2x8x2x8x64xf32, #tpu.memory_space<vmem>>, vector<8x1x8x1x8x16xf32>
    %35 = vector.shape_cast %34 : vector<8x1x8x1x8x16xf32> to vector<8x8x8x16xf32>
    %36 = vector.shape_cast %33 : vector<8x8x8x16xf32> to vector<8x1x8x1x8x16xf32>
    tpu.vector_store %arg5[%c0_54, %c1_55, %c0_56, %c0_57, %c0_58, %c16_59], %36 {strides = array<i32>} : memref<8x2x8x2x8x64xf32, #tpu.memory_space<vmem>>, vector<8x1x8x1x8x16xf32>,
    %c0_60 = arith.constant 0 : index
    %c80 = arith.constant 80 : index
    %37 = vector.load %arg6[%c0_60, %c80] : memref<512x128xf32, #tpu.memory_space<vmem>>, vector<512x16xf32>
    %38 = vector.shape_cast %37 : vector<512x16xf32> to vector<8x8x8x16xf32>
    %c0_61 = arith.constant 0 : index
    %c1_62 = arith.constant 1 : index
    %c0_63 = arith.constant 0 : index
    %c0_64 = arith.constant 0 : index
    %c0_65 = arith.constant 0 : index
    %c48_66 = arith.constant 48 : index
    %39 = vector.load %arg5[%c0_61, %c1_62, %c0_63, %c0_64, %c0_65, %c48_66] : memref<8x2x8x2x8x64xf32, #tpu.memory_space<vmem>>, vector<8x1x8x1x8x16xf32>
    %40 = vector.shape_cast %39 : vector<8x1x8x1x8x16xf32> to vector<8x8x8x16xf32>
    %41 = vector.shape_cast %38 : vector<8x8x8x16xf32> to vector<8x1x8x1x8x16xf32>
    tpu.vector_store %arg5[%c0_61, %c1_62, %c0_63, %c0_64, %c0_65, %c48_66], %41 {strides = array<i32>} : memref<8x2x8x2x8x64xf32, #tpu.memory_space<vmem>>, vector<8x1x8x1x8x16xf32>,
    %c0_67 = arith.constant 0 : index
    %c96 = arith.constant 96 : index
    %42 = vector.load %arg6[%c0_67, %c96] : memref<512x128xf32, #tpu.memory_space<vmem>>, vector<512x16xf32>
    %43 = vector.shape_cast %42 : vector<512x16xf32> to vector<8x8x8x16xf32>
    %c0_68 = arith.constant 0 : index
    %c1_69 = arith.constant 1 : index
    %c0_70 = arith.constant 0 : index
    %c1_71 = arith.constant 1 : index
    %c0_72 = arith.constant 0 : index
    %c16_73 = arith.constant 16 : index
    %44 = vector.load %arg5[%c0_68, %c1_69, %c0_70, %c1_71, %c0_72, %c16_73] : memref<8x2x8x2x8x64xf32, #tpu.memory_space<vmem>>, vector<8x1x8x1x8x16xf32>
    %45 = vector.shape_cast %44 : vector<8x1x8x1x8x16xf32> to vector<8x8x8x16xf32>
    %46 = vector.shape_cast %43 : vector<8x8x8x16xf32> to vector<8x1x8x1x8x16xf32>
    tpu.vector_store %arg5[%c0_68, %c1_69, %c0_70, %c1_71, %c0_72, %c16_73], %46 {strides = array<i32>} : memref<8x2x8x2x8x64xf32, #tpu.memory_space<vmem>>, vector<8x1x8x1x8x16xf32>,
    %c0_74 = arith.constant 0 : index
    %c112 = arith.constant 112 : index
    %47 = vector.load %arg6[%c0_74, %c112] : memref<512x128xf32, #tpu.memory_space<vmem>>, vector<512x16xf32>
    %48 = vector.shape_cast %47 : vector<512x16xf32> to vector<8x8x8x16xf32>
    %c0_75 = arith.constant 0 : index
    %c1_76 = arith.constant 1 : index
    %c0_77 = arith.constant 0 : index
    %c1_78 = arith.constant 1 : index
    %c0_79 = arith.constant 0 : index
    %c48_80 = arith.constant 48 : index
    %49 = vector.load %arg5[%c0_75, %c1_76, %c0_77, %c1_78, %c0_79, %c48_80] : memref<8x2x8x2x8x64xf32, #tpu.memory_space<vmem>>, vector<8x1x8x1x8x16xf32>
    %50 = vector.shape_cast %49 : vector<8x1x8x1x8x16xf32> to vector<8x8x8x16xf32>
    %51 = vector.shape_cast %48 : vector<8x8x8x16xf32> to vector<8x1x8x1x8x16xf32>
    tpu.vector_store %arg5[%c0_75, %c1_76, %c0_77, %c1_78, %c0_79, %c48_80], %51 {strides = array<i32>} : memref<8x2x8x2x8x64xf32, #tpu.memory_space<vmem>>, vector<8x1x8x1x8x16xf32>,
    return
  }
  func.func @transform_0(%arg0: i32) -> (i32, i32) {
    %c0_i32 = arith.constant 0 : i32
    %c0_i32_0 = arith.constant 0 : i32
    return %arg0, %c0_i32 : i32, i32
  }
  func.func @transform_1(%arg0: i32) -> (i32, i32) {
    %c0_i32 = arith.constant 0 : i32
    %c0_i32_0 = arith.constant 0 : i32
    %c0_i32_1 = arith.constant 0 : i32
    return %c0_i32, %c0_i32_0 : i32, i32
  }
  func.func @transform_2(%arg0: i32) -> (i32, i32) {
    %c0_i32 = arith.constant 0 : i32
    %c0_i32_0 = arith.constant 0 : i32
    %c0_i32_1 = arith.constant 0 : i32
    return %c0_i32, %c0_i32_0 : i32, i32
  }
  func.func @transform_3(%arg0: i32) -> (i32, i32, i32, i32, i32, i32) {
    %c0_i32 = arith.constant 0 : i32
    %c0_i32_0 = arith.constant 0 : i32
    %c0_i32_1 = arith.constant 0 : i32
    %c0_i32_2 = arith.constant 0 : i32
    %c0_i32_3 = arith.constant 0 : i32
    %c0_i32_4 = arith.constant 0 : i32
    return %arg0, %c0_i32, %c0_i32_0, %c0_i32_1, %c0_i32_2, %c0_i32_3 : i32, i32, i32, i32, i32, i32
  }
  func.func @transform_4(%arg0: i32) -> (i32, i32, i32, i32, i32, i32) {
    %c0_i32 = arith.constant 0 : i32
    %c0_i32_0 = arith.constant 0 : i32
    %c0_i32_1 = arith.constant 0 : i32
    %c0_i32_2 = arith.constant 0 : i32
    %c0_i32_3 = arith.constant 0 : i32
    %c0_i32_4 = arith.constant 0 : i32
    return %arg0, %c0_i32, %c0_i32_0, %c0_i32_1, %c0_i32_2, %c0_i32_3 : i32, i32, i32, i32, i32, i32
  }
}

</mosaic_0001>

<llo_original>
// kernel: tile.9
$region0: #{tile.9}
  %s0 = inlined_call_operand.vmem [shape: f32[8,16], index: 0, kind: input, shape index: {}]
  %s1 = inlined_call_operand.vmem [shape: f32[1,128], index: 1, kind: output, shape index: {}]
  $region1: #{tile.9} parent=0
    #allocation0 [shape = 'u8[4096]{0}', space=vmem, size = 0x1000, scoped, tag = 'scoped mem for output reshape']
    %v2 = vld [vmem:[%s0] sm:$0x1]
    %vm3 = vcmask 130048
    %4 = vst.msk [vmem:[#allocation0] sm:$0x1] %vm3, %v2
    %s5 = scalar_lea.vmem %s0, 7
    %v6 = vld [vmem:[%s5] sm:$0x1]
    %7 = vrot.lane.b32.xlu0 %v6, 112
    %v8 = vpop.permute.xlu0 %7
    %vm9 = vcmask 1048448
    %10 = vst.msk [vmem:[#allocation0] sm:$0x1] %vm9, %v8
    %s11 = scalar_lea.vmem %s0, 6
    %v12 = vld [vmem:[%s11] sm:$0x1]
    %13 = vrot.lane.b32.xlu0 %v12, 96
    %v14 = vpop.permute.xlu0 %13
    %vm15 = vcmask 917248
    %16 = vst.msk [vmem:[#allocation0] sm:$0x1] %vm15, %v14
    %s17 = scalar_lea.vmem %s0, 5
    %v18 = vld [vmem:[%s17] sm:$0x1]
    %19 = vrot.lane.b32.xlu0 %v18, 80
    %v20 = vpop.permute.xlu0 %19
    %vm21 = vcmask 786048
    %22 = vst.msk [vmem:[#allocation0] sm:$0x1] %vm21, %v20
    %s23 = scalar_lea.vmem %s0, 4
    %v24 = vld [vmem:[%s23] sm:$0x1]
    %25 = vrot.lane.b32.xlu0 %v24, 64
    %v26 = vpop.permute.xlu0 %25
    %vm27 = vcmask 654848
    %28 = vst.msk [vmem:[#allocation0] sm:$0x1] %vm27, %v26
    %s29 = scalar_lea.vmem %s0, 3
    %v30 = vld [vmem:[%s29] sm:$0x1]
    %31 = vrot.lane.b32.xlu0 %v30, 48
    %v32 = vpop.permute.xlu0 %31
    %vm33 = vcmask 523648
    %34 = vst.msk [vmem:[#allocation0] sm:$0x1] %vm33, %v32
    %s35 = scalar_lea.vmem %s0, 2
    %v36 = vld [vmem:[%s35] sm:$0x1]
    %37 = vrot.lane.b32.xlu0 %v36, 32
    %v38 = vpop.permute.xlu0 %37
    %vm39 = vcmask 392448
    %40 = vst.msk [vmem:[#allocation0] sm:$0x1] %vm39, %v38
    %s41 = scalar_lea.vmem %s0, 1
    %v42 = vld [vmem:[%s41] sm:$0x1]
    %43 = vrot.lane.b32.xlu0 %v42, 16
    %v44 = vpop.permute.xlu0 %43
    %vm45 = vcmask 261248
    %46 = vst.msk [vmem:[#allocation0] sm:$0x1] %vm45, %v44
    %s48 = sshllo.u32 0, 1
    %v50 = vld [vmem:[#allocation0] sm:%s48]
    %s51 = sshllo.u32 0, 1
    %52 = vst [vmem:[%s1] sm:%s51] %v50

// kernel: tile.8
$region0: #{tile.8}
  #allocation0 [shape = 's32[1]{0}', space=sflag, size = 0x4, scoped, tag = 'scoped memory for tile.8']
  %s0 = inlined_call_operand.vmem [shape: f32[16], index: 0, kind: input, shape index: {}]
  %s1 = inlined_call_operand.vmem [shape: f32[8,16], index: 1, kind: output, shape index: {}]
  // Predicated region
  $region2: #{tile.8} parent=0 // pred_check
    _
  $region3: #{tile.8} parent=0 // pred_check_branch
    %3 = sbr.rel (0) target = $region5
  $region4: #{tile.8} parent=0 // pred_region
    _
  $region5: #{tile.8} parent=0 // pred_fallthru
    _
  %v4 = vld [vmem:[%s0] ss:$0 sm:$0xff]
  %5 = vst [vmem:[%s1] sm:$0xff] %v4

// kernel: upconcat.1
$region0: #{upconcat.1}
  #allocation0 [shape = 'u32[]', space=smem, size = 0x4, offset = 0x4, fixed_abs, tag = 'smem constant byte address 0x4 - core index']
  #allocation1 [shape = 'u32[144,128]{1,0:T(1,128)}', space=vmem, size = 0x12000, scoped, tag = 'internal scratch']
  #allocation2 [shape = 'f32[512,128]{1,0:T(8,128)}', space=vmem, size = 0x40000, scoped, tag = 'scratch operand']
  %s0 = inlined_call_operand.vmem [shape: bf16[1024,32], index: 0, kind: input, shape index: {}]
  %s1 = inlined_call_operand.vmem [shape: bf16[32,128], index: 1, kind: input, shape index: {}]
  %s2 = inlined_call_operand.vmem [shape: f32[1,128], index: 2, kind: input, shape index: {}]
  %s3 = inlined_call_operand.vmem [shape: f32[16,2,8,2,8,32], index: 3, kind: input, shape index: {}]
  %s4 = inlined_call_operand.vmem [shape: f32[16,2,8,2,8,64], index: 4, kind: output, shape index: {}]
  %s5 = sld [smem:[#allocation0]]
  $region49: #{upconcat.1} parent=0
    _
  %s7 = ssub.s32 1, %s5
  %s8 = scalar_select 0, %s7, %s5
  loop: start=0, step=1, limit=4
  $region2: #{upconcat.1} parent=0 // loop_pre_header
    _
  $region3: #{upconcat.1} parent=0 // loop_header
    %s10 = sphi 0, %s14
    %p11 = scmp.ge.s32.totalorder %s10, 4
    %s20 = sphi 0, %s22
    %s23 = sphi 0, %s20
    %s24 = sphi 0, %s23
    %s40 = sphi 0, %s24
    %s44 = sphi 0, %s44
    %s46 = sphi 0, %s44
    %s47 = sphi 0, %s46
    %s61 = sphi 0, %s47
    %s65 = sphi 0, %s65
    %s67 = sphi 0, %s65
    %s68 = sphi 0, %s67
    %s82 = sphi 0, %s68
    %s88 = sphi 0, %s90
    %s91 = sphi 0, %s88
    %s92 = sphi 0, %s91
    %s108 = sphi 0, %s92
    %s114 = sphi 0, %s116
    %s117 = sphi 0, %s114
    %s118 = sphi 0, %s117
    %s134 = sphi 0, %s118
  $region4: #{upconcat.1} parent=0 // loop_header_branch
    %13 = sbr.rel (%p11) target = $region8
  $region5: #{upconcat.1} parent=0 // loop_body
    %s15 = ssub.s32 %s10, 1
    %s16 = ssub.s32 %s10, 2
    %s17 = sadd.s32 %s10, 1
    %s18 = ssub.s32 %s10, %s17
    %p19 = scmp.eq.s32.totalorder %s18, 0
    %s21 = sadd.s32 %s20, 1
    %s22 = scalar_select %p19, %s20, %s21
    %p25 = pneg %p19
    %p26 = scmp.eq.s32.totalorder %s10, 1
    %p27 = por %p25, %p26
    %p28 = scmp.ne.s32.totalorder %s20, %s23
    %p29 = scmp.eq.s32.totalorder %s10, 0
    %p30 = por %p28, %p29
    %p31 = scmp.ne.s32.totalorder %s20, %s23
    %p32 = scmp.eq.s32.totalorder %s15, 1
    %p33 = por %p31, %p32
    %p34 = scmp.ne.s32.totalorder %s23, %s24
    %p35 = scmp.eq.s32.totalorder %s15, 0
    %p36 = por %p34, %p35
    %p37 = scmp.ne.s32.totalorder %s23, %s24
    %p38 = scmp.eq.s32.totalorder %s16, 1
    %p39 = por %p37, %p38
    %p41 = scmp.ne.s32.totalorder %s24, %s40
    %p42 = scmp.eq.s32.totalorder %s16, 0
    %p43 = por %p41, %p42
    %s45 = sadd.s32 %s44, 1
    %p48 = scmp.eq.s32.totalorder %s10, 1
    %p49 = scmp.ne.s32.totalorder %s44, %s46
    %p50 = scmp.eq.s32.totalorder %s10, 0
    %p51 = por %p49, %p50
    %p52 = scmp.ne.s32.totalorder %s44, %s46
    %p53 = scmp.eq.s32.totalorder %s15, 1
    %p54 = por %p52, %p53
    %p55 = scmp.ne.s32.totalorder %s46, %s47
    %p56 = scmp.eq.s32.totalorder %s15, 0
    %p57 = por %p55, %p56
    %p58 = scmp.ne.s32.totalorder %s46, %s47
    %p59 = scmp.eq.s32.totalorder %s16, 1
    %p60 = por %p58, %p59
    %p62 = scmp.ne.s32.totalorder %s47, %s61
    %p63 = scmp.eq.s32.totalorder %s16, 0
    %p64 = por %p62, %p63
    %s66 = sadd.s32 %s65, 1
    %p69 = scmp.eq.s32.totalorder %s10, 1
    %p70 = scmp.ne.s32.totalorder %s65, %s67
    %p71 = scmp.eq.s32.totalorder %s10, 0
    %p72 = por %p70, %p71
    %p73 = scmp.ne.s32.totalorder %s65, %s67
    %p74 = scmp.eq.s32.totalorder %s15, 1
    %p75 = por %p73, %p74
    %p76 = scmp.ne.s32.totalorder %s67, %s68
    %p77 = scmp.eq.s32.totalorder %s15, 0
    %p78 = por %p76, %p77
    %p79 = scmp.ne.s32.totalorder %s67, %s68
    %p80 = scmp.eq.s32.totalorder %s16, 1
    %p81 = por %p79, %p80
    %p83 = scmp.ne.s32.totalorder %s68, %s82
    %p84 = scmp.eq.s32.totalorder %s16, 0
    %p85 = por %p83, %p84
    %s86 = ssub.s32 %s10, %s17
    %p87 = scmp.eq.s32.totalorder %s86, 0
    %s89 = sadd.s32 %s88, 1
    %s90 = scalar_select %p87, %s88, %s89
    %p93 = pneg %p87
    %p94 = scmp.eq.s32.totalorder %s10, 1
    %p95 = por %p93, %p94
    %p96 = scmp.ne.s32.totalorder %s88, %s91
    %p97 = scmp.eq.s32.totalorder %s10, 0
    %p98 = por %p96, %p97
    %p99 = scmp.ne.s32.totalorder %s88, %s91
    %p100 = scmp.eq.s32.totalorder %s15, 1
    %p101 = por %p99, %p100
    %p102 = scmp.ne.s32.totalorder %s91, %s92
    %p103 = scmp.eq.s32.totalorder %s15, 0
    %p104 = por %p102, %p103
    %p105 = scmp.ne.s32.totalorder %s91, %s92
    %p106 = scmp.eq.s32.totalorder %s16, 1
    %p107 = por %p105, %p106
    %p109 = scmp.ne.s32.totalorder %s92, %s108
    %p110 = scmp.eq.s32.totalorder %s16, 0
    %p111 = por %p109, %p110
    %s112 = ssub.s32 %s10, %s17
    %p113 = scmp.eq.s32.totalorder %s112, 0
    %s115 = sadd.s32 %s114, 1
    %s116 = scalar_select %p113, %s114, %s115
    %p119 = pneg %p113
    %p120 = scmp.eq.s32.totalorder %s10, 1
    %p121 = por %p119, %p120
    %p122 = scmp.ne.s32.totalorder %s114, %s117
    %p123 = scmp.eq.s32.totalorder %s10, 0
    %p124 = por %p122, %p123
    %p125 = scmp.ne.s32.totalorder %s114, %s117
    %p126 = scmp.eq.s32.totalorder %s15, 1
    %p127 = por %p125, %p126
    %p128 = scmp.ne.s32.totalorder %s117, %s118
    %p129 = scmp.eq.s32.totalorder %s15, 0
    %p130 = por %p128, %p129
    %p131 = scmp.ne.s32.totalorder %s117, %s118
    %p132 = scmp.eq.s32.totalorder %s16, 1
    %p133 = por %p131, %p132
    %p135 = scmp.ne.s32.totalorder %s118, %s134
    %p136 = scmp.eq.s32.totalorder %s16, 0
    %p137 = por %p135, %p136
    %p138 = scmp.le.s32.totalorder 1, %s10
    %p139 = scmp.lt.s32.totalorder %s10, 3
    %p140 = pnand %p138, %p139
    %p141 = pneg %p140
    // Predicated region
    $region9: #{upconcat.1} parent=5 // pred_check
      _
    $region10: #{upconcat.1} parent=5 // pred_check_branch
      %143 = sbr.rel (%p140) target = $region12
    $region11: #{upconcat.1} parent=5 // pred_region
      %s144 = ssub.s32 %s10, 1
      // Predicated region
      $region13: #{upconcat.1} parent=11 // pred_check
        %p145 = pneg %p57
      $region14: #{upconcat.1} parent=11 // pred_check_branch
        %147 = sbr.rel (%p145) target = $region16
      $region15: #{upconcat.1} parent=11 // pred_region
        _
      $region16: #{upconcat.1} parent=11 // pred_fallthru
        _
      // Predicated region
      $region17: #{upconcat.1} parent=11 // pred_check
        %p148 = pneg %p78
      $region18: #{upconcat.1} parent=11 // pred_check_branch
        %150 = sbr.rel (%p148) target = $region20
      $region19: #{upconcat.1} parent=11 // pred_region
        _
      $region20: #{upconcat.1} parent=11 // pred_fallthru
        _
    $region12: #{upconcat.1} parent=5 // pred_fallthru
      _
    %p151 = scmp.lt.s32.totalorder %s10, 2
    // Predicated region
    $region21: #{upconcat.1} parent=5 // pred_check
      %p152 = pneg %p151
    $region22: #{upconcat.1} parent=5 // pred_check_branch
      %154 = sbr.rel (%p152) target = $region24
    $region23: #{upconcat.1} parent=5 // pred_region
      // Predicated region
      $region25: #{upconcat.1} parent=23 // pred_check
        %p155 = pneg %p30
      $region26: #{upconcat.1} parent=23 // pred_check_branch
        %157 = sbr.rel (%p155) target = $region28
      $region27: #{upconcat.1} parent=23 // pred_region
        %s158 = smul.u32 64, %s10
        %p159 = scmp.lt.s32.totalorder %s158, 127
        %s160 = scalar_select %p159, %s158, 127
        %s161 = smul.addr %s160, 4
        %s162 = scalar_lea.vmem %s0, %s161
        %s163 = smul.u32 64, %s10
      $region28: #{upconcat.1} parent=23 // pred_fallthru
        _
      // Predicated region
      $region29: #{upconcat.1} parent=23 // pred_check
        %p164 = pneg %p98
      $region30: #{upconcat.1} parent=23 // pred_check_branch
        %166 = sbr.rel (%p164) target = $region32
      $region31: #{upconcat.1} parent=23 // pred_region
        %s167 = smul.u32 8, %s10
        %p168 = scmp.lt.s32.totalorder %s167, 15
        %s169 = scalar_select %p168, %s167, 15
        %s170 = smul.addr %s169, 32
        %s171 = smul.addr %s170, 8
        %s172 = scalar_lea.vmem %s3, %s171
        %s173 = smul.u32 8, %s10
      $region32: #{upconcat.1} parent=23 // pred_fallthru
        _
    $region24: #{upconcat.1} parent=5 // pred_fallthru
      _
    %p174 = scmp.le.s32.totalorder 1, %s10
    %p175 = scmp.lt.s32.totalorder %s10, 3
    %p176 = pnand %p174, %p175
    %p177 = pneg %p176
    // Predicated region
    $region33: #{upconcat.1} parent=5 // pred_check
      _
    $region34: #{upconcat.1} parent=5 // pred_check_branch
      %179 = sbr.rel (%p176) target = $region36
    $region35: #{upconcat.1} parent=5 // pred_region
      %s180 = ssub.s32 %s10, 1
      %s181 = smul.u32 64, %s15
      %p182 = scmp.lt.s32.totalorder %s181, 127
      %s183 = scalar_select %p182, %s181, 127
      %s184 = smul.addr %s183, 4
      %s185 = scalar_lea.vmem %s0, %s184
      %p186 = pneg %p36
      %p187 = pneg %p33
      %p188 = pneg %p57
      %p189 = pneg %p54
      %p190 = pneg %p78
      %p191 = pneg %p75
      %s192 = smul.u32 8, %s15
      %p193 = scmp.lt.s32.totalorder %s192, 15
      %s194 = scalar_select %p193, %s192, 15
      %s195 = smul.addr %s194, 32
      %s196 = smul.addr %s195, 8
      %s197 = scalar_lea.vmem %s3, %s196
      %p198 = pneg %p104
      %p199 = pneg %p101
      %p200 = pneg %p130
      %p201 = pneg %p127
      %s202 = smul.u32 8, %s15
      %p203 = scmp.lt.s32.totalorder %s202, 15
      %s204 = scalar_select %p203, %s202, 15
      %s205 = smul.addr %s204, 32
      %s206 = smul.addr %s205, 8
      %s207 = scalar_lea.vmem %s4, %s206
      %s208 = smul.u32 64, %s15
      %p209 = scmp.lt.s32.totalorder %s208, 127
      %s210 = scalar_select %p209, %s208, 127
      %s211 = smul.addr %s210, 4
      %s212 = scalar_lea.vmem %s0, %s211
      %s213 = smul.u32 64, %s15
      %s214 = smul.u32 8, %s15
      %p215 = scmp.lt.s32.totalorder %s214, 15
      %s216 = scalar_select %p215, %s214, 15
      %s217 = smul.addr %s216, 32
      %s218 = smul.addr %s217, 8
      %s219 = scalar_lea.vmem %s3, %s218
      %s220 = smul.u32 8, %s15
      %s221 = smul.u32 8, %s15
      %p222 = scmp.lt.s32.totalorder %s221, 15
      %s223 = scalar_select %p222, %s221, 15
      %s224 = smul.addr %s223, 32
      %s225 = smul.addr %s224, 8
      %s226 = scalar_lea.vmem %s4, %s225
      %s227 = smul.u32 8, %s15
      %v229 = vld [vmem:[%s212] sm:$0xf]
      %v230 = vld [vmem:[%s212 + $0x4] sm:$0xf]
      %v231 = vld [vmem:[%s212 + $0x8] sm:$0xf]
      %v232 = vld [vmem:[%s212 + $0xc] sm:$0xf]
      %v233 = vld [vmem:[%s212 + $0x10] sm:$0xf]
      %v234 = vld [vmem:[%s212 + $0x14] sm:$0xf]
      %v235 = vld [vmem:[%s212 + $0x18] sm:$0xf]
      %v236 = vld [vmem:[%s212 + $0x1c] sm:$0xf]
      %v237 = vld [vmem:[%s212 + $0x20] sm:$0xf]
      %v238 = vld [vmem:[%s212 + $0x24] sm:$0xf]
      %v239 = vld [vmem:[%s212 + $0x28] sm:$0xf]
      %v240 = vld [vmem:[%s212 + $0x2c] sm:$0xf]
      %v241 = vld [vmem:[%s212 + $0x30] sm:$0xf]
      %v242 = vld [vmem:[%s212 + $0x34] sm:$0xf]
      %v243 = vld [vmem:[%s212 + $0x38] sm:$0xf]
      %v244 = vld [vmem:[%s212 + $0x3c] sm:$0xf]
      %v245 = vld [vmem:[%s212 + $0x40] sm:$0xf]
      %v246 = vld [vmem:[%s212 + $0x44] sm:$0xf]
      %v247 = vld [vmem:[%s212 + $0x48] sm:$0xf]
      %v248 = vld [vmem:[%s212 + $0x4c] sm:$0xf]
      %v249 = vld [vmem:[%s212 + $0x50] sm:$0xf]
      %v250 = vld [vmem:[%s212 + $0x54] sm:$0xf]
      %v251 = vld [vmem:[%s212 + $0x58] sm:$0xf]
      %v252 = vld [vmem:[%s212 + $0x5c] sm:$0xf]
      %v253 = vld [vmem:[%s212 + $0x60] sm:$0xf]
      %v254 = vld [vmem:[%s212 + $0x64] sm:$0xf]
      %v255 = vld [vmem:[%s212 + $0x68] sm:$0xf]
      %v256 = vld [vmem:[%s212 + $0x6c] sm:$0xf]
      %v257 = vld [vmem:[%s212 + $0x70] sm:$0xf]
      %v258 = vld [vmem:[%s212 + $0x74] sm:$0xf]
      %v259 = vld [vmem:[%s212 + $0x78] sm:$0xf]
      %v260 = vld [vmem:[%s212 + $0x7c] sm:$0xf]
      %v261 = vld [vmem:[%s212 + $0x80] sm:$0xf]
      %v262 = vld [vmem:[%s212 + $0x84] sm:$0xf]
      %v263 = vld [vmem:[%s212 + $0x88] sm:$0xf]
      %v264 = vld [vmem:[%s212 + $0x8c] sm:$0xf]
      %v265 = vld [vmem:[%s212 + $0x90] sm:$0xf]
      %v266 = vld [vmem:[%s212 + $0x94] sm:$0xf]
      %v267 = vld [vmem:[%s212 + $0x98] sm:$0xf]
      %v268 = vld [vmem:[%s212 + $0x9c] sm:$0xf]
      %v269 = vld [vmem:[%s212 + $0xa0] sm:$0xf]
      %v270 = vld [vmem:[%s212 + $0xa4] sm:$0xf]
      %v271 = vld [vmem:[%s212 + $0xa8] sm:$0xf]
      %v272 = vld [vmem:[%s212 + $0xac] sm:$0xf]
      %v273 = vld [vmem:[%s212 + $0xb0] sm:$0xf]
      %v274 = vld [vmem:[%s212 + $0xb4] sm:$0xf]
      %v275 = vld [vmem:[%s212 + $0xb8] sm:$0xf]
      %v276 = vld [vmem:[%s212 + $0xbc] sm:$0xf]
      %v277 = vld [vmem:[%s212 + $0xc0] sm:$0xf]
      %v278 = vld [vmem:[%s212 + $0xc4] sm:$0xf]
      %v279 = vld [vmem:[%s212 + $0xc8] sm:$0xf]
      %v280 = vld [vmem:[%s212 + $0xcc] sm:$0xf]
      %v281 = vld [vmem:[%s212 + $0xd0] sm:$0xf]
      %v282 = vld [vmem:[%s212 + $0xd4] sm:$0xf]
      %v283 = vld [vmem:[%s212 + $0xd8] sm:$0xf]
      %v284 = vld [vmem:[%s212 + $0xdc] sm:$0xf]
      %v285 = vld [vmem:[%s212 + $0xe0] sm:$0xf]
      %v286 = vld [vmem:[%s212 + $0xe4] sm:$0xf]
      %v287 = vld [vmem:[%s212 + $0xe8] sm:$0xf]
      %v288 = vld [vmem:[%s212 + $0xec] sm:$0xf]
      %v289 = vld [vmem:[%s212 + $0xf0] sm:$0xf]
      %v290 = vld [vmem:[%s212 + $0xf4] sm:$0xf]
      %v291 = vld [vmem:[%s212 + $0xf8] sm:$0xf]
      %v292 = vld [vmem:[%s212 + $0xfc] sm:$0xf]
      %v293 = vld [vmem:[%s1] sm:$0xf]
      %v294 = vld [vmem:[%s1 + $0x4] sm:$0xf]
      %v295 = vld [vmem:[%s1 + $0x8] sm:$0xf]
      %v296 = vld [vmem:[%s1 + $0xc] sm:$0xf]
      %v297 = vld [vmem:[%s2] sm:$0x1]
      %v299 = vlaneseq
      %v300 = vshrl.u32 %v299, 7
      %v301 = vsub.s32 0, %v300
      %v302 = vrot.slane %v297, %v301
      %v368 = vunpack.c.l.b16 %v229
      %v369 = vunpack.c.l.b16 %v230
      %v370 = vunpack.c.l.b16 %v231
      %v371 = vunpack.c.l.b16 %v232
      %v372 = vunpack.c.l.b16 %v233
      %v373 = vunpack.c.l.b16 %v234
      %v374 = vunpack.c.l.b16 %v235
      %v375 = vunpack.c.l.b16 %v236
      %v376 = vunpack.c.l.b16 %v237
      %v377 = vunpack.c.l.b16 %v238
      %v378 = vunpack.c.l.b16 %v239
      %v379 = vunpack.c.l.b16 %v240
      %v380 = vunpack.c.l.b16 %v241
      %v381 = vunpack.c.l.b16 %v242
      %v382 = vunpack.c.l.b16 %v243
      %v383 = vunpack.c.l.b16 %v244
      %v384 = vunpack.c.l.b16 %v245
      %v385 = vunpack.c.l.b16 %v246
      %v386 = vunpack.c.l.b16 %v247
      %v387 = vunpack.c.l.b16 %v248
      %v388 = vunpack.c.l.b16 %v249
      %v389 = vunpack.c.l.b16 %v250
      %v390 = vunpack.c.l.b16 %v251
      %v391 = vunpack.c.l.b16 %v252
      %v392 = vunpack.c.l.b16 %v253
      %v393 = vunpack.c.l.b16 %v254
      %v394 = vunpack.c.l.b16 %v255
      %v395 = vunpack.c.l.b16 %v256
      %v396 = vunpack.c.l.b16 %v257
      %v397 = vunpack.c.l.b16 %v258
      %v398 = vunpack.c.l.b16 %v259
      %v399 = vunpack.c.l.b16 %v260
      %v400 = vunpack.c.l.b16 %v261
      %v401 = vunpack.c.l.b16 %v262
      %v402 = vunpack.c.l.b16 %v263
      %v403 = vunpack.c.l.b16 %v264
      %v404 = vunpack.c.l.b16 %v265
      %v405 = vunpack.c.l.b16 %v266
      %v406 = vunpack.c.l.b16 %v267
      %v407 = vunpack.c.l.b16 %v268
      %v408 = vunpack.c.l.b16 %v269
      %v409 = vunpack.c.l.b16 %v270
      %v410 = vunpack.c.l.b16 %v271
      %v411 = vunpack.c.l.b16 %v272
      %v412 = vunpack.c.l.b16 %v273
      %v413 = vunpack.c.l.b16 %v274
      %v414 = vunpack.c.l.b16 %v275
      %v415 = vunpack.c.l.b16 %v276
      %v416 = vunpack.c.l.b16 %v277
      %v417 = vunpack.c.l.b16 %v278
      %v418 = vunpack.c.l.b16 %v279
      %v419 = vunpack.c.l.b16 %v280
      %v420 = vunpack.c.l.b16 %v281
      %v421 = vunpack.c.l.b16 %v282
      %v422 = vunpack.c.l.b16 %v283
      %v423 = vunpack.c.l.b16 %v284
      %v424 = vunpack.c.l.b16 %v285
      %v425 = vunpack.c.l.b16 %v286
      %v426 = vunpack.c.l.b16 %v287
      %v427 = vunpack.c.l.b16 %v288
      %v428 = vunpack.c.l.b16 %v289
      %v429 = vunpack.c.l.b16 %v290
      %v430 = vunpack.c.l.b16 %v291
      %v431 = vunpack.c.l.b16 %v292
      %v432 = vpack.c.b16 %v369, %v368
      %v433 = vpack.c.b16 %v371, %v370
      %v434 = vpack.c.b16 %v373, %v372
      %v435 = vpack.c.b16 %v375, %v374
      %v436 = vpack.c.b16 %v377, %v376
      %v437 = vpack.c.b16 %v379, %v378
      %v438 = vpack.c.b16 %v381, %v380
      %v439 = vpack.c.b16 %v383, %v382
      %v440 = vpack.c.b16 %v385, %v384
      %v441 = vpack.c.b16 %v387, %v386
      %v442 = vpack.c.b16 %v389, %v388
      %v443 = vpack.c.b16 %v391, %v390
      %v444 = vpack.c.b16 %v393, %v392
      %v445 = vpack.c.b16 %v395, %v394
      %v446 = vpack.c.b16 %v397, %v396
      %v447 = vpack.c.b16 %v399, %v398
      %v448 = vpack.c.b16 %v401, %v400
      %v449 = vpack.c.b16 %v403, %v402
      %v450 = vpack.c.b16 %v405, %v404
      %v451 = vpack.c.b16 %v407, %v406
      %v452 = vpack.c.b16 %v409, %v408
      %v453 = vpack.c.b16 %v411, %v410
      %v454 = vpack.c.b16 %v413, %v412
      %v455 = vpack.c.b16 %v415, %v414
      %v456 = vpack.c.b16 %v417, %v416
      %v457 = vpack.c.b16 %v419, %v418
      %v458 = vpack.c.b16 %v421, %v420
      %v459 = vpack.c.b16 %v423, %v422
      %v460 = vpack.c.b16 %v425, %v424
      %v461 = vpack.c.b16 %v427, %v426
      %v462 = vpack.c.b16 %v429, %v428
      %v463 = vpack.c.b16 %v431, %v430
      %v468 = vunpack.c.l.b16 %v293
      %v469 = vunpack.c.l.b16 %v294
      %v470 = vunpack.c.l.b16 %v295
      %v471 = vunpack.c.l.b16 %v296
      %v472 = vpack.c.b16 %v469, %v468
      %v473 = vpack.c.b16 %v471, %v470
      %vm476 = vcmask 261120
      %v478 = vsel %vm476, %v432, 0
      %v481 = vsel %vm476, %v433, 0
      %v484 = vsel %vm476, %v434, 0
      %v487 = vsel %vm476, %v435, 0
      %v490 = vsel %vm476, %v436, 0
      %v493 = vsel %vm476, %v437, 0
      %v496 = vsel %vm476, %v438, 0
      %v499 = vsel %vm476, %v439, 0
      %v502 = vsel %vm476, %v440, 0
      %v505 = vsel %vm476, %v441, 0
      %v508 = vsel %vm476, %v442, 0
      %v511 = vsel %vm476, %v443, 0
      %v514 = vsel %vm476, %v444, 0
      %v517 = vsel %vm476, %v445, 0
      %v520 = vsel %vm476, %v446, 0
      %v523 = vsel %vm476, %v447, 0
      %v526 = vsel %vm476, %v448, 0
      %v529 = vsel %vm476, %v449, 0
      %v532 = vsel %vm476, %v450, 0
      %v535 = vsel %vm476, %v451, 0
      %v538 = vsel %vm476, %v452, 0
      %v541 = vsel %vm476, %v453, 0
      %v544 = vsel %vm476, %v454, 0
      %v547 = vsel %vm476, %v455, 0
      %v550 = vsel %vm476, %v456, 0
      %v553 = vsel %vm476, %v457, 0
      %v556 = vsel %vm476, %v458, 0
      %v559 = vsel %vm476, %v459, 0
      %v562 = vsel %vm476, %v460, 0
      %v565 = vsel %vm476, %v461, 0
      %v568 = vsel %vm476, %v462, 0
      %v571 = vsel %vm476, %v463, 0
      %573 = vmatprep.subr.bf16.mxu0 0
      %574 = vmatpush1.bf16.msra.mxu0 %v472
      %575 = vmatprep.subr.bf16.mxu0 0
      %576 = vmatpush1.bf16.msra.mxu0 %v473
      %577 = vmatprep.subr.bf16.mxu0 0
      %578 = vmatpush1.bf16.msra.mxu0 0
      %579 = vmatprep.subr.bf16.mxu0 0
      %580 = vmatpush1.bf16.msra.mxu0 0
      %581 = vmatprep.subr.bf16.mxu0 0
      %582 = vmatpush1.bf16.msra.mxu0 0
      %583 = vmatprep.subr.bf16.mxu0 0
      %584 = vmatpush1.bf16.msra.mxu0 0
      %585 = vmatprep.subr.bf16.mxu0 0
      %586 = vmatpush1.bf16.msra.mxu0 0
      %587 = vmatprep.subr.bf16.mxu0 0
      %588 = vmatpush1.bf16.msra.mxu0 0
      %589 = vmatprep.subr.bf16.mxu0 0
      %590 = vmatpush1.bf16.msra.mxu0 0
      %591 = vmatprep.subr.bf16.mxu0 0
      %592 = vmatpush1.bf16.msra.mxu0 0
      %593 = vmatprep.subr.bf16.mxu0 0
      %594 = vmatpush1.bf16.msra.mxu0 0
      %595 = vmatprep.subr.bf16.mxu0 0
      %596 = vmatpush1.bf16.msra.mxu0 0
      %597 = vmatprep.subr.bf16.mxu0 0
      %598 = vmatpush1.bf16.msra.mxu0 0
      %599 = vmatprep.subr.bf16.mxu0 0
      %600 = vmatpush1.bf16.msra.mxu0 0
      %601 = vmatprep.subr.bf16.mxu0 0
      %602 = vmatpush1.bf16.msra.mxu0 0
      %603 = vmatprep.subr.bf16.mxu0 0
      %604 = vmatpush1.bf16.msra.mxu0 0
      %605 = vmatprep.mubr.bf16.mxu0 0
      %606 = vmatmul.mubr.bf16.gmra.mrb[0].mxu0 %v478
      %v607 = vpop.f32.mrb[0].mxu0
      %v608 = vadd.f32 %v302, %v607
      %v609 = vpop.f32.mrb[0].mxu0
      %v610 = vpop.f32.mrb[0].mxu0
      %v611 = vadd.f32 %v302, %v610
      %v612 = vpop.f32.mrb[0].mxu0
      %613 = vmatprep.mubr.bf16.mxu0 0
      %614 = vmatmul.mubr.bf16.gmra.mrb[0].mxu0 %v481
      %v615 = vpop.f32.mrb[0].mxu0
      %v616 = vadd.f32 %v302, %v615
      %v617 = vpop.f32.mrb[0].mxu0
      %v618 = vpop.f32.mrb[0].mxu0
      %v619 = vadd.f32 %v302, %v618
      %v620 = vpop.f32.mrb[0].mxu0
      %621 = vmatprep.mubr.bf16.mxu0 0
      %622 = vmatmul.mubr.bf16.gmra.mrb[0].mxu0 %v484
      %v623 = vpop.f32.mrb[0].mxu0
      %v624 = vadd.f32 %v302, %v623
      %v625 = vpop.f32.mrb[0].mxu0
      %v626 = vpop.f32.mrb[0].mxu0
      %v627 = vadd.f32 %v302, %v626
      %v628 = vpop.f32.mrb[0].mxu0
      %629 = vmatprep.mubr.bf16.mxu0 0
      %630 = vmatmul.mubr.bf16.gmra.mrb[0].mxu0 %v487
      %v631 = vpop.f32.mrb[0].mxu0
      %v632 = vadd.f32 %v302, %v631
      %v633 = vpop.f32.mrb[0].mxu0
      %v634 = vpop.f32.mrb[0].mxu0
      %v635 = vadd.f32 %v302, %v634
      %v636 = vpop.f32.mrb[0].mxu0
      %637 = vmatprep.mubr.bf16.mxu0 0
      %638 = vmatmul.mubr.bf16.gmra.mrb[0].mxu0 %v490
      %v639 = vpop.f32.mrb[0].mxu0
      %v640 = vadd.f32 %v302, %v639
      %v641 = vpop.f32.mrb[0].mxu0
      %v642 = vpop.f32.mrb[0].mxu0
      %v643 = vadd.f32 %v302, %v642
      %v644 = vpop.f32.mrb[0].mxu0
      %645 = vmatprep.mubr.bf16.mxu0 0
      %646 = vmatmul.mubr.bf16.gmra.mrb[0].mxu0 %v493
      %v647 = vpop.f32.mrb[0].mxu0
      %v648 = vadd.f32 %v302, %v647
      %v649 = vpop.f32.mrb[0].mxu0
      %v650 = vpop.f32.mrb[0].mxu0
      %v651 = vadd.f32 %v302, %v650
      %v652 = vpop.f32.mrb[0].mxu0
      %653 = vmatprep.mubr.bf16.mxu0 0
      %654 = vmatmul.mubr.bf16.gmra.mrb[0].mxu0 %v496
      %v655 = vpop.f32.mrb[0].mxu0
      %v656 = vadd.f32 %v302, %v655
      %v657 = vpop.f32.mrb[0].mxu0
      %v658 = vpop.f32.mrb[0].mxu0
      %v659 = vadd.f32 %v302, %v658
      %v660 = vpop.f32.mrb[0].mxu0
      %661 = vmatprep.mubr.bf16.mxu0 0
      %662 = vmatmul.mubr.bf16.gmra.mrb[0].mxu0 %v499
      %v663 = vpop.f32.mrb[0].mxu0
      %v664 = vadd.f32 %v302, %v663
      %v665 = vpop.f32.mrb[0].mxu0
      %v666 = vpop.f32.mrb[0].mxu0
      %v667 = vadd.f32 %v302, %v666
      %v668 = vpop.f32.mrb[0].mxu0
      %669 = vmatprep.mubr.bf16.mxu0 0
      %670 = vmatmul.mubr.bf16.gmra.mrb[0].mxu0 %v502
      %v671 = vpop.f32.mrb[0].mxu0
      %v672 = vadd.f32 %v302, %v671
      %v673 = vpop.f32.mrb[0].mxu0
      %v674 = vpop.f32.mrb[0].mxu0
      %v675 = vadd.f32 %v302, %v674
      %v676 = vpop.f32.mrb[0].mxu0
      %677 = vmatprep.mubr.bf16.mxu0 0
      %678 = vmatmul.mubr.bf16.gmra.mrb[0].mxu0 %v505
      %v679 = vpop.f32.mrb[0].mxu0
      %v680 = vadd.f32 %v302, %v679
      %v681 = vpop.f32.mrb[0].mxu0
      %v682 = vpop.f32.mrb[0].mxu0
      %v683 = vadd.f32 %v302, %v682
      %v684 = vpop.f32.mrb[0].mxu0
      %685 = vmatprep.mubr.bf16.mxu0 0
      %686 = vmatmul.mubr.bf16.gmra.mrb[0].mxu0 %v508
      %v687 = vpop.f32.mrb[0].mxu0
      %v688 = vadd.f32 %v302, %v687
      %v689 = vpop.f32.mrb[0].mxu0
      %v690 = vpop.f32.mrb[0].mxu0
      %v691 = vadd.f32 %v302, %v690
      %v692 = vpop.f32.mrb[0].mxu0
      %693 = vmatprep.mubr.bf16.mxu0 0
      %694 = vmatmul.mubr.bf16.gmra.mrb[0].mxu0 %v511
      %v695 = vpop.f32.mrb[0].mxu0
      %v696 = vadd.f32 %v302, %v695
      %v697 = vpop.f32.mrb[0].mxu0
      %v698 = vpop.f32.mrb[0].mxu0
      %v699 = vadd.f32 %v302, %v698
      %v700 = vpop.f32.mrb[0].mxu0
      %701 = vmatprep.mubr.bf16.mxu0 0
      %702 = vmatmul.mubr.bf16.gmra.mrb[0].mxu0 %v514
      %v703 = vpop.f32.mrb[0].mxu0
      %v704 = vadd.f32 %v302, %v703
      %v705 = vpop.f32.mrb[0].mxu0
      %v706 = vpop.f32.mrb[0].mxu0
      %v707 = vadd.f32 %v302, %v706
      %v708 = vpop.f32.mrb[0].mxu0
      %709 = vmatprep.mubr.bf16.mxu0 0
      %710 = vmatmul.mubr.bf16.gmra.mrb[0].mxu0 %v517
      %v711 = vpop.f32.mrb[0].mxu0
      %v712 = vadd.f32 %v302, %v711
      %v713 = vpop.f32.mrb[0].mxu0
      %v714 = vpop.f32.mrb[0].mxu0
      %v715 = vadd.f32 %v302, %v714
      %v716 = vpop.f32.mrb[0].mxu0
      %717 = vmatprep.mubr.bf16.mxu0 0
      %718 = vmatmul.mubr.bf16.gmra.mrb[0].mxu0 %v520
      %v719 = vpop.f32.mrb[0].mxu0
      %v720 = vadd.f32 %v302, %v719
      %v721 = vpop.f32.mrb[0].mxu0
      %v722 = vpop.f32.mrb[0].mxu0
      %v723 = vadd.f32 %v302, %v722
      %v724 = vpop.f32.mrb[0].mxu0
      %725 = vmatprep.mubr.bf16.mxu0 0
      %726 = vmatmul.mubr.bf16.gmra.mrb[0].mxu0 %v523
      %v727 = vpop.f32.mrb[0].mxu0
      %v728 = vadd.f32 %v302, %v727
      %v729 = vpop.f32.mrb[0].mxu0
      %v730 = vpop.f32.mrb[0].mxu0
      %v731 = vadd.f32 %v302, %v730
      %v732 = vpop.f32.mrb[0].mxu0
      %733 = vmatprep.mubr.bf16.mxu0 0
      %734 = vmatmul.mubr.bf16.gmra.mrb[0].mxu0 %v526
      %v735 = vpop.f32.mrb[0].mxu0
      %v736 = vadd.f32 %v302, %v735
      %v737 = vpop.f32.mrb[0].mxu0
      %v738 = vpop.f32.mrb[0].mxu0
      %v739 = vadd.f32 %v302, %v738
      %v740 = vpop.f32.mrb[0].mxu0
      %741 = vmatprep.mubr.bf16.mxu0 0
      %742 = vmatmul.mubr.bf16.gmra.mrb[0].mxu0 %v529
      %v743 = vpop.f32.mrb[0].mxu0
      %v744 = vadd.f32 %v302, %v743
      %v745 = vpop.f32.mrb[0].mxu0
      %v746 = vpop.f32.mrb[0].mxu0
      %v747 = vadd.f32 %v302, %v746
      %v748 = vpop.f32.mrb[0].mxu0
      %749 = vmatprep.mubr.bf16.mxu0 0
      %750 = vmatmul.mubr.bf16.gmra.mrb[0].mxu0 %v532
      %v751 = vpop.f32.mrb[0].mxu0
      %v752 = vadd.f32 %v302, %v751
      %v753 = vpop.f32.mrb[0].mxu0
      %v754 = vpop.f32.mrb[0].mxu0
      %v755 = vadd.f32 %v302, %v754
      %v756 = vpop.f32.mrb[0].mxu0
      %757 = vmatprep.mubr.bf16.mxu0 0
      %758 = vmatmul.mubr.bf16.gmra.mrb[0].mxu0 %v535
      %v759 = vpop.f32.mrb[0].mxu0
      %v760 = vadd.f32 %v302, %v759
      %v761 = vpop.f32.mrb[0].mxu0
      %v762 = vpop.f32.mrb[0].mxu0
      %v763 = vadd.f32 %v302, %v762
      %v764 = vpop.f32.mrb[0].mxu0
      %765 = vmatprep.mubr.bf16.mxu0 0
      %766 = vmatmul.mubr.bf16.gmra.mrb[0].mxu0 %v538
      %v767 = vpop.f32.mrb[0].mxu0
      %v768 = vadd.f32 %v302, %v767
      %v769 = vpop.f32.mrb[0].mxu0
      %v770 = vpop.f32.mrb[0].mxu0
      %v771 = vadd.f32 %v302, %v770
      %v772 = vpop.f32.mrb[0].mxu0
      %773 = vmatprep.mubr.bf16.mxu0 0
      %774 = vmatmul.mubr.bf16.gmra.mrb[0].mxu0 %v541
      %v775 = vpop.f32.mrb[0].mxu0
      %v776 = vadd.f32 %v302, %v775
      %v777 = vpop.f32.mrb[0].mxu0
      %v778 = vpop.f32.mrb[0].mxu0
      %v779 = vadd.f32 %v302, %v778
      %v780 = vpop.f32.mrb[0].mxu0
      %781 = vmatprep.mubr.bf16.mxu0 0
      %782 = vmatmul.mubr.bf16.gmra.mrb[0].mxu0 %v544
      %v783 = vpop.f32.mrb[0].mxu0
      %v784 = vadd.f32 %v302, %v783
      %v785 = vpop.f32.mrb[0].mxu0
      %v786 = vpop.f32.mrb[0].mxu0
      %v787 = vadd.f32 %v302, %v786
      %v788 = vpop.f32.mrb[0].mxu0
      %789 = vmatprep.mubr.bf16.mxu0 0
      %790 = vmatmul.mubr.bf16.gmra.mrb[0].mxu0 %v547
      %v791 = vpop.f32.mrb[0].mxu0
      %v792 = vadd.f32 %v302, %v791
      %v793 = vpop.f32.mrb[0].mxu0
      %v794 = vpop.f32.mrb[0].mxu0
      %v795 = vadd.f32 %v302, %v794
      %v796 = vpop.f32.mrb[0].mxu0
      %797 = vmatprep.mubr.bf16.mxu0 0
      %798 = vmatmul.mubr.bf16.gmra.mrb[0].mxu0 %v550
      %v799 = vpop.f32.mrb[0].mxu0
      %v800 = vadd.f32 %v302, %v799
      %v801 = vpop.f32.mrb[0].mxu0
      %v802 = vpop.f32.mrb[0].mxu0
      %v803 = vadd.f32 %v302, %v802
      %v804 = vpop.f32.mrb[0].mxu0
      %805 = vmatprep.mubr.bf16.mxu0 0
      %806 = vmatmul.mubr.bf16.gmra.mrb[0].mxu0 %v553
      %v807 = vpop.f32.mrb[0].mxu0
      %v808 = vadd.f32 %v302, %v807
      %v809 = vpop.f32.mrb[0].mxu0
      %v810 = vpop.f32.mrb[0].mxu0
      %v811 = vadd.f32 %v302, %v810
      %v812 = vpop.f32.mrb[0].mxu0
      %813 = vmatprep.mubr.bf16.mxu0 0
      %814 = vmatmul.mubr.bf16.gmra.mrb[0].mxu0 %v556
      %v815 = vpop.f32.mrb[0].mxu0
      %v816 = vadd.f32 %v302, %v815
      %v817 = vpop.f32.mrb[0].mxu0
      %v818 = vpop.f32.mrb[0].mxu0
      %v819 = vadd.f32 %v302, %v818
      %v820 = vpop.f32.mrb[0].mxu0
      %821 = vmatprep.mubr.bf16.mxu0 0
      %822 = vmatmul.mubr.bf16.gmra.mrb[0].mxu0 %v559
      %v823 = vpop.f32.mrb[0].mxu0
      %v824 = vadd.f32 %v302, %v823
      %v825 = vpop.f32.mrb[0].mxu0
      %v826 = vpop.f32.mrb[0].mxu0
      %v827 = vadd.f32 %v302, %v826
      %v828 = vpop.f32.mrb[0].mxu0
      %829 = vmatprep.mubr.bf16.mxu0 0
      %830 = vmatmul.mubr.bf16.gmra.mrb[0].mxu0 %v562
      %v831 = vpop.f32.mrb[0].mxu0
      %v832 = vadd.f32 %v302, %v831
      %v833 = vpop.f32.mrb[0].mxu0
      %v834 = vpop.f32.mrb[0].mxu0
      %v835 = vadd.f32 %v302, %v834
      %v836 = vpop.f32.mrb[0].mxu0
      %837 = vmatprep.mubr.bf16.mxu0 0
      %838 = vmatmul.mubr.bf16.gmra.mrb[0].mxu0 %v565
      %v839 = vpop.f32.mrb[0].mxu0
      %v840 = vadd.f32 %v302, %v839
      %v841 = vpop.f32.mrb[0].mxu0
      %v842 = vpop.f32.mrb[0].mxu0
      %v843 = vadd.f32 %v302, %v842
      %v844 = vpop.f32.mrb[0].mxu0
      %845 = vmatprep.mubr.bf16.mxu0 0
      %846 = vmatmul.mubr.bf16.gmra.mrb[0].mxu0 %v568
      %v847 = vpop.f32.mrb[0].mxu0
      %v848 = vadd.f32 %v302, %v847
      %v849 = vpop.f32.mrb[0].mxu0
      %v850 = vpop.f32.mrb[0].mxu0
      %v851 = vadd.f32 %v302, %v850
      %v852 = vpop.f32.mrb[0].mxu0
      %853 = vmatprep.mubr.bf16.mxu0 0
      %854 = vmatmul.mubr.bf16.gmra.mrb[0].mxu0 %v571
      %v855 = vpop.f32.mrb[0].mxu0
      %v856 = vadd.f32 %v302, %v855
      %v857 = vpop.f32.mrb[0].mxu0
      %v858 = vpop.f32.mrb[0].mxu0
      %v859 = vadd.f32 %v302, %v858
      %v860 = vpop.f32.mrb[0].mxu0
      %861 = vdwg.mxu0
      %862 = vst [vmem:[#allocation2] sm:$0xff] %v608
      %863 = vst [vmem:[#allocation2 + $0x8] sm:$0xff] %v611
      %864 = vst [vmem:[#allocation2 + $0x10] sm:$0xff] %v616
      %865 = vst [vmem:[#allocation2 + $0x18] sm:$0xff] %v619
      %866 = vst [vmem:[#allocation2 + $0x20] sm:$0xff] %v624
      %867 = vst [vmem:[#allocation2 + $0x28] sm:$0xff] %v627
      %868 = vst [vmem:[#allocation2 + $0x30] sm:$0xff] %v632
      %869 = vst [vmem:[#allocation2 + $0x38] sm:$0xff] %v635
      %870 = vst [vmem:[#allocation2 + $0x40] sm:$0xff] %v640
      %871 = vst [vmem:[#allocation2 + $0x48] sm:$0xff] %v643
      %872 = vst [vmem:[#allocation2 + $0x50] sm:$0xff] %v648
      %873 = vst [vmem:[#allocation2 + $0x58] sm:$0xff] %v651
      %874 = vst [vmem:[#allocation2 + $0x60] sm:$0xff] %v656
      %875 = vst [vmem:[#allocation2 + $0x68] sm:$0xff] %v659
      %876 = vst [vmem:[#allocation2 + $0x70] sm:$0xff] %v664
      %877 = vst [vmem:[#allocation2 + $0x78] sm:$0xff] %v667
      %878 = vst [vmem:[#allocation2 + $0x80] sm:$0xff] %v672
      %879 = vst [vmem:[#allocation2 + $0x88] sm:$0xff] %v675
      %880 = vst [vmem:[#allocation2 + $0x90] sm:$0xff] %v680
      %881 = vst [vmem:[#allocation2 + $0x98] sm:$0xff] %v683
      %882 = vst [vmem:[#allocation2 + $0xa0] sm:$0xff] %v688
      %883 = vst [vmem:[#allocation2 + $0xa8] sm:$0xff] %v691
      %884 = vst [vmem:[#allocation2 + $0xb0] sm:$0xff] %v696
      %885 = vst [vmem:[#allocation2 + $0xb8] sm:$0xff] %v699
      %886 = vst [vmem:[#allocation2 + $0xc0] sm:$0xff] %v704
      %887 = vst [vmem:[#allocation2 + $0xc8] sm:$0xff] %v707
      %888 = vst [vmem:[#allocation2 + $0xd0] sm:$0xff] %v712
      %889 = vst [vmem:[#allocation2 + $0xd8] sm:$0xff] %v715
      %890 = vst [vmem:[#allocation2 + $0xe0] sm:$0xff] %v720
      %891 = vst [vmem:[#allocation2 + $0xe8] sm:$0xff] %v723
      %892 = vst [vmem:[#allocation2 + $0xf0] sm:$0xff] %v728
      %893 = vst [vmem:[#allocation2 + $0xf8] sm:$0xff] %v731
      %894 = vst [vmem:[#allocation2 + $0x100] sm:$0xff] %v736
      %895 = vst [vmem:[#allocation2 + $0x108] sm:$0xff] %v739
      %896 = vst [vmem:[#allocation2 + $0x110] sm:$0xff] %v744
      %897 = vst [vmem:[#allocation2 + $0x118] sm:$0xff] %v747
      %898 = vst [vmem:[#allocation2 + $0x120] sm:$0xff] %v752
      %899 = vst [vmem:[#allocation2 + $0x128] sm:$0xff] %v755
      %900 = vst [vmem:[#allocation2 + $0x130] sm:$0xff] %v760
      %901 = vst [vmem:[#allocation2 + $0x138] sm:$0xff] %v763
      %902 = vst [vmem:[#allocation2 + $0x140] sm:$0xff] %v768
      %903 = vst [vmem:[#allocation2 + $0x148] sm:$0xff] %v771
      %904 = vst [vmem:[#allocation2 + $0x150] sm:$0xff] %v776
      %905 = vst [vmem:[#allocation2 + $0x158] sm:$0xff] %v779
      %906 = vst [vmem:[#allocation2 + $0x160] sm:$0xff] %v784
      %907 = vst [vmem:[#allocation2 + $0x168] sm:$0xff] %v787
      %908 = vst [vmem:[#allocation2 + $0x170] sm:$0xff] %v792
      %909 = vst [vmem:[#allocation2 + $0x178] sm:$0xff] %v795
      %910 = vst [vmem:[#allocation2 + $0x180] sm:$0xff] %v800
      %911 = vst [vmem:[#allocation2 + $0x188] sm:$0xff] %v803
      %912 = vst [vmem:[#allocation2 + $0x190] sm:$0xff] %v808
      %913 = vst [vmem:[#allocation2 + $0x198] sm:$0xff] %v811
      %914 = vst [vmem:[#allocation2 + $0x1a0] sm:$0xff] %v816
      %915 = vst [vmem:[#allocation2 + $0x1a8] sm:$0xff] %v819
      %916 = vst [vmem:[#allocation2 + $0x1b0] sm:$0xff] %v824
      %917 = vst [vmem:[#allocation2 + $0x1b8] sm:$0xff] %v827
      %918 = vst [vmem:[#allocation2 + $0x1c0] sm:$0xff] %v832
      %919 = vst [vmem:[#allocation2 + $0x1c8] sm:$0xff] %v835
      %920 = vst [vmem:[#allocation2 + $0x1d0] sm:$0xff] %v840
      %921 = vst [vmem:[#allocation2 + $0x1d8] sm:$0xff] %v843
      %922 = vst [vmem:[#allocation2 + $0x1e0] sm:$0xff] %v848
      %923 = vst [vmem:[#allocation2 + $0x1e8] sm:$0xff] %v851
      %924 = vst [vmem:[#allocation2 + $0x1f0] sm:$0xff] %v856
      %925 = vst [vmem:[#allocation2 + $0x1f8] sm:$0xff] %v859
      %v926 = vld [vmem:[%s219] sm:$0xff]
      %v927 = vld [vmem:[%s219 + $0x8] sm:$0xff]
      %v928 = vld [vmem:[%s219 + $0x10] sm:$0xff]
      %v929 = vld [vmem:[%s219 + $0x18] sm:$0xff]
      %v930 = vld [vmem:[%s219 + $0x20] sm:$0xff]
      %v931 = vld [vmem:[%s219 + $0x28] sm:$0xff]
      %v932 = vld [vmem:[%s219 + $0x30] sm:$0xff]
      %v933 = vld [vmem:[%s219 + $0x38] sm:$0xff]
      %v934 = vld [vmem:[%s219 + $0x40] sm:$0xff]
      %v935 = vld [vmem:[%s219 + $0x48] sm:$0xff]
      %v936 = vld [vmem:[%s219 + $0x50] sm:$0xff]
      %v937 = vld [vmem:[%s219 + $0x58] sm:$0xff]
      %v938 = vld [vmem:[%s219 + $0x60] sm:$0xff]
      %v939 = vld [vmem:[%s219 + $0x68] sm:$0xff]
      %v940 = vld [vmem:[%s219 + $0x70] sm:$0xff]
      %v941 = vld [vmem:[%s219 + $0x78] sm:$0xff]
      %v942 = vld [vmem:[%s219 + $0x80] sm:$0xff]
      %v943 = vld [vmem:[%s219 + $0x88] sm:$0xff]
      %v944 = vld [vmem:[%s219 + $0x90] sm:$0xff]
      %v945 = vld [vmem:[%s219 + $0x98] sm:$0xff]
      %v946 = vld [vmem:[%s219 + $0xa0] sm:$0xff]
      %v947 = vld [vmem:[%s219 + $0xa8] sm:$0xff]
      %v948 = vld [vmem:[%s219 + $0xb0] sm:$0xff]
      %v949 = vld [vmem:[%s219 + $0xb8] sm:$0xff]
      %v950 = vld [vmem:[%s219 + $0xc0] sm:$0xff]
      %v951 = vld [vmem:[%s219 + $0xc8] sm:$0xff]
      %v952 = vld [vmem:[%s219 + $0xd0] sm:$0xff]
      %v953 = vld [vmem:[%s219 + $0xd8] sm:$0xff]
      %v954 = vld [vmem:[%s219 + $0xe0] sm:$0xff]
      %v955 = vld [vmem:[%s219 + $0xe8] sm:$0xff]
      %v956 = vld [vmem:[%s219 + $0xf0] sm:$0xff]
      %v957 = vld [vmem:[%s219 + $0xf8] sm:$0xff]
      %v958 = vld [vmem:[%s219 + $0x100] sm:$0xff]
      %v959 = vld [vmem:[%s219 + $0x108] sm:$0xff]
      %v960 = vld [vmem:[%s219 + $0x110] sm:$0xff]
      %v961 = vld [vmem:[%s219 + $0x118] sm:$0xff]
      %v962 = vld [vmem:[%s219 + $0x120] sm:$0xff]
      %v963 = vld [vmem:[%s219 + $0x128] sm:$0xff]
      %v964 = vld [vmem:[%s219 + $0x130] sm:$0xff]
      %v965 = vld [vmem:[%s219 + $0x138] sm:$0xff]
      %v966 = vld [vmem:[%s219 + $0x140] sm:$0xff]
      %v967 = vld [vmem:[%s219 + $0x148] sm:$0xff]
      %v968 = vld [vmem:[%s219 + $0x150] sm:$0xff]
      %v969 = vld [vmem:[%s219 + $0x158] sm:$0xff]
      %v970 = vld [vmem:[%s219 + $0x160] sm:$0xff]
      %v971 = vld [vmem:[%s219 + $0x168] sm:$0xff]
      %v972 = vld [vmem:[%s219 + $0x170] sm:$0xff]
      %v973 = vld [vmem:[%s219 + $0x178] sm:$0xff]
      %v974 = vld [vmem:[%s219 + $0x180] sm:$0xff]
      %v975 = vld [vmem:[%s219 + $0x188] sm:$0xff]
      %v976 = vld [vmem:[%s219 + $0x190] sm:$0xff]
      %v977 = vld [vmem:[%s219 + $0x198] sm:$0xff]
      %v978 = vld [vmem:[%s219 + $0x1a0] sm:$0xff]
      %v979 = vld [vmem:[%s219 + $0x1a8] sm:$0xff]
      %v980 = vld [vmem:[%s219 + $0x1b0] sm:$0xff]
      %v981 = vld [vmem:[%s219 + $0x1b8] sm:$0xff]
      %v982 = vld [vmem:[%s219 + $0x1c0] sm:$0xff]
      %v983 = vld [vmem:[%s219 + $0x1c8] sm:$0xff]
      %v984 = vld [vmem:[%s219 + $0x1d0] sm:$0xff]
      %v985 = vld [vmem:[%s219 + $0x1d8] sm:$0xff]
      %v986 = vld [vmem:[%s219 + $0x1e0] sm:$0xff]
      %v987 = vld [vmem:[%s219 + $0x1e8] sm:$0xff]
      %v988 = vld [vmem:[%s219 + $0x1f0] sm:$0xff]
      %v989 = vld [vmem:[%s219 + $0x1f8] sm:$0xff]
      %v990 = vld [vmem:[%s219 + $0x200] sm:$0xff]
      %v991 = vld [vmem:[%s219 + $0x208] sm:$0xff]
      %v992 = vld [vmem:[%s219 + $0x210] sm:$0xff]
      %v993 = vld [vmem:[%s219 + $0x218] sm:$0xff]
      %v994 = vld [vmem:[%s219 + $0x220] sm:$0xff]
      %v995 = vld [vmem:[%s219 + $0x228] sm:$0xff]
      %v996 = vld [vmem:[%s219 + $0x230] sm:$0xff]
      %v997 = vld [vmem:[%s219 + $0x238] sm:$0xff]
      %v998 = vld [vmem:[%s219 + $0x240] sm:$0xff]
      %v999 = vld [vmem:[%s219 + $0x248] sm:$0xff]
      %v1000 = vld [vmem:[%s219 + $0x250] sm:$0xff]
      %v1001 = vld [vmem:[%s219 + $0x258] sm:$0xff]
      %v1002 = vld [vmem:[%s219 + $0x260] sm:$0xff]
      %v1003 = vld [vmem:[%s219 + $0x268] sm:$0xff]
      %v1004 = vld [vmem:[%s219 + $0x270] sm:$0xff]
      %v1005 = vld [vmem:[%s219 + $0x278] sm:$0xff]
      %v1006 = vld [vmem:[%s219 + $0x280] sm:$0xff]
      %v1007 = vld [vmem:[%s219 + $0x288] sm:$0xff]
      %v1008 = vld [vmem:[%s219 + $0x290] sm:$0xff]
      %v1009 = vld [vmem:[%s219 + $0x298] sm:$0xff]
      %v1010 = vld [vmem:[%s219 + $0x2a0] sm:$0xff]
      %v1011 = vld [vmem:[%s219 + $0x2a8] sm:$0xff]
      %v1012 = vld [vmem:[%s219 + $0x2b0] sm:$0xff]
      %v1013 = vld [vmem:[%s219 + $0x2b8] sm:$0xff]
      %v1014 = vld [vmem:[%s219 + $0x2c0] sm:$0xff]
      %v1015 = vld [vmem:[%s219 + $0x2c8] sm:$0xff]
      %v1016 = vld [vmem:[%s219 + $0x2d0] sm:$0xff]
      %v1017 = vld [vmem:[%s219 + $0x2d8] sm:$0xff]
      %v1018 = vld [vmem:[%s219 + $0x2e0] sm:$0xff]
      %v1019 = vld [vmem:[%s219 + $0x2e8] sm:$0xff]
      %v1020 = vld [vmem:[%s219 + $0x2f0] sm:$0xff]
      %v1021 = vld [vmem:[%s219 + $0x2f8] sm:$0xff]
      %v1022 = vld [vmem:[%s219 + $0x300] sm:$0xff]
      %v1023 = vld [vmem:[%s219 + $0x308] sm:$0xff]
      %v1024 = vld [vmem:[%s219 + $0x310] sm:$0xff]
      %v1025 = vld [vmem:[%s219 + $0x318] sm:$0xff]
      %v1026 = vld [vmem:[%s219 + $0x320] sm:$0xff]
      %v1027 = vld [vmem:[%s219 + $0x328] sm:$0xff]
      %v1028 = vld [vmem:[%s219 + $0x330] sm:$0xff]
      %v1029 = vld [vmem:[%s219 + $0x338] sm:$0xff]
      %v1030 = vld [vmem:[%s219 + $0x340] sm:$0xff]
      %v1031 = vld [vmem:[%s219 + $0x348] sm:$0xff]
      %v1032 = vld [vmem:[%s219 + $0x350] sm:$0xff]
      %v1033 = vld [vmem:[%s219 + $0x358] sm:$0xff]
      %v1034 = vld [vmem:[%s219 + $0x360] sm:$0xff]
      %v1035 = vld [vmem:[%s219 + $0x368] sm:$0xff]
      %v1036 = vld [vmem:[%s219 + $0x370] sm:$0xff]
      %v1037 = vld [vmem:[%s219 + $0x378] sm:$0xff]
      %v1038 = vld [vmem:[%s219 + $0x380] sm:$0xff]
      %v1039 = vld [vmem:[%s219 + $0x388] sm:$0xff]
      %v1040 = vld [vmem:[%s219 + $0x390] sm:$0xff]
      %v1041 = vld [vmem:[%s219 + $0x398] sm:$0xff]
      %v1042 = vld [vmem:[%s219 + $0x3a0] sm:$0xff]
      %v1043 = vld [vmem:[%s219 + $0x3a8] sm:$0xff]
      %v1044 = vld [vmem:[%s219 + $0x3b0] sm:$0xff]
      %v1045 = vld [vmem:[%s219 + $0x3b8] sm:$0xff]
      %v1046 = vld [vmem:[%s219 + $0x3c0] sm:$0xff]
      %v1047 = vld [vmem:[%s219 + $0x3c8] sm:$0xff]
      %v1048 = vld [vmem:[%s219 + $0x3d0] sm:$0xff]
      %v1049 = vld [vmem:[%s219 + $0x3d8] sm:$0xff]
      %v1050 = vld [vmem:[%s219 + $0x3e0] sm:$0xff]
      %v1051 = vld [vmem:[%s219 + $0x3e8] sm:$0xff]
      %v1052 = vld [vmem:[%s219 + $0x3f0] sm:$0xff]
      %v1053 = vld [vmem:[%s219 + $0x3f8] sm:$0xff]
      %v1054 = vld [vmem:[%s219 + $0x400] sm:$0xff]
      %v1055 = vld [vmem:[%s219 + $0x408] sm:$0xff]
      %v1056 = vld [vmem:[%s219 + $0x410] sm:$0xff]
      %v1057 = vld [vmem:[%s219 + $0x418] sm:$0xff]
      %v1058 = vld [vmem:[%s219 + $0x420] sm:$0xff]
      %v1059 = vld [vmem:[%s219 + $0x428] sm:$0xff]
      %v1060 = vld [vmem:[%s219 + $0x430] sm:$0xff]
      %v1061 = vld [vmem:[%s219 + $0x438] sm:$0xff]
      %v1062 = vld [vmem:[%s219 + $0x440] sm:$0xff]
      %v1063 = vld [vmem:[%s219 + $0x448] sm:$0xff]
      %v1064 = vld [vmem:[%s219 + $0x450] sm:$0xff]
      %v1065 = vld [vmem:[%s219 + $0x458] sm:$0xff]
      %v1066 = vld [vmem:[%s219 + $0x460] sm:$0xff]
      %v1067 = vld [vmem:[%s219 + $0x468] sm:$0xff]
      %v1068 = vld [vmem:[%s219 + $0x470] sm:$0xff]
      %v1069 = vld [vmem:[%s219 + $0x478] sm:$0xff]
      %v1070 = vld [vmem:[%s219 + $0x480] sm:$0xff]
      %v1071 = vld [vmem:[%s219 + $0x488] sm:$0xff]
      %v1072 = vld [vmem:[%s219 + $0x490] sm:$0xff]
      %v1073 = vld [vmem:[%s219 + $0x498] sm:$0xff]
      %v1074 = vld [vmem:[%s219 + $0x4a0] sm:$0xff]
      %v1075 = vld [vmem:[%s219 + $0x4a8] sm:$0xff]
      %v1076 = vld [vmem:[%s219 + $0x4b0] sm:$0xff]
      %v1077 = vld [vmem:[%s219 + $0x4b8] sm:$0xff]
      %v1078 = vld [vmem:[%s219 + $0x4c0] sm:$0xff]
      %v1079 = vld [vmem:[%s219 + $0x4c8] sm:$0xff]
      %v1080 = vld [vmem:[%s219 + $0x4d0] sm:$0xff]
      %v1081 = vld [vmem:[%s219 + $0x4d8] sm:$0xff]
      %v1082 = vld [vmem:[%s219 + $0x4e0] sm:$0xff]
      %v1083 = vld [vmem:[%s219 + $0x4e8] sm:$0xff]
      %v1084 = vld [vmem:[%s219 + $0x4f0] sm:$0xff]
      %v1085 = vld [vmem:[%s219 + $0x4f8] sm:$0xff]
      %v1086 = vld [vmem:[%s219 + $0x500] sm:$0xff]
      %v1087 = vld [vmem:[%s219 + $0x508] sm:$0xff]
      %v1088 = vld [vmem:[%s219 + $0x510] sm:$0xff]
      %v1089 = vld [vmem:[%s219 + $0x518] sm:$0xff]
      %v1090 = vld [vmem:[%s219 + $0x520] sm:$0xff]
      %v1091 = vld [vmem:[%s219 + $0x528] sm:$0xff]
      %v1092 = vld [vmem:[%s219 + $0x530] sm:$0xff]
      %v1093 = vld [vmem:[%s219 + $0x538] sm:$0xff]
      %v1094 = vld [vmem:[%s219 + $0x540] sm:$0xff]
      %v1095 = vld [vmem:[%s219 + $0x548] sm:$0xff]
      %v1096 = vld [vmem:[%s219 + $0x550] sm:$0xff]
      %v1097 = vld [vmem:[%s219 + $0x558] sm:$0xff]
      %v1098 = vld [vmem:[%s219 + $0x560] sm:$0xff]
      %v1099 = vld [vmem:[%s219 + $0x568] sm:$0xff]
      %v1100 = vld [vmem:[%s219 + $0x570] sm:$0xff]
      %v1101 = vld [vmem:[%s219 + $0x578] sm:$0xff]
      %v1102 = vld [vmem:[%s219 + $0x580] sm:$0xff]
      %v1103 = vld [vmem:[%s219 + $0x588] sm:$0xff]
      %v1104 = vld [vmem:[%s219 + $0x590] sm:$0xff]
      %v1105 = vld [vmem:[%s219 + $0x598] sm:$0xff]
      %v1106 = vld [vmem:[%s219 + $0x5a0] sm:$0xff]
      %v1107 = vld [vmem:[%s219 + $0x5a8] sm:$0xff]
      %v1108 = vld [vmem:[%s219 + $0x5b0] sm:$0xff]
      %v1109 = vld [vmem:[%s219 + $0x5b8] sm:$0xff]
      %v1110 = vld [vmem:[%s219 + $0x5c0] sm:$0xff]
      %v1111 = vld [vmem:[%s219 + $0x5c8] sm:$0xff]
      %v1112 = vld [vmem:[%s219 + $0x5d0] sm:$0xff]
      %v1113 = vld [vmem:[%s219 + $0x5d8] sm:$0xff]
      %v1114 = vld [vmem:[%s219 + $0x5e0] sm:$0xff]
      %v1115 = vld [vmem:[%s219 + $0x5e8] sm:$0xff]
      %v1116 = vld [vmem:[%s219 + $0x5f0] sm:$0xff]
      %v1117 = vld [vmem:[%s219 + $0x5f8] sm:$0xff]
      %v1118 = vld [vmem:[%s219 + $0x600] sm:$0xff]
      %v1119 = vld [vmem:[%s219 + $0x608] sm:$0xff]
      %v1120 = vld [vmem:[%s219 + $0x610] sm:$0xff]
      %v1121 = vld [vmem:[%s219 + $0x618] sm:$0xff]
      %v1122 = vld [vmem:[%s219 + $0x620] sm:$0xff]
      %v1123 = vld [vmem:[%s219 + $0x628] sm:$0xff]
      %v1124 = vld [vmem:[%s219 + $0x630] sm:$0xff]
      %v1125 = vld [vmem:[%s219 + $0x638] sm:$0xff]
      %v1126 = vld [vmem:[%s219 + $0x640] sm:$0xff]
      %v1127 = vld [vmem:[%s219 + $0x648] sm:$0xff]
      %v1128 = vld [vmem:[%s219 + $0x650] sm:$0xff]
      %v1129 = vld [vmem:[%s219 + $0x658] sm:$0xff]
      %v1130 = vld [vmem:[%s219 + $0x660] sm:$0xff]
      %v1131 = vld [vmem:[%s219 + $0x668] sm:$0xff]
      %v1132 = vld [vmem:[%s219 + $0x670] sm:$0xff]
      %v1133 = vld [vmem:[%s219 + $0x678] sm:$0xff]
      %v1134 = vld [vmem:[%s219 + $0x680] sm:$0xff]
      %v1135 = vld [vmem:[%s219 + $0x688] sm:$0xff]
      %v1136 = vld [vmem:[%s219 + $0x690] sm:$0xff]
      %v1137 = vld [vmem:[%s219 + $0x698] sm:$0xff]
      %v1138 = vld [vmem:[%s219 + $0x6a0] sm:$0xff]
      %v1139 = vld [vmem:[%s219 + $0x6a8] sm:$0xff]
      %v1140 = vld [vmem:[%s219 + $0x6b0] sm:$0xff]
      %v1141 = vld [vmem:[%s219 + $0x6b8] sm:$0xff]
      %v1142 = vld [vmem:[%s219 + $0x6c0] sm:$0xff]
      %v1143 = vld [vmem:[%s219 + $0x6c8] sm:$0xff]
      %v1144 = vld [vmem:[%s219 + $0x6d0] sm:$0xff]
      %v1145 = vld [vmem:[%s219 + $0x6d8] sm:$0xff]
      %v1146 = vld [vmem:[%s219 + $0x6e0] sm:$0xff]
      %v1147 = vld [vmem:[%s219 + $0x6e8] sm:$0xff]
      %v1148 = vld [vmem:[%s219 + $0x6f0] sm:$0xff]
      %v1149 = vld [vmem:[%s219 + $0x6f8] sm:$0xff]
      %v1150 = vld [vmem:[%s219 + $0x700] sm:$0xff]
      %v1151 = vld [vmem:[%s219 + $0x708] sm:$0xff]
      %v1152 = vld [vmem:[%s219 + $0x710] sm:$0xff]
      %v1153 = vld [vmem:[%s219 + $0x718] sm:$0xff]
      %v1154 = vld [vmem:[%s219 + $0x720] sm:$0xff]
      %v1155 = vld [vmem:[%s219 + $0x728] sm:$0xff]
      %v1156 = vld [vmem:[%s219 + $0x730] sm:$0xff]
      %v1157 = vld [vmem:[%s219 + $0x738] sm:$0xff]
      %v1158 = vld [vmem:[%s219 + $0x740] sm:$0xff]
      %v1159 = vld [vmem:[%s219 + $0x748] sm:$0xff]
      %v1160 = vld [vmem:[%s219 + $0x750] sm:$0xff]
      %v1161 = vld [vmem:[%s219 + $0x758] sm:$0xff]
      %v1162 = vld [vmem:[%s219 + $0x760] sm:$0xff]
      %v1163 = vld [vmem:[%s219 + $0x768] sm:$0xff]
      %v1164 = vld [vmem:[%s219 + $0x770] sm:$0xff]
      %v1165 = vld [vmem:[%s219 + $0x778] sm:$0xff]
      %v1166 = vld [vmem:[%s219 + $0x780] sm:$0xff]
      %v1167 = vld [vmem:[%s219 + $0x788] sm:$0xff]
      %v1168 = vld [vmem:[%s219 + $0x790] sm:$0xff]
      %v1169 = vld [vmem:[%s219 + $0x798] sm:$0xff]
      %v1170 = vld [vmem:[%s219 + $0x7a0] sm:$0xff]
      %v1171 = vld [vmem:[%s219 + $0x7a8] sm:$0xff]
      %v1172 = vld [vmem:[%s219 + $0x7b0] sm:$0xff]
      %v1173 = vld [vmem:[%s219 + $0x7b8] sm:$0xff]
      %v1174 = vld [vmem:[%s219 + $0x7c0] sm:$0xff]
      %v1175 = vld [vmem:[%s219 + $0x7c8] sm:$0xff]
      %v1176 = vld [vmem:[%s219 + $0x7d0] sm:$0xff]
      %v1177 = vld [vmem:[%s219 + $0x7d8] sm:$0xff]
      %v1178 = vld [vmem:[%s219 + $0x7e0] sm:$0xff]
      %v1179 = vld [vmem:[%s219 + $0x7e8] sm:$0xff]
      %v1180 = vld [vmem:[%s219 + $0x7f0] sm:$0xff]
      %v1181 = vld [vmem:[%s219 + $0x7f8] sm:$0xff]
      %vm1182 = vcmask 130048
      %1183 = vst.msk [vmem:[%s226] sm:$0xff] %vm1182, %v926
      %1184 = vst.msk [vmem:[%s226 + $0x8] sm:$0xff] %vm1182, %v927
      %1185 = vst.msk [vmem:[%s226 + $0x10] sm:$0xff] %vm1182, %v928
      %1186 = vst.msk [vmem:[%s226 + $0x18] sm:$0xff] %vm1182, %v929
      %1187 = vst.msk [vmem:[%s226 + $0x20] sm:$0xff] %vm1182, %v930
      %1188 = vst.msk [vmem:[%s226 + $0x28] sm:$0xff] %vm1182, %v931
      %1189 = vst.msk [vmem:[%s226 + $0x30] sm:$0xff] %vm1182, %v932
      %1190 = vst.msk [vmem:[%s226 + $0x38] sm:$0xff] %vm1182, %v933
      %1191 = vst.msk [vmem:[%s226 + $0x40] sm:$0xff] %vm1182, %v934
      %1192 = vst.msk [vmem:[%s226 + $0x48] sm:$0xff] %vm1182, %v935
      %1193 = vst.msk [vmem:[%s226 + $0x50] sm:$0xff] %vm1182, %v936
      %1194 = vst.msk [vmem:[%s226 + $0x58] sm:$0xff] %vm1182, %v937
      %1195 = vst.msk [vmem:[%s226 + $0x60] sm:$0xff] %vm1182, %v938
      %1196 = vst.msk [vmem:[%s226 + $0x68] sm:$0xff] %vm1182, %v939
      %1197 = vst.msk [vmem:[%s226 + $0x70] sm:$0xff] %vm1182, %v940
      %1198 = vst.msk [vmem:[%s226 + $0x78] sm:$0xff] %vm1182, %v941
      %1199 = vst.msk [vmem:[%s226 + $0x80] sm:$0xff] %vm1182, %v942
      %1200 = vst.msk [vmem:[%s226 + $0x88] sm:$0xff] %vm1182, %v943
      %1201 = vst.msk [vmem:[%s226 + $0x90] sm:$0xff] %vm1182, %v944
      %1202 = vst.msk [vmem:[%s226 + $0x98] sm:$0xff] %vm1182, %v945
      %1203 = vst.msk [vmem:[%s226 + $0xa0] sm:$0xff] %vm1182, %v946
      %1204 = vst.msk [vmem:[%s226 + $0xa8] sm:$0xff] %vm1182, %v947
      %1205 = vst.msk [vmem:[%s226 + $0xb0] sm:$0xff] %vm1182, %v948
      %1206 = vst.msk [vmem:[%s226 + $0xb8] sm:$0xff] %vm1182, %v949
      %1207 = vst.msk [vmem:[%s226 + $0xc0] sm:$0xff] %vm1182, %v950
      %1208 = vst.msk [vmem:[%s226 + $0xc8] sm:$0xff] %vm1182, %v951
      %1209 = vst.msk [vmem:[%s226 + $0xd0] sm:$0xff] %vm1182, %v952
      %1210 = vst.msk [vmem:[%s226 + $0xd8] sm:$0xff] %vm1182, %v953
      %1211 = vst.msk [vmem:[%s226 + $0xe0] sm:$0xff] %vm1182, %v954
      %1212 = vst.msk [vmem:[%s226 + $0xe8] sm:$0xff] %vm1182, %v955
      %1213 = vst.msk [vmem:[%s226 + $0xf0] sm:$0xff] %vm1182, %v956
      %1214 = vst.msk [vmem:[%s226 + $0xf8] sm:$0xff] %vm1182, %v957
      %1215 = vst.msk [vmem:[%s226 + $0x100] sm:$0xff] %vm1182, %v958
      %1216 = vst.msk [vmem:[%s226 + $0x108] sm:$0xff] %vm1182, %v959
      %1217 = vst.msk [vmem:[%s226 + $0x110] sm:$0xff] %vm1182, %v960
      %1218 = vst.msk [vmem:[%s226 + $0x118] sm:$0xff] %vm1182, %v961
      %1219 = vst.msk [vmem:[%s226 + $0x120] sm:$0xff] %vm1182, %v962
      %1220 = vst.msk [vmem:[%s226 + $0x128] sm:$0xff] %vm1182, %v963
      %1221 = vst.msk [vmem:[%s226 + $0x130] sm:$0xff] %vm1182, %v964
      %1222 = vst.msk [vmem:[%s226 + $0x138] sm:$0xff] %vm1182, %v965
      %1223 = vst.msk [vmem:[%s226 + $0x140] sm:$0xff] %vm1182, %v966
      %1224 = vst.msk [vmem:[%s226 + $0x148] sm:$0xff] %vm1182, %v967
      %1225 = vst.msk [vmem:[%s226 + $0x150] sm:$0xff] %vm1182, %v968
      %1226 = vst.msk [vmem:[%s226 + $0x158] sm:$0xff] %vm1182, %v969
      %1227 = vst.msk [vmem:[%s226 + $0x160] sm:$0xff] %vm1182, %v970
      %1228 = vst.msk [vmem:[%s226 + $0x168] sm:$0xff] %vm1182, %v971
      %1229 = vst.msk [vmem:[%s226 + $0x170] sm:$0xff] %vm1182, %v972
      %1230 = vst.msk [vmem:[%s226 + $0x178] sm:$0xff] %vm1182, %v973
      %1231 = vst.msk [vmem:[%s226 + $0x180] sm:$0xff] %vm1182, %v974
      %1232 = vst.msk [vmem:[%s226 + $0x188] sm:$0xff] %vm1182, %v975
      %1233 = vst.msk [vmem:[%s226 + $0x190] sm:$0xff] %vm1182, %v976
      %1234 = vst.msk [vmem:[%s226 + $0x198] sm:$0xff] %vm1182, %v977
      %1235 = vst.msk [vmem:[%s226 + $0x1a0] sm:$0xff] %vm1182, %v978
      %1236 = vst.msk [vmem:[%s226 + $0x1a8] sm:$0xff] %vm1182, %v979
      %1237 = vst.msk [vmem:[%s226 + $0x1b0] sm:$0xff] %vm1182, %v980
      %1238 = vst.msk [vmem:[%s226 + $0x1b8] sm:$0xff] %vm1182, %v981
      %1239 = vst.msk [vmem:[%s226 + $0x1c0] sm:$0xff] %vm1182, %v982
      %1240 = vst.msk [vmem:[%s226 + $0x1c8] sm:$0xff] %vm1182, %v983
      %1241 = vst.msk [vmem:[%s226 + $0x1d0] sm:$0xff] %vm1182, %v984
      %1242 = vst.msk [vmem:[%s226 + $0x1d8] sm:$0xff] %vm1182, %v985
      %1243 = vst.msk [vmem:[%s226 + $0x1e0] sm:$0xff] %vm1182, %v986
      %1244 = vst.msk [vmem:[%s226 + $0x1e8] sm:$0xff] %vm1182, %v987
      %1245 = vst.msk [vmem:[%s226 + $0x1f0] sm:$0xff] %vm1182, %v988
      %1246 = vst.msk [vmem:[%s226 + $0x1f8] sm:$0xff] %vm1182, %v989
      %1247 = vst.msk [vmem:[%s226 + $0x200] sm:$0xff] %vm1182, %v990
      %1248 = vst.msk [vmem:[%s226 + $0x208] sm:$0xff] %vm1182, %v991
      %1249 = vst.msk [vmem:[%s226 + $0x210] sm:$0xff] %vm1182, %v992
      %1250 = vst.msk [vmem:[%s226 + $0x218] sm:$0xff] %vm1182, %v993
      %1251 = vst.msk [vmem:[%s226 + $0x220] sm:$0xff] %vm1182, %v994
      %1252 = vst.msk [vmem:[%s226 + $0x228] sm:$0xff] %vm1182, %v995
      %1253 = vst.msk [vmem:[%s226 + $0x230] sm:$0xff] %vm1182, %v996
      %1254 = vst.msk [vmem:[%s226 + $0x238] sm:$0xff] %vm1182, %v997
      %1255 = vst.msk [vmem:[%s226 + $0x240] sm:$0xff] %vm1182, %v998
      %1256 = vst.msk [vmem:[%s226 + $0x248] sm:$0xff] %vm1182, %v999
      %1257 = vst.msk [vmem:[%s226 + $0x250] sm:$0xff] %vm1182, %v1000
      %1258 = vst.msk [vmem:[%s226 + $0x258] sm:$0xff] %vm1182, %v1001
      %1259 = vst.msk [vmem:[%s226 + $0x260] sm:$0xff] %vm1182, %v1002
      %1260 = vst.msk [vmem:[%s226 + $0x268] sm:$0xff] %vm1182, %v1003
      %1261 = vst.msk [vmem:[%s226 + $0x270] sm:$0xff] %vm1182, %v1004
      %1262 = vst.msk [vmem:[%s226 + $0x278] sm:$0xff] %vm1182, %v1005
      %1263 = vst.msk [vmem:[%s226 + $0x280] sm:$0xff] %vm1182, %v1006
      %1264 = vst.msk [vmem:[%s226 + $0x288] sm:$0xff] %vm1182, %v1007
      %1265 = vst.msk [vmem:[%s226 + $0x290] sm:$0xff] %vm1182, %v1008
      %1266 = vst.msk [vmem:[%s226 + $0x298] sm:$0xff] %vm1182, %v1009
      %1267 = vst.msk [vmem:[%s226 + $0x2a0] sm:$0xff] %vm1182, %v1010
      %1268 = vst.msk [vmem:[%s226 + $0x2a8] sm:$0xff] %vm1182, %v1011
      %1269 = vst.msk [vmem:[%s226 + $0x2b0] sm:$0xff] %vm1182, %v1012
      %1270 = vst.msk [vmem:[%s226 + $0x2b8] sm:$0xff] %vm1182, %v1013
      %1271 = vst.msk [vmem:[%s226 + $0x2c0] sm:$0xff] %vm1182, %v1014
      %1272 = vst.msk [vmem:[%s226 + $0x2c8] sm:$0xff] %vm1182, %v1015
      %1273 = vst.msk [vmem:[%s226 + $0x2d0] sm:$0xff] %vm1182, %v1016
      %1274 = vst.msk [vmem:[%s226 + $0x2d8] sm:$0xff] %vm1182, %v1017
      %1275 = vst.msk [vmem:[%s226 + $0x2e0] sm:$0xff] %vm1182, %v1018
      %1276 = vst.msk [vmem:[%s226 + $0x2e8] sm:$0xff] %vm1182, %v1019
      %1277 = vst.msk [vmem:[%s226 + $0x2f0] sm:$0xff] %vm1182, %v1020
      %1278 = vst.msk [vmem:[%s226 + $0x2f8] sm:$0xff] %vm1182, %v1021
      %1279 = vst.msk [vmem:[%s226 + $0x300] sm:$0xff] %vm1182, %v1022
      %1280 = vst.msk [vmem:[%s226 + $0x308] sm:$0xff] %vm1182, %v1023
      %1281 = vst.msk [vmem:[%s226 + $0x310] sm:$0xff] %vm1182, %v1024
      %1282 = vst.msk [vmem:[%s226 + $0x318] sm:$0xff] %vm1182, %v1025
      %1283 = vst.msk [vmem:[%s226 + $0x320] sm:$0xff] %vm1182, %v1026
      %1284 = vst.msk [vmem:[%s226 + $0x328] sm:$0xff] %vm1182, %v1027
      %1285 = vst.msk [vmem:[%s226 + $0x330] sm:$0xff] %vm1182, %v1028
      %1286 = vst.msk [vmem:[%s226 + $0x338] sm:$0xff] %vm1182, %v1029
      %1287 = vst.msk [vmem:[%s226 + $0x340] sm:$0xff] %vm1182, %v1030
      %1288 = vst.msk [vmem:[%s226 + $0x348] sm:$0xff] %vm1182, %v1031
      %1289 = vst.msk [vmem:[%s226 + $0x350] sm:$0xff] %vm1182, %v1032
      %1290 = vst.msk [vmem:[%s226 + $0x358] sm:$0xff] %vm1182, %v1033
      %1291 = vst.msk [vmem:[%s226 + $0x360] sm:$0xff] %vm1182, %v1034
      %1292 = vst.msk [vmem:[%s226 + $0x368] sm:$0xff] %vm1182, %v1035
      %1293 = vst.msk [vmem:[%s226 + $0x370] sm:$0xff] %vm1182, %v1036
      %1294 = vst.msk [vmem:[%s226 + $0x378] sm:$0xff] %vm1182, %v1037
      %1295 = vst.msk [vmem:[%s226 + $0x380] sm:$0xff] %vm1182, %v1038
      %1296 = vst.msk [vmem:[%s226 + $0x388] sm:$0xff] %vm1182, %v1039
      %1297 = vst.msk [vmem:[%s226 + $0x390] sm:$0xff] %vm1182, %v1040
      %1298 = vst.msk [vmem:[%s226 + $0x398] sm:$0xff] %vm1182, %v1041
      %1299 = vst.msk [vmem:[%s226 + $0x3a0] sm:$0xff] %vm1182, %v1042
      %1300 = vst.msk [vmem:[%s226 + $0x3a8] sm:$0xff] %vm1182, %v1043
      %1301 = vst.msk [vmem:[%s226 + $0x3b0] sm:$0xff] %vm1182, %v1044
      %1302 = vst.msk [vmem:[%s226 + $0x3b8] sm:$0xff] %vm1182, %v1045
      %1303 = vst.msk [vmem:[%s226 + $0x3c0] sm:$0xff] %vm1182, %v1046
      %1304 = vst.msk [vmem:[%s226 + $0x3c8] sm:$0xff] %vm1182, %v1047
      %1305 = vst.msk [vmem:[%s226 + $0x3d0] sm:$0xff] %vm1182, %v1048
      %1306 = vst.msk [vmem:[%s226 + $0x3d8] sm:$0xff] %vm1182, %v1049
      %1307 = vst.msk [vmem:[%s226 + $0x3e0] sm:$0xff] %vm1182, %v1050
      %1308 = vst.msk [vmem:[%s226 + $0x3e8] sm:$0xff] %vm1182, %v1051
      %1309 = vst.msk [vmem:[%s226 + $0x3f0] sm:$0xff] %vm1182, %v1052
      %1310 = vst.msk [vmem:[%s226 + $0x3f8] sm:$0xff] %vm1182, %v1053
      %1311 = vst.msk [vmem:[%s226 + $0x400] sm:$0xff] %vm1182, %v1054
      %1312 = vst.msk [vmem:[%s226 + $0x408] sm:$0xff] %vm1182, %v1055
      %1313 = vst.msk [vmem:[%s226 + $0x410] sm:$0xff] %vm1182, %v1056
      %1314 = vst.msk [vmem:[%s226 + $0x418] sm:$0xff] %vm1182, %v1057
      %1315 = vst.msk [vmem:[%s226 + $0x420] sm:$0xff] %vm1182, %v1058
      %1316 = vst.msk [vmem:[%s226 + $0x428] sm:$0xff] %vm1182, %v1059
      %1317 = vst.msk [vmem:[%s226 + $0x430] sm:$0xff] %vm1182, %v1060
      %1318 = vst.msk [vmem:[%s226 + $0x438] sm:$0xff] %vm1182, %v1061
      %1319 = vst.msk [vmem:[%s226 + $0x440] sm:$0xff] %vm1182, %v1062
      %1320 = vst.msk [vmem:[%s226 + $0x448] sm:$0xff] %vm1182, %v1063
      %1321 = vst.msk [vmem:[%s226 + $0x450] sm:$0xff] %vm1182, %v1064
      %1322 = vst.msk [vmem:[%s226 + $0x458] sm:$0xff] %vm1182, %v1065
      %1323 = vst.msk [vmem:[%s226 + $0x460] sm:$0xff] %vm1182, %v1066
      %1324 = vst.msk [vmem:[%s226 + $0x468] sm:$0xff] %vm1182, %v1067
      %1325 = vst.msk [vmem:[%s226 + $0x470] sm:$0xff] %vm1182, %v1068
      %1326 = vst.msk [vmem:[%s226 + $0x478] sm:$0xff] %vm1182, %v1069
      %1327 = vst.msk [vmem:[%s226 + $0x480] sm:$0xff] %vm1182, %v1070
      %1328 = vst.msk [vmem:[%s226 + $0x488] sm:$0xff] %vm1182, %v1071
      %1329 = vst.msk [vmem:[%s226 + $0x490] sm:$0xff] %vm1182, %v1072
      %1330 = vst.msk [vmem:[%s226 + $0x498] sm:$0xff] %vm1182, %v1073
      %1331 = vst.msk [vmem:[%s226 + $0x4a0] sm:$0xff] %vm1182, %v1074
      %1332 = vst.msk [vmem:[%s226 + $0x4a8] sm:$0xff] %vm1182, %v1075
      %1333 = vst.msk [vmem:[%s226 + $0x4b0] sm:$0xff] %vm1182, %v1076
      %1334 = vst.msk [vmem:[%s226 + $0x4b8] sm:$0xff] %vm1182, %v1077
      %1335 = vst.msk [vmem:[%s226 + $0x4c0] sm:$0xff] %vm1182, %v1078
      %1336 = vst.msk [vmem:[%s226 + $0x4c8] sm:$0xff] %vm1182, %v1079
      %1337 = vst.msk [vmem:[%s226 + $0x4d0] sm:$0xff] %vm1182, %v1080
      %1338 = vst.msk [vmem:[%s226 + $0x4d8] sm:$0xff] %vm1182, %v1081
      %1339 = vst.msk [vmem:[%s226 + $0x4e0] sm:$0xff] %vm1182, %v1082
      %1340 = vst.msk [vmem:[%s226 + $0x4e8] sm:$0xff] %vm1182, %v1083
      %1341 = vst.msk [vmem:[%s226 + $0x4f0] sm:$0xff] %vm1182, %v1084
      %1342 = vst.msk [vmem:[%s226 + $0x4f8] sm:$0xff] %vm1182, %v1085
      %1343 = vst.msk [vmem:[%s226 + $0x500] sm:$0xff] %vm1182, %v1086
      %1344 = vst.msk [vmem:[%s226 + $0x508] sm:$0xff] %vm1182, %v1087
      %1345 = vst.msk [vmem:[%s226 + $0x510] sm:$0xff] %vm1182, %v1088
      %1346 = vst.msk [vmem:[%s226 + $0x518] sm:$0xff] %vm1182, %v1089
      %1347 = vst.msk [vmem:[%s226 + $0x520] sm:$0xff] %vm1182, %v1090
      %1348 = vst.msk [vmem:[%s226 + $0x528] sm:$0xff] %vm1182, %v1091
      %1349 = vst.msk [vmem:[%s226 + $0x530] sm:$0xff] %vm1182, %v1092
      %1350 = vst.msk [vmem:[%s226 + $0x538] sm:$0xff] %vm1182, %v1093
      %1351 = vst.msk [vmem:[%s226 + $0x540] sm:$0xff] %vm1182, %v1094
      %1352 = vst.msk [vmem:[%s226 + $0x548] sm:$0xff] %vm1182, %v1095
      %1353 = vst.msk [vmem:[%s226 + $0x550] sm:$0xff] %vm1182, %v1096
      %1354 = vst.msk [vmem:[%s226 + $0x558] sm:$0xff] %vm1182, %v1097
      %1355 = vst.msk [vmem:[%s226 + $0x560] sm:$0xff] %vm1182, %v1098
      %1356 = vst.msk [vmem:[%s226 + $0x568] sm:$0xff] %vm1182, %v1099
      %1357 = vst.msk [vmem:[%s226 + $0x570] sm:$0xff] %vm1182, %v1100
      %1358 = vst.msk [vmem:[%s226 + $0x578] sm:$0xff] %vm1182, %v1101
      %1359 = vst.msk [vmem:[%s226 + $0x580] sm:$0xff] %vm1182, %v1102
      %1360 = vst.msk [vmem:[%s226 + $0x588] sm:$0xff] %vm1182, %v1103
      %1361 = vst.msk [vmem:[%s226 + $0x590] sm:$0xff] %vm1182, %v1104
      %1362 = vst.msk [vmem:[%s226 + $0x598] sm:$0xff] %vm1182, %v1105
      %1363 = vst.msk [vmem:[%s226 + $0x5a0] sm:$0xff] %vm1182, %v1106
      %1364 = vst.msk [vmem:[%s226 + $0x5a8] sm:$0xff] %vm1182, %v1107
      %1365 = vst.msk [vmem:[%s226 + $0x5b0] sm:$0xff] %vm1182, %v1108
      %1366 = vst.msk [vmem:[%s226 + $0x5b8] sm:$0xff] %vm1182, %v1109
      %1367 = vst.msk [vmem:[%s226 + $0x5c0] sm:$0xff] %vm1182, %v1110
      %1368 = vst.msk [vmem:[%s226 + $0x5c8] sm:$0xff] %vm1182, %v1111
      %1369 = vst.msk [vmem:[%s226 + $0x5d0] sm:$0xff] %vm1182, %v1112
      %1370 = vst.msk [vmem:[%s226 + $0x5d8] sm:$0xff] %vm1182, %v1113
      %1371 = vst.msk [vmem:[%s226 + $0x5e0] sm:$0xff] %vm1182, %v1114
      %1372 = vst.msk [vmem:[%s226 + $0x5e8] sm:$0xff] %vm1182, %v1115
      %1373 = vst.msk [vmem:[%s226 + $0x5f0] sm:$0xff] %vm1182, %v1116
      %1374 = vst.msk [vmem:[%s226 + $0x5f8] sm:$0xff] %vm1182, %v1117
      %1375 = vst.msk [vmem:[%s226 + $0x600] sm:$0xff] %vm1182, %v1118
      %1376 = vst.msk [vmem:[%s226 + $0x608] sm:$0xff] %vm1182, %v1119
      %1377 = vst.msk [vmem:[%s226 + $0x610] sm:$0xff] %vm1182, %v1120
      %1378 = vst.msk [vmem:[%s226 + $0x618] sm:$0xff] %vm1182, %v1121
      %1379 = vst.msk [vmem:[%s226 + $0x620] sm:$0xff] %vm1182, %v1122
      %1380 = vst.msk [vmem:[%s226 + $0x628] sm:$0xff] %vm1182, %v1123
      %1381 = vst.msk [vmem:[%s226 + $0x630] sm:$0xff] %vm1182, %v1124
      %1382 = vst.msk [vmem:[%s226 + $0x638] sm:$0xff] %vm1182, %v1125
      %1383 = vst.msk [vmem:[%s226 + $0x640] sm:$0xff] %vm1182, %v1126
      %1384 = vst.msk [vmem:[%s226 + $0x648] sm:$0xff] %vm1182, %v1127
      %1385 = vst.msk [vmem:[%s226 + $0x650] sm:$0xff] %vm1182, %v1128
      %1386 = vst.msk [vmem:[%s226 + $0x658] sm:$0xff] %vm1182, %v1129
      %1387 = vst.msk [vmem:[%s226 + $0x660] sm:$0xff] %vm1182, %v1130
      %1388 = vst.msk [vmem:[%s226 + $0x668] sm:$0xff] %vm1182, %v1131
      %1389 = vst.msk [vmem:[%s226 + $0x670] sm:$0xff] %vm1182, %v1132
      %1390 = vst.msk [vmem:[%s226 + $0x678] sm:$0xff] %vm1182, %v1133
      %1391 = vst.msk [vmem:[%s226 + $0x680] sm:$0xff] %vm1182, %v1134
      %1392 = vst.msk [vmem:[%s226 + $0x688] sm:$0xff] %vm1182, %v1135
      %1393 = vst.msk [vmem:[%s226 + $0x690] sm:$0xff] %vm1182, %v1136
      %1394 = vst.msk [vmem:[%s226 + $0x698] sm:$0xff] %vm1182, %v1137
      %1395 = vst.msk [vmem:[%s226 + $0x6a0] sm:$0xff] %vm1182, %v1138
      %1396 = vst.msk [vmem:[%s226 + $0x6a8] sm:$0xff] %vm1182, %v1139
      %1397 = vst.msk [vmem:[%s226 + $0x6b0] sm:$0xff] %vm1182, %v1140
      %1398 = vst.msk [vmem:[%s226 + $0x6b8] sm:$0xff] %vm1182, %v1141
      %1399 = vst.msk [vmem:[%s226 + $0x6c0] sm:$0xff] %vm1182, %v1142
      %1400 = vst.msk [vmem:[%s226 + $0x6c8] sm:$0xff] %vm1182, %v1143
      %1401 = vst.msk [vmem:[%s226 + $0x6d0] sm:$0xff] %vm1182, %v1144
      %1402 = vst.msk [vmem:[%s226 + $0x6d8] sm:$0xff] %vm1182, %v1145
      %1403 = vst.msk [vmem:[%s226 + $0x6e0] sm:$0xff] %vm1182, %v1146
      %1404 = vst.msk [vmem:[%s226 + $0x6e8] sm:$0xff] %vm1182, %v1147
      %1405 = vst.msk [vmem:[%s226 + $0x6f0] sm:$0xff] %vm1182, %v1148
      %1406 = vst.msk [vmem:[%s226 + $0x6f8] sm:$0xff] %vm1182, %v1149
      %1407 = vst.msk [vmem:[%s226 + $0x700] sm:$0xff] %vm1182, %v1150
      %1408 = vst.msk [vmem:[%s226 + $0x708] sm:$0xff] %vm1182, %v1151
      %1409 = vst.msk [vmem:[%s226 + $0x710] sm:$0xff] %vm1182, %v1152
      %1410 = vst.msk [vmem:[%s226 + $0x718] sm:$0xff] %vm1182, %v1153
      %1411 = vst.msk [vmem:[%s226 + $0x720] sm:$0xff] %vm1182, %v1154
      %1412 = vst.msk [vmem:[%s226 + $0x728] sm:$0xff] %vm1182, %v1155
      %1413 = vst.msk [vmem:[%s226 + $0x730] sm:$0xff] %vm1182, %v1156
      %1414 = vst.msk [vmem:[%s226 + $0x738] sm:$0xff] %vm1182, %v1157
      %1415 = vst.msk [vmem:[%s226 + $0x740] sm:$0xff] %vm1182, %v1158
      %1416 = vst.msk [vmem:[%s226 + $0x748] sm:$0xff] %vm1182, %v1159
      %1417 = vst.msk [vmem:[%s226 + $0x750] sm:$0xff] %vm1182, %v1160
      %1418 = vst.msk [vmem:[%s226 + $0x758] sm:$0xff] %vm1182, %v1161
      %1419 = vst.msk [vmem:[%s226 + $0x760] sm:$0xff] %vm1182, %v1162
      %1420 = vst.msk [vmem:[%s226 + $0x768] sm:$0xff] %vm1182, %v1163
      %1421 = vst.msk [vmem:[%s226 + $0x770] sm:$0xff] %vm1182, %v1164
      %1422 = vst.msk [vmem:[%s226 + $0x778] sm:$0xff] %vm1182, %v1165
      %1423 = vst.msk [vmem:[%s226 + $0x780] sm:$0xff] %vm1182, %v1166
      %1424 = vst.msk [vmem:[%s226 + $0x788] sm:$0xff] %vm1182, %v1167
      %1425 = vst.msk [vmem:[%s226 + $0x790] sm:$0xff] %vm1182, %v1168
      %1426 = vst.msk [vmem:[%s226 + $0x798] sm:$0xff] %vm1182, %v1169
      %1427 = vst.msk [vmem:[%s226 + $0x7a0] sm:$0xff] %vm1182, %v1170
      %1428 = vst.msk [vmem:[%s226 + $0x7a8] sm:$0xff] %vm1182, %v1171
      %1429 = vst.msk [vmem:[%s226 + $0x7b0] sm:$0xff] %vm1182, %v1172
      %1430 = vst.msk [vmem:[%s226 + $0x7b8] sm:$0xff] %vm1182, %v1173
      %1431 = vst.msk [vmem:[%s226 + $0x7c0] sm:$0xff] %vm1182, %v1174
      %1432 = vst.msk [vmem:[%s226 + $0x7c8] sm:$0xff] %vm1182, %v1175
      %1433 = vst.msk [vmem:[%s226 + $0x7d0] sm:$0xff] %vm1182, %v1176
      %1434 = vst.msk [vmem:[%s226 + $0x7d8] sm:$0xff] %vm1182, %v1177
      %1435 = vst.msk [vmem:[%s226 + $0x7e0] sm:$0xff] %vm1182, %v1178
      %1436 = vst.msk [vmem:[%s226 + $0x7e8] sm:$0xff] %vm1182, %v1179
      %1437 = vst.msk [vmem:[%s226 + $0x7f0] sm:$0xff] %vm1182, %v1180
      %1438 = vst.msk [vmem:[%s226 + $0x7f8] sm:$0xff] %vm1182, %v1181
      %1695 = vrot.lane.b32.xlu0 %v926, 16
      %v1696 = vpop.permute.xlu0 %1695
      %1697 = vrot.lane.b32.xlu0 %v927, 16
      %v1698 = vpop.permute.xlu0 %1697
      %1699 = vrot.lane.b32.xlu0 %v928, 16
      %v1700 = vpop.permute.xlu0 %1699
      %1701 = vrot.lane.b32.xlu0 %v929, 16
      %v1702 = vpop.permute.xlu0 %1701
      %1703 = vrot.lane.b32.xlu0 %v930, 16
      %v1704 = vpop.permute.xlu0 %1703
      %1705 = vrot.lane.b32.xlu0 %v931, 16
      %v1706 = vpop.permute.xlu0 %1705
      %1707 = vrot.lane.b32.xlu0 %v932, 16
      %v1708 = vpop.permute.xlu0 %1707
      %1709 = vrot.lane.b32.xlu0 %v933, 16
      %v1710 = vpop.permute.xlu0 %1709
      %1711 = vrot.lane.b32.xlu0 %v934, 16
      %v1712 = vpop.permute.xlu0 %1711
      %1713 = vrot.lane.b32.xlu0 %v935, 16
      %v1714 = vpop.permute.xlu0 %1713
      %1715 = vrot.lane.b32.xlu0 %v936, 16
      %v1716 = vpop.permute.xlu0 %1715
      %1717 = vrot.lane.b32.xlu0 %v937, 16
      %v1718 = vpop.permute.xlu0 %1717
      %1719 = vrot.lane.b32.xlu0 %v938, 16
      %v1720 = vpop.permute.xlu0 %1719
      %1721 = vrot.lane.b32.xlu0 %v939, 16
      %v1722 = vpop.permute.xlu0 %1721
      %1723 = vrot.lane.b32.xlu0 %v940, 16
      %v1724 = vpop.permute.xlu0 %1723
      %1725 = vrot.lane.b32.xlu0 %v941, 16
      %v1726 = vpop.permute.xlu0 %1725
      %1727 = vrot.lane.b32.xlu0 %v942, 16
      %v1728 = vpop.permute.xlu0 %1727
      %1729 = vrot.lane.b32.xlu0 %v943, 16
      %v1730 = vpop.permute.xlu0 %1729
      %1731 = vrot.lane.b32.xlu0 %v944, 16
      %v1732 = vpop.permute.xlu0 %1731
      %1733 = vrot.lane.b32.xlu0 %v945, 16
      %v1734 = vpop.permute.xlu0 %1733
      %1735 = vrot.lane.b32.xlu0 %v946, 16
      %v1736 = vpop.permute.xlu0 %1735
      %1737 = vrot.lane.b32.xlu0 %v947, 16
      %v1738 = vpop.permute.xlu0 %1737
      %1739 = vrot.lane.b32.xlu0 %v948, 16
      %v1740 = vpop.permute.xlu0 %1739
      %1741 = vrot.lane.b32.xlu0 %v949, 16
      %v1742 = vpop.permute.xlu0 %1741
      %1743 = vrot.lane.b32.xlu0 %v950, 16
      %v1744 = vpop.permute.xlu0 %1743
      %1745 = vrot.lane.b32.xlu0 %v951, 16
      %v1746 = vpop.permute.xlu0 %1745
      %1747 = vrot.lane.b32.xlu0 %v952, 16
      %v1748 = vpop.permute.xlu0 %1747
      %1749 = vrot.lane.b32.xlu0 %v953, 16
      %v1750 = vpop.permute.xlu0 %1749
      %1751 = vrot.lane.b32.xlu0 %v954, 16
      %v1752 = vpop.permute.xlu0 %1751
      %1753 = vrot.lane.b32.xlu0 %v955, 16
      %v1754 = vpop.permute.xlu0 %1753
      %1755 = vrot.lane.b32.xlu0 %v956, 16
      %v1756 = vpop.permute.xlu0 %1755
      %1757 = vrot.lane.b32.xlu0 %v957, 16
      %v1758 = vpop.permute.xlu0 %1757
      %1759 = vrot.lane.b32.xlu0 %v958, 16
      %v1760 = vpop.permute.xlu0 %1759
      %1761 = vrot.lane.b32.xlu0 %v959, 16
      %v1762 = vpop.permute.xlu0 %1761
      %1763 = vrot.lane.b32.xlu0 %v960, 16
      %v1764 = vpop.permute.xlu0 %1763
      %1765 = vrot.lane.b32.xlu0 %v961, 16
      %v1766 = vpop.permute.xlu0 %1765
      %1767 = vrot.lane.b32.xlu0 %v962, 16
      %v1768 = vpop.permute.xlu0 %1767
      %1769 = vrot.lane.b32.xlu0 %v963, 16
      %v1770 = vpop.permute.xlu0 %1769
      %1771 = vrot.lane.b32.xlu0 %v964, 16
      %v1772 = vpop.permute.xlu0 %1771
      %1773 = vrot.lane.b32.xlu0 %v965, 16
      %v1774 = vpop.permute.xlu0 %1773
      %1775 = vrot.lane.b32.xlu0 %v966, 16
      %v1776 = vpop.permute.xlu0 %1775
      %1777 = vrot.lane.b32.xlu0 %v967, 16
      %v1778 = vpop.permute.xlu0 %1777
      %1779 = vrot.lane.b32.xlu0 %v968, 16
      %v1780 = vpop.permute.xlu0 %1779
      %1781 = vrot.lane.b32.xlu0 %v969, 16
      %v1782 = vpop.permute.xlu0 %1781
      %1783 = vrot.lane.b32.xlu0 %v970, 16
      %v1784 = vpop.permute.xlu0 %1783
      %1785 = vrot.lane.b32.xlu0 %v971, 16
      %v1786 = vpop.permute.xlu0 %1785
      %1787 = vrot.lane.b32.xlu0 %v972, 16
      %v1788 = vpop.permute.xlu0 %1787
      %1789 = vrot.lane.b32.xlu0 %v973, 16
      %v1790 = vpop.permute.xlu0 %1789
      %1791 = vrot.lane.b32.xlu0 %v974, 16
      %v1792 = vpop.permute.xlu0 %1791
      %1793 = vrot.lane.b32.xlu0 %v975, 16
      %v1794 = vpop.permute.xlu0 %1793
      %1795 = vrot.lane.b32.xlu0 %v976, 16
      %v1796 = vpop.permute.xlu0 %1795
      %1797 = vrot.lane.b32.xlu0 %v977, 16
      %v1798 = vpop.permute.xlu0 %1797
      %1799 = vrot.lane.b32.xlu0 %v978, 16
      %v1800 = vpop.permute.xlu0 %1799
      %1801 = vrot.lane.b32.xlu0 %v979, 16
      %v1802 = vpop.permute.xlu0 %1801
      %1803 = vrot.lane.b32.xlu0 %v980, 16
      %v1804 = vpop.permute.xlu0 %1803
      %1805 = vrot.lane.b32.xlu0 %v981, 16
      %v1806 = vpop.permute.xlu0 %1805
      %1807 = vrot.lane.b32.xlu0 %v982, 16
      %v1808 = vpop.permute.xlu0 %1807
      %1809 = vrot.lane.b32.xlu0 %v983, 16
      %v1810 = vpop.permute.xlu0 %1809
      %1811 = vrot.lane.b32.xlu0 %v984, 16
      %v1812 = vpop.permute.xlu0 %1811
      %1813 = vrot.lane.b32.xlu0 %v985, 16
      %v1814 = vpop.permute.xlu0 %1813
      %1815 = vrot.lane.b32.xlu0 %v986, 16
      %v1816 = vpop.permute.xlu0 %1815
      %1817 = vrot.lane.b32.xlu0 %v987, 16
      %v1818 = vpop.permute.xlu0 %1817
      %1819 = vrot.lane.b32.xlu0 %v988, 16
      %v1820 = vpop.permute.xlu0 %1819
      %1821 = vrot.lane.b32.xlu0 %v989, 16
      %v1822 = vpop.permute.xlu0 %1821
      %1823 = vrot.lane.b32.xlu0 %v990, 16
      %v1824 = vpop.permute.xlu0 %1823
      %1825 = vrot.lane.b32.xlu0 %v991, 16
      %v1826 = vpop.permute.xlu0 %1825
      %1827 = vrot.lane.b32.xlu0 %v992, 16
      %v1828 = vpop.permute.xlu0 %1827
      %1829 = vrot.lane.b32.xlu0 %v993, 16
      %v1830 = vpop.permute.xlu0 %1829
      %1831 = vrot.lane.b32.xlu0 %v994, 16
      %v1832 = vpop.permute.xlu0 %1831
      %1833 = vrot.lane.b32.xlu0 %v995, 16
      %v1834 = vpop.permute.xlu0 %1833
      %1835 = vrot.lane.b32.xlu0 %v996, 16
      %v1836 = vpop.permute.xlu0 %1835
      %1837 = vrot.lane.b32.xlu0 %v997, 16
      %v1838 = vpop.permute.xlu0 %1837
      %1839 = vrot.lane.b32.xlu0 %v998, 16
      %v1840 = vpop.permute.xlu0 %1839
      %1841 = vrot.lane.b32.xlu0 %v999, 16
      %v1842 = vpop.permute.xlu0 %1841
      %1843 = vrot.lane.b32.xlu0 %v1000, 16
      %v1844 = vpop.permute.xlu0 %1843
      %1845 = vrot.lane.b32.xlu0 %v1001, 16
      %v1846 = vpop.permute.xlu0 %1845
      %1847 = vrot.lane.b32.xlu0 %v1002, 16
      %v1848 = vpop.permute.xlu0 %1847
      %1849 = vrot.lane.b32.xlu0 %v1003, 16
      %v1850 = vpop.permute.xlu0 %1849
      %1851 = vrot.lane.b32.xlu0 %v1004, 16
      %v1852 = vpop.permute.xlu0 %1851
      %1853 = vrot.lane.b32.xlu0 %v1005, 16
      %v1854 = vpop.permute.xlu0 %1853
      %1855 = vrot.lane.b32.xlu0 %v1006, 16
      %v1856 = vpop.permute.xlu0 %1855
      %1857 = vrot.lane.b32.xlu0 %v1007, 16
      %v1858 = vpop.permute.xlu0 %1857
      %1859 = vrot.lane.b32.xlu0 %v1008, 16
      %v1860 = vpop.permute.xlu0 %1859
      %1861 = vrot.lane.b32.xlu0 %v1009, 16
      %v1862 = vpop.permute.xlu0 %1861
      %1863 = vrot.lane.b32.xlu0 %v1010, 16
      %v1864 = vpop.permute.xlu0 %1863
      %1865 = vrot.lane.b32.xlu0 %v1011, 16
      %v1866 = vpop.permute.xlu0 %1865
      %1867 = vrot.lane.b32.xlu0 %v1012, 16
      %v1868 = vpop.permute.xlu0 %1867
      %1869 = vrot.lane.b32.xlu0 %v1013, 16
      %v1870 = vpop.permute.xlu0 %1869
      %1871 = vrot.lane.b32.xlu0 %v1014, 16
      %v1872 = vpop.permute.xlu0 %1871
      %1873 = vrot.lane.b32.xlu0 %v1015, 16
      %v1874 = vpop.permute.xlu0 %1873
      %1875 = vrot.lane.b32.xlu0 %v1016, 16
      %v1876 = vpop.permute.xlu0 %1875
      %1877 = vrot.lane.b32.xlu0 %v1017, 16
      %v1878 = vpop.permute.xlu0 %1877
      %1879 = vrot.lane.b32.xlu0 %v1018, 16
      %v1880 = vpop.permute.xlu0 %1879
      %1881 = vrot.lane.b32.xlu0 %v1019, 16
      %v1882 = vpop.permute.xlu0 %1881
      %1883 = vrot.lane.b32.xlu0 %v1020, 16
      %v1884 = vpop.permute.xlu0 %1883
      %1885 = vrot.lane.b32.xlu0 %v1021, 16
      %v1886 = vpop.permute.xlu0 %1885
      %1887 = vrot.lane.b32.xlu0 %v1022, 16
      %v1888 = vpop.permute.xlu0 %1887
      %1889 = vrot.lane.b32.xlu0 %v1023, 16
      %v1890 = vpop.permute.xlu0 %1889
      %1891 = vrot.lane.b32.xlu0 %v1024, 16
      %v1892 = vpop.permute.xlu0 %1891
      %1893 = vrot.lane.b32.xlu0 %v1025, 16
      %v1894 = vpop.permute.xlu0 %1893
      %1895 = vrot.lane.b32.xlu0 %v1026, 16
      %v1896 = vpop.permute.xlu0 %1895
      %1897 = vrot.lane.b32.xlu0 %v1027, 16
      %v1898 = vpop.permute.xlu0 %1897
      %1899 = vrot.lane.b32.xlu0 %v1028, 16
      %v1900 = vpop.permute.xlu0 %1899
      %1901 = vrot.lane.b32.xlu0 %v1029, 16
      %v1902 = vpop.permute.xlu0 %1901
      %1903 = vrot.lane.b32.xlu0 %v1030, 16
      %v1904 = vpop.permute.xlu0 %1903
      %1905 = vrot.lane.b32.xlu0 %v1031, 16
      %v1906 = vpop.permute.xlu0 %1905
      %1907 = vrot.lane.b32.xlu0 %v1032, 16
      %v1908 = vpop.permute.xlu0 %1907
      %1909 = vrot.lane.b32.xlu0 %v1033, 16
      %v1910 = vpop.permute.xlu0 %1909
      %1911 = vrot.lane.b32.xlu0 %v1034, 16
      %v1912 = vpop.permute.xlu0 %1911
      %1913 = vrot.lane.b32.xlu0 %v1035, 16
      %v1914 = vpop.permute.xlu0 %1913
      %1915 = vrot.lane.b32.xlu0 %v1036, 16
      %v1916 = vpop.permute.xlu0 %1915
      %1917 = vrot.lane.b32.xlu0 %v1037, 16
      %v1918 = vpop.permute.xlu0 %1917
      %1919 = vrot.lane.b32.xlu0 %v1038, 16
      %v1920 = vpop.permute.xlu0 %1919
      %1921 = vrot.lane.b32.xlu0 %v1039, 16
      %v1922 = vpop.permute.xlu0 %1921
      %1923 = vrot.lane.b32.xlu0 %v1040, 16
      %v1924 = vpop.permute.xlu0 %1923
      %1925 = vrot.lane.b32.xlu0 %v1041, 16
      %v1926 = vpop.permute.xlu0 %1925
      %1927 = vrot.lane.b32.xlu0 %v1042, 16
      %v1928 = vpop.permute.xlu0 %1927
      %1929 = vrot.lane.b32.xlu0 %v1043, 16
      %v1930 = vpop.permute.xlu0 %1929
      %1931 = vrot.lane.b32.xlu0 %v1044, 16
      %v1932 = vpop.permute.xlu0 %1931
      %1933 = vrot.lane.b32.xlu0 %v1045, 16
      %v1934 = vpop.permute.xlu0 %1933
      %1935 = vrot.lane.b32.xlu0 %v1046, 16
      %v1936 = vpop.permute.xlu0 %1935
      %1937 = vrot.lane.b32.xlu0 %v1047, 16
      %v1938 = vpop.permute.xlu0 %1937
      %1939 = vrot.lane.b32.xlu0 %v1048, 16
      %v1940 = vpop.permute.xlu0 %1939
      %1941 = vrot.lane.b32.xlu0 %v1049, 16
      %v1942 = vpop.permute.xlu0 %1941
      %1943 = vrot.lane.b32.xlu0 %v1050, 16
      %v1944 = vpop.permute.xlu0 %1943
      %1945 = vrot.lane.b32.xlu0 %v1051, 16
      %v1946 = vpop.permute.xlu0 %1945
      %1947 = vrot.lane.b32.xlu0 %v1052, 16
      %v1948 = vpop.permute.xlu0 %1947
      %1949 = vrot.lane.b32.xlu0 %v1053, 16
      %v1950 = vpop.permute.xlu0 %1949
      %1951 = vrot.lane.b32.xlu0 %v1054, 16
      %v1952 = vpop.permute.xlu0 %1951
      %1953 = vrot.lane.b32.xlu0 %v1055, 16
      %v1954 = vpop.permute.xlu0 %1953
      %1955 = vrot.lane.b32.xlu0 %v1056, 16
      %v1956 = vpop.permute.xlu0 %1955
      %1957 = vrot.lane.b32.xlu0 %v1057, 16
      %v1958 = vpop.permute.xlu0 %1957
      %1959 = vrot.lane.b32.xlu0 %v1058, 16
      %v1960 = vpop.permute.xlu0 %1959
      %1961 = vrot.lane.b32.xlu0 %v1059, 16
      %v1962 = vpop.permute.xlu0 %1961
      %1963 = vrot.lane.b32.xlu0 %v1060, 16
      %v1964 = vpop.permute.xlu0 %1963
      %1965 = vrot.lane.b32.xlu0 %v1061, 16
      %v1966 = vpop.permute.xlu0 %1965
      %1967 = vrot.lane.b32.xlu0 %v1062, 16
      %v1968 = vpop.permute.xlu0 %1967
      %1969 = vrot.lane.b32.xlu0 %v1063, 16
      %v1970 = vpop.permute.xlu0 %1969
      %1971 = vrot.lane.b32.xlu0 %v1064, 16
      %v1972 = vpop.permute.xlu0 %1971
      %1973 = vrot.lane.b32.xlu0 %v1065, 16
      %v1974 = vpop.permute.xlu0 %1973
      %1975 = vrot.lane.b32.xlu0 %v1066, 16
      %v1976 = vpop.permute.xlu0 %1975
      %1977 = vrot.lane.b32.xlu0 %v1067, 16
      %v1978 = vpop.permute.xlu0 %1977
      %1979 = vrot.lane.b32.xlu0 %v1068, 16
      %v1980 = vpop.permute.xlu0 %1979
      %1981 = vrot.lane.b32.xlu0 %v1069, 16
      %v1982 = vpop.permute.xlu0 %1981
      %1983 = vrot.lane.b32.xlu0 %v1070, 16
      %v1984 = vpop.permute.xlu0 %1983
      %1985 = vrot.lane.b32.xlu0 %v1071, 16
      %v1986 = vpop.permute.xlu0 %1985
      %1987 = vrot.lane.b32.xlu0 %v1072, 16
      %v1988 = vpop.permute.xlu0 %1987
      %1989 = vrot.lane.b32.xlu0 %v1073, 16
      %v1990 = vpop.permute.xlu0 %1989
      %1991 = vrot.lane.b32.xlu0 %v1074, 16
      %v1992 = vpop.permute.xlu0 %1991
      %1993 = vrot.lane.b32.xlu0 %v1075, 16
      %v1994 = vpop.permute.xlu0 %1993
      %1995 = vrot.lane.b32.xlu0 %v1076, 16
      %v1996 = vpop.permute.xlu0 %1995
      %1997 = vrot.lane.b32.xlu0 %v1077, 16
      %v1998 = vpop.permute.xlu0 %1997
      %1999 = vrot.lane.b32.xlu0 %v1078, 16
      %v2000 = vpop.permute.xlu0 %1999
      %2001 = vrot.lane.b32.xlu0 %v1079, 16
      %v2002 = vpop.permute.xlu0 %2001
      %2003 = vrot.lane.b32.xlu0 %v1080, 16
      %v2004 = vpop.permute.xlu0 %2003
      %2005 = vrot.lane.b32.xlu0 %v1081, 16
      %v2006 = vpop.permute.xlu0 %2005
      %2007 = vrot.lane.b32.xlu0 %v1082, 16
      %v2008 = vpop.permute.xlu0 %2007
      %2009 = vrot.lane.b32.xlu0 %v1083, 16
      %v2010 = vpop.permute.xlu0 %2009
      %2011 = vrot.lane.b32.xlu0 %v1084, 16
      %v2012 = vpop.permute.xlu0 %2011
      %2013 = vrot.lane.b32.xlu0 %v1085, 16
      %v2014 = vpop.permute.xlu0 %2013
      %2015 = vrot.lane.b32.xlu0 %v1086, 16
      %v2016 = vpop.permute.xlu0 %2015
      %2017 = vrot.lane.b32.xlu0 %v1087, 16
      %v2018 = vpop.permute.xlu0 %2017
      %2019 = vrot.lane.b32.xlu0 %v1088, 16
      %v2020 = vpop.permute.xlu0 %2019
      %2021 = vrot.lane.b32.xlu0 %v1089, 16
      %v2022 = vpop.permute.xlu0 %2021
      %2023 = vrot.lane.b32.xlu0 %v1090, 16
      %v2024 = vpop.permute.xlu0 %2023
      %2025 = vrot.lane.b32.xlu0 %v1091, 16
      %v2026 = vpop.permute.xlu0 %2025
      %2027 = vrot.lane.b32.xlu0 %v1092, 16
      %v2028 = vpop.permute.xlu0 %2027
      %2029 = vrot.lane.b32.xlu0 %v1093, 16
      %v2030 = vpop.permute.xlu0 %2029
      %2031 = vrot.lane.b32.xlu0 %v1094, 16
      %v2032 = vpop.permute.xlu0 %2031
      %2033 = vrot.lane.b32.xlu0 %v1095, 16
      %v2034 = vpop.permute.xlu0 %2033
      %2035 = vrot.lane.b32.xlu0 %v1096, 16
      %v2036 = vpop.permute.xlu0 %2035
      %2037 = vrot.lane.b32.xlu0 %v1097, 16
      %v2038 = vpop.permute.xlu0 %2037
      %2039 = vrot.lane.b32.xlu0 %v1098, 16
      %v2040 = vpop.permute.xlu0 %2039
      %2041 = vrot.lane.b32.xlu0 %v1099, 16
      %v2042 = vpop.permute.xlu0 %2041
      %2043 = vrot.lane.b32.xlu0 %v1100, 16
      %v2044 = vpop.permute.xlu0 %2043
      %2045 = vrot.lane.b32.xlu0 %v1101, 16
      %v2046 = vpop.permute.xlu0 %2045
      %2047 = vrot.lane.b32.xlu0 %v1102, 16
      %v2048 = vpop.permute.xlu0 %2047
      %2049 = vrot.lane.b32.xlu0 %v1103, 16
      %v2050 = vpop.permute.xlu0 %2049
      %2051 = vrot.lane.b32.xlu0 %v1104, 16
      %v2052 = vpop.permute.xlu0 %2051
      %2053 = vrot.lane.b32.xlu0 %v1105, 16
      %v2054 = vpop.permute.xlu0 %2053
      %2055 = vrot.lane.b32.xlu0 %v1106, 16
      %v2056 = vpop.permute.xlu0 %2055
      %2057 = vrot.lane.b32.xlu0 %v1107, 16
      %v2058 = vpop.permute.xlu0 %2057
      %2059 = vrot.lane.b32.xlu0 %v1108, 16
      %v2060 = vpop.permute.xlu0 %2059
      %2061 = vrot.lane.b32.xlu0 %v1109, 16
      %v2062 = vpop.permute.xlu0 %2061
      %2063 = vrot.lane.b32.xlu0 %v1110, 16
      %v2064 = vpop.permute.xlu0 %2063
      %2065 = vrot.lane.b32.xlu0 %v1111, 16
      %v2066 = vpop.permute.xlu0 %2065
      %2067 = vrot.lane.b32.xlu0 %v1112, 16
      %v2068 = vpop.permute.xlu0 %2067
      %2069 = vrot.lane.b32.xlu0 %v1113, 16
      %v2070 = vpop.permute.xlu0 %2069
      %2071 = vrot.lane.b32.xlu0 %v1114, 16
      %v2072 = vpop.permute.xlu0 %2071
      %2073 = vrot.lane.b32.xlu0 %v1115, 16
      %v2074 = vpop.permute.xlu0 %2073
      %2075 = vrot.lane.b32.xlu0 %v1116, 16
      %v2076 = vpop.permute.xlu0 %2075
      %2077 = vrot.lane.b32.xlu0 %v1117, 16
      %v2078 = vpop.permute.xlu0 %2077
      %2079 = vrot.lane.b32.xlu0 %v1118, 16
      %v2080 = vpop.permute.xlu0 %2079
      %2081 = vrot.lane.b32.xlu0 %v1119, 16
      %v2082 = vpop.permute.xlu0 %2081
      %2083 = vrot.lane.b32.xlu0 %v1120, 16
      %v2084 = vpop.permute.xlu0 %2083
      %2085 = vrot.lane.b32.xlu0 %v1121, 16
      %v2086 = vpop.permute.xlu0 %2085
      %2087 = vrot.lane.b32.xlu0 %v1122, 16
      %v2088 = vpop.permute.xlu0 %2087
      %2089 = vrot.lane.b32.xlu0 %v1123, 16
      %v2090 = vpop.permute.xlu0 %2089
      %2091 = vrot.lane.b32.xlu0 %v1124, 16
      %v2092 = vpop.permute.xlu0 %2091
      %2093 = vrot.lane.b32.xlu0 %v1125, 16
      %v2094 = vpop.permute.xlu0 %2093
      %2095 = vrot.lane.b32.xlu0 %v1126, 16
      %v2096 = vpop.permute.xlu0 %2095
      %2097 = vrot.lane.b32.xlu0 %v1127, 16
      %v2098 = vpop.permute.xlu0 %2097
      %2099 = vrot.lane.b32.xlu0 %v1128, 16
      %v2100 = vpop.permute.xlu0 %2099
      %2101 = vrot.lane.b32.xlu0 %v1129, 16
      %v2102 = vpop.permute.xlu0 %2101
      %2103 = vrot.lane.b32.xlu0 %v1130, 16
      %v2104 = vpop.permute.xlu0 %2103
      %2105 = vrot.lane.b32.xlu0 %v1131, 16
      %v2106 = vpop.permute.xlu0 %2105
      %2107 = vrot.lane.b32.xlu0 %v1132, 16
      %v2108 = vpop.permute.xlu0 %2107
      %2109 = vrot.lane.b32.xlu0 %v1133, 16
      %v2110 = vpop.permute.xlu0 %2109
      %2111 = vrot.lane.b32.xlu0 %v1134, 16
      %v2112 = vpop.permute.xlu0 %2111
      %2113 = vrot.lane.b32.xlu0 %v1135, 16
      %v2114 = vpop.permute.xlu0 %2113
      %2115 = vrot.lane.b32.xlu0 %v1136, 16
      %v2116 = vpop.permute.xlu0 %2115
      %2117 = vrot.lane.b32.xlu0 %v1137, 16
      %v2118 = vpop.permute.xlu0 %2117
      %2119 = vrot.lane.b32.xlu0 %v1138, 16
      %v2120 = vpop.permute.xlu0 %2119
      %2121 = vrot.lane.b32.xlu0 %v1139, 16
      %v2122 = vpop.permute.xlu0 %2121
      %2123 = vrot.lane.b32.xlu0 %v1140, 16
      %v2124 = vpop.permute.xlu0 %2123
      %2125 = vrot.lane.b32.xlu0 %v1141, 16
      %v2126 = vpop.permute.xlu0 %2125
      %2127 = vrot.lane.b32.xlu0 %v1142, 16
      %v2128 = vpop.permute.xlu0 %2127
      %2129 = vrot.lane.b32.xlu0 %v1143, 16
      %v2130 = vpop.permute.xlu0 %2129
      %2131 = vrot.lane.b32.xlu0 %v1144, 16
      %v2132 = vpop.permute.xlu0 %2131
      %2133 = vrot.lane.b32.xlu0 %v1145, 16
      %v2134 = vpop.permute.xlu0 %2133
      %2135 = vrot.lane.b32.xlu0 %v1146, 16
      %v2136 = vpop.permute.xlu0 %2135
      %2137 = vrot.lane.b32.xlu0 %v1147, 16
      %v2138 = vpop.permute.xlu0 %2137
      %2139 = vrot.lane.b32.xlu0 %v1148, 16
      %v2140 = vpop.permute.xlu0 %2139
      %2141 = vrot.lane.b32.xlu0 %v1149, 16
      %v2142 = vpop.permute.xlu0 %2141
      %2143 = vrot.lane.b32.xlu0 %v1150, 16
      %v2144 = vpop.permute.xlu0 %2143
      %2145 = vrot.lane.b32.xlu0 %v1151, 16
      %v2146 = vpop.permute.xlu0 %2145
      %2147 = vrot.lane.b32.xlu0 %v1152, 16
      %v2148 = vpop.permute.xlu0 %2147
      %2149 = vrot.lane.b32.xlu0 %v1153, 16
      %v2150 = vpop.permute.xlu0 %2149
      %2151 = vrot.lane.b32.xlu0 %v1154, 16
      %v2152 = vpop.permute.xlu0 %2151
      %2153 = vrot.lane.b32.xlu0 %v1155, 16
      %v2154 = vpop.permute.xlu0 %2153
      %2155 = vrot.lane.b32.xlu0 %v1156, 16
      %v2156 = vpop.permute.xlu0 %2155
      %2157 = vrot.lane.b32.xlu0 %v1157, 16
      %v2158 = vpop.permute.xlu0 %2157
      %2159 = vrot.lane.b32.xlu0 %v1158, 16
      %v2160 = vpop.permute.xlu0 %2159
      %2161 = vrot.lane.b32.xlu0 %v1159, 16
      %v2162 = vpop.permute.xlu0 %2161
      %2163 = vrot.lane.b32.xlu0 %v1160, 16
      %v2164 = vpop.permute.xlu0 %2163
      %2165 = vrot.lane.b32.xlu0 %v1161, 16
      %v2166 = vpop.permute.xlu0 %2165
      %2167 = vrot.lane.b32.xlu0 %v1162, 16
      %v2168 = vpop.permute.xlu0 %2167
      %2169 = vrot.lane.b32.xlu0 %v1163, 16
      %v2170 = vpop.permute.xlu0 %2169
      %2171 = vrot.lane.b32.xlu0 %v1164, 16
      %v2172 = vpop.permute.xlu0 %2171
      %2173 = vrot.lane.b32.xlu0 %v1165, 16
      %v2174 = vpop.permute.xlu0 %2173
      %2175 = vrot.lane.b32.xlu0 %v1166, 16
      %v2176 = vpop.permute.xlu0 %2175
      %2177 = vrot.lane.b32.xlu0 %v1167, 16
      %v2178 = vpop.permute.xlu0 %2177
      %2179 = vrot.lane.b32.xlu0 %v1168, 16
      %v2180 = vpop.permute.xlu0 %2179
      %2181 = vrot.lane.b32.xlu0 %v1169, 16
      %v2182 = vpop.permute.xlu0 %2181
      %2183 = vrot.lane.b32.xlu0 %v1170, 16
      %v2184 = vpop.permute.xlu0 %2183
      %2185 = vrot.lane.b32.xlu0 %v1171, 16
      %v2186 = vpop.permute.xlu0 %2185
      %2187 = vrot.lane.b32.xlu0 %v1172, 16
      %v2188 = vpop.permute.xlu0 %2187
      %2189 = vrot.lane.b32.xlu0 %v1173, 16
      %v2190 = vpop.permute.xlu0 %2189
      %2191 = vrot.lane.b32.xlu0 %v1174, 16
      %v2192 = vpop.permute.xlu0 %2191
      %2193 = vrot.lane.b32.xlu0 %v1175, 16
      %v2194 = vpop.permute.xlu0 %2193
      %2195 = vrot.lane.b32.xlu0 %v1176, 16
      %v2196 = vpop.permute.xlu0 %2195
      %2197 = vrot.lane.b32.xlu0 %v1177, 16
      %v2198 = vpop.permute.xlu0 %2197
      %2199 = vrot.lane.b32.xlu0 %v1178, 16
      %v2200 = vpop.permute.xlu0 %2199
      %2201 = vrot.lane.b32.xlu0 %v1179, 16
      %v2202 = vpop.permute.xlu0 %2201
      %2203 = vrot.lane.b32.xlu0 %v1180, 16
      %v2204 = vpop.permute.xlu0 %2203
      %2205 = vrot.lane.b32.xlu0 %v1181, 16
      %v2206 = vpop.permute.xlu0 %2205
      %vm2463 = vcmask 392448
      %2464 = vst.msk [vmem:[%s226] sm:$0xff] %vm2463, %v1696
      %2465 = vst.msk [vmem:[%s226 + $0x8] sm:$0xff] %vm2463, %v1698
      %2466 = vst.msk [vmem:[%s226 + $0x10] sm:$0xff] %vm2463, %v1700
      %2467 = vst.msk [vmem:[%s226 + $0x18] sm:$0xff] %vm2463, %v1702
      %2468 = vst.msk [vmem:[%s226 + $0x20] sm:$0xff] %vm2463, %v1704
      %2469 = vst.msk [vmem:[%s226 + $0x28] sm:$0xff] %vm2463, %v1706
      %2470 = vst.msk [vmem:[%s226 + $0x30] sm:$0xff] %vm2463, %v1708
      %2471 = vst.msk [vmem:[%s226 + $0x38] sm:$0xff] %vm2463, %v1710
      %2472 = vst.msk [vmem:[%s226 + $0x40] sm:$0xff] %vm2463, %v1712
      %2473 = vst.msk [vmem:[%s226 + $0x48] sm:$0xff] %vm2463, %v1714
      %2474 = vst.msk [vmem:[%s226 + $0x50] sm:$0xff] %vm2463, %v1716
      %2475 = vst.msk [vmem:[%s226 + $0x58] sm:$0xff] %vm2463, %v1718
      %2476 = vst.msk [vmem:[%s226 + $0x60] sm:$0xff] %vm2463, %v1720
      %2477 = vst.msk [vmem:[%s226 + $0x68] sm:$0xff] %vm2463, %v1722
      %2478 = vst.msk [vmem:[%s226 + $0x70] sm:$0xff] %vm2463, %v1724
      %2479 = vst.msk [vmem:[%s226 + $0x78] sm:$0xff] %vm2463, %v1726
      %2480 = vst.msk [vmem:[%s226 + $0x80] sm:$0xff] %vm2463, %v1728
      %2481 = vst.msk [vmem:[%s226 + $0x88] sm:$0xff] %vm2463, %v1730
      %2482 = vst.msk [vmem:[%s226 + $0x90] sm:$0xff] %vm2463, %v1732
      %2483 = vst.msk [vmem:[%s226 + $0x98] sm:$0xff] %vm2463, %v1734
      %2484 = vst.msk [vmem:[%s226 + $0xa0] sm:$0xff] %vm2463, %v1736
      %2485 = vst.msk [vmem:[%s226 + $0xa8] sm:$0xff] %vm2463, %v1738
      %2486 = vst.msk [vmem:[%s226 + $0xb0] sm:$0xff] %vm2463, %v1740
      %2487 = vst.msk [vmem:[%s226 + $0xb8] sm:$0xff] %vm2463, %v1742
      %2488 = vst.msk [vmem:[%s226 + $0xc0] sm:$0xff] %vm2463, %v1744
      %2489 = vst.msk [vmem:[%s226 + $0xc8] sm:$0xff] %vm2463, %v1746
      %2490 = vst.msk [vmem:[%s226 + $0xd0] sm:$0xff] %vm2463, %v1748
      %2491 = vst.msk [vmem:[%s226 + $0xd8] sm:$0xff] %vm2463, %v1750
      %2492 = vst.msk [vmem:[%s226 + $0xe0] sm:$0xff] %vm2463, %v1752
      %2493 = vst.msk [vmem:[%s226 + $0xe8] sm:$0xff] %vm2463, %v1754
      %2494 = vst.msk [vmem:[%s226 + $0xf0] sm:$0xff] %vm2463, %v1756
      %2495 = vst.msk [vmem:[%s226 + $0xf8] sm:$0xff] %vm2463, %v1758
      %2496 = vst.msk [vmem:[%s226 + $0x100] sm:$0xff] %vm2463, %v1760
      %2497 = vst.msk [vmem:[%s226 + $0x108] sm:$0xff] %vm2463, %v1762
      %2498 = vst.msk [vmem:[%s226 + $0x110] sm:$0xff] %vm2463, %v1764
      %2499 = vst.msk [vmem:[%s226 + $0x118] sm:$0xff] %vm2463, %v1766
      %2500 = vst.msk [vmem:[%s226 + $0x120] sm:$0xff] %vm2463, %v1768
      %2501 = vst.msk [vmem:[%s226 + $0x128] sm:$0xff] %vm2463, %v1770
      %2502 = vst.msk [vmem:[%s226 + $0x130] sm:$0xff] %vm2463, %v1772
      %2503 = vst.msk [vmem:[%s226 + $0x138] sm:$0xff] %vm2463, %v1774
      %2504 = vst.msk [vmem:[%s226 + $0x140] sm:$0xff] %vm2463, %v1776
      %2505 = vst.msk [vmem:[%s226 + $0x148] sm:$0xff] %vm2463, %v1778
      %2506 = vst.msk [vmem:[%s226 + $0x150] sm:$0xff] %vm2463, %v1780
      %2507 = vst.msk [vmem:[%s226 + $0x158] sm:$0xff] %vm2463, %v1782
      %2508 = vst.msk [vmem:[%s226 + $0x160] sm:$0xff] %vm2463, %v1784
      %2509 = vst.msk [vmem:[%s226 + $0x168] sm:$0xff] %vm2463, %v1786
      %2510 = vst.msk [vmem:[%s226 + $0x170] sm:$0xff] %vm2463, %v1788
      %2511 = vst.msk [vmem:[%s226 + $0x178] sm:$0xff] %vm2463, %v1790
      %2512 = vst.msk [vmem:[%s226 + $0x180] sm:$0xff] %vm2463, %v1792
      %2513 = vst.msk [vmem:[%s226 + $0x188] sm:$0xff] %vm2463, %v1794
      %2514 = vst.msk [vmem:[%s226 + $0x190] sm:$0xff] %vm2463, %v1796
      %2515 = vst.msk [vmem:[%s226 + $0x198] sm:$0xff] %vm2463, %v1798
      %2516 = vst.msk [vmem:[%s226 + $0x1a0] sm:$0xff] %vm2463, %v1800
      %2517 = vst.msk [vmem:[%s226 + $0x1a8] sm:$0xff] %vm2463, %v1802
      %2518 = vst.msk [vmem:[%s226 + $0x1b0] sm:$0xff] %vm2463, %v1804
      %2519 = vst.msk [vmem:[%s226 + $0x1b8] sm:$0xff] %vm2463, %v1806
      %2520 = vst.msk [vmem:[%s226 + $0x1c0] sm:$0xff] %vm2463, %v1808
      %2521 = vst.msk [vmem:[%s226 + $0x1c8] sm:$0xff] %vm2463, %v1810
      %2522 = vst.msk [vmem:[%s226 + $0x1d0] sm:$0xff] %vm2463, %v1812
      %2523 = vst.msk [vmem:[%s226 + $0x1d8] sm:$0xff] %vm2463, %v1814
      %2524 = vst.msk [vmem:[%s226 + $0x1e0] sm:$0xff] %vm2463, %v1816
      %2525 = vst.msk [vmem:[%s226 + $0x1e8] sm:$0xff] %vm2463, %v1818
      %2526 = vst.msk [vmem:[%s226 + $0x1f0] sm:$0xff] %vm2463, %v1820
      %2527 = vst.msk [vmem:[%s226 + $0x1f8] sm:$0xff] %vm2463, %v1822
      %2528 = vst.msk [vmem:[%s226 + $0x200] sm:$0xff] %vm2463, %v1824
      %2529 = vst.msk [vmem:[%s226 + $0x208] sm:$0xff] %vm2463, %v1826
      %2530 = vst.msk [vmem:[%s226 + $0x210] sm:$0xff] %vm2463, %v1828
      %2531 = vst.msk [vmem:[%s226 + $0x218] sm:$0xff] %vm2463, %v1830
      %2532 = vst.msk [vmem:[%s226 + $0x220] sm:$0xff] %vm2463, %v1832
      %2533 = vst.msk [vmem:[%s226 + $0x228] sm:$0xff] %vm2463, %v1834
      %2534 = vst.msk [vmem:[%s226 + $0x230] sm:$0xff] %vm2463, %v1836
      %2535 = vst.msk [vmem:[%s226 + $0x238] sm:$0xff] %vm2463, %v1838
      %2536 = vst.msk [vmem:[%s226 + $0x240] sm:$0xff] %vm2463, %v1840
      %2537 = vst.msk [vmem:[%s226 + $0x248] sm:$0xff] %vm2463, %v1842
      %2538 = vst.msk [vmem:[%s226 + $0x250] sm:$0xff] %vm2463, %v1844
      %2539 = vst.msk [vmem:[%s226 + $0x258] sm:$0xff] %vm2463, %v1846
      %2540 = vst.msk [vmem:[%s226 + $0x260] sm:$0xff] %vm2463, %v1848
      %2541 = vst.msk [vmem:[%s226 + $0x268] sm:$0xff] %vm2463, %v1850
      %2542 = vst.msk [vmem:[%s226 + $0x270] sm:$0xff] %vm2463, %v1852
      %2543 = vst.msk [vmem:[%s226 + $0x278] sm:$0xff] %vm2463, %v1854
      %2544 = vst.msk [vmem:[%s226 + $0x280] sm:$0xff] %vm2463, %v1856
      %2545 = vst.msk [vmem:[%s226 + $0x288] sm:$0xff] %vm2463, %v1858
      %2546 = vst.msk [vmem:[%s226 + $0x290] sm:$0xff] %vm2463, %v1860
      %2547 = vst.msk [vmem:[%s226 + $0x298] sm:$0xff] %vm2463, %v1862
      %2548 = vst.msk [vmem:[%s226 + $0x2a0] sm:$0xff] %vm2463, %v1864
      %2549 = vst.msk [vmem:[%s226 + $0x2a8] sm:$0xff] %vm2463, %v1866
      %2550 = vst.msk [vmem:[%s226 + $0x2b0] sm:$0xff] %vm2463, %v1868
      %2551 = vst.msk [vmem:[%s226 + $0x2b8] sm:$0xff] %vm2463, %v1870
      %2552 = vst.msk [vmem:[%s226 + $0x2c0] sm:$0xff] %vm2463, %v1872
      %2553 = vst.msk [vmem:[%s226 + $0x2c8] sm:$0xff] %vm2463, %v1874
      %2554 = vst.msk [vmem:[%s226 + $0x2d0] sm:$0xff] %vm2463, %v1876
      %2555 = vst.msk [vmem:[%s226 + $0x2d8] sm:$0xff] %vm2463, %v1878
      %2556 = vst.msk [vmem:[%s226 + $0x2e0] sm:$0xff] %vm2463, %v1880
      %2557 = vst.msk [vmem:[%s226 + $0x2e8] sm:$0xff] %vm2463, %v1882
      %2558 = vst.msk [vmem:[%s226 + $0x2f0] sm:$0xff] %vm2463, %v1884
      %2559 = vst.msk [vmem:[%s226 + $0x2f8] sm:$0xff] %vm2463, %v1886
      %2560 = vst.msk [vmem:[%s226 + $0x300] sm:$0xff] %vm2463, %v1888
      %2561 = vst.msk [vmem:[%s226 + $0x308] sm:$0xff] %vm2463, %v1890
      %2562 = vst.msk [vmem:[%s226 + $0x310] sm:$0xff] %vm2463, %v1892
      %2563 = vst.msk [vmem:[%s226 + $0x318] sm:$0xff] %vm2463, %v1894
      %2564 = vst.msk [vmem:[%s226 + $0x320] sm:$0xff] %vm2463, %v1896
      %2565 = vst.msk [vmem:[%s226 + $0x328] sm:$0xff] %vm2463, %v1898
      %2566 = vst.msk [vmem:[%s226 + $0x330] sm:$0xff] %vm2463, %v1900
      %2567 = vst.msk [vmem:[%s226 + $0x338] sm:$0xff] %vm2463, %v1902
      %2568 = vst.msk [vmem:[%s226 + $0x340] sm:$0xff] %vm2463, %v1904
      %2569 = vst.msk [vmem:[%s226 + $0x348] sm:$0xff] %vm2463, %v1906
      %2570 = vst.msk [vmem:[%s226 + $0x350] sm:$0xff] %vm2463, %v1908
      %2571 = vst.msk [vmem:[%s226 + $0x358] sm:$0xff] %vm2463, %v1910
      %2572 = vst.msk [vmem:[%s226 + $0x360] sm:$0xff] %vm2463, %v1912
      %2573 = vst.msk [vmem:[%s226 + $0x368] sm:$0xff] %vm2463, %v1914
      %2574 = vst.msk [vmem:[%s226 + $0x370] sm:$0xff] %vm2463, %v1916
      %2575 = vst.msk [vmem:[%s226 + $0x378] sm:$0xff] %vm2463, %v1918
      %2576 = vst.msk [vmem:[%s226 + $0x380] sm:$0xff] %vm2463, %v1920
      %2577 = vst.msk [vmem:[%s226 + $0x388] sm:$0xff] %vm2463, %v1922
      %2578 = vst.msk [vmem:[%s226 + $0x390] sm:$0xff] %vm2463, %v1924
      %2579 = vst.msk [vmem:[%s226 + $0x398] sm:$0xff] %vm2463, %v1926
      %2580 = vst.msk [vmem:[%s226 + $0x3a0] sm:$0xff] %vm2463, %v1928
      %2581 = vst.msk [vmem:[%s226 + $0x3a8] sm:$0xff] %vm2463, %v1930
      %2582 = vst.msk [vmem:[%s226 + $0x3b0] sm:$0xff] %vm2463, %v1932
      %2583 = vst.msk [vmem:[%s226 + $0x3b8] sm:$0xff] %vm2463, %v1934
      %2584 = vst.msk [vmem:[%s226 + $0x3c0] sm:$0xff] %vm2463, %v1936
      %2585 = vst.msk [vmem:[%s226 + $0x3c8] sm:$0xff] %vm2463, %v1938
      %2586 = vst.msk [vmem:[%s226 + $0x3d0] sm:$0xff] %vm2463, %v1940
      %2587 = vst.msk [vmem:[%s226 + $0x3d8] sm:$0xff] %vm2463, %v1942
      %2588 = vst.msk [vmem:[%s226 + $0x3e0] sm:$0xff] %vm2463, %v1944
      %2589 = vst.msk [vmem:[%s226 + $0x3e8] sm:$0xff] %vm2463, %v1946
      %2590 = vst.msk [vmem:[%s226 + $0x3f0] sm:$0xff] %vm2463, %v1948
      %2591 = vst.msk [vmem:[%s226 + $0x3f8] sm:$0xff] %vm2463, %v1950
      %2592 = vst.msk [vmem:[%s226 + $0x400] sm:$0xff] %vm2463, %v1952
      %2593 = vst.msk [vmem:[%s226 + $0x408] sm:$0xff] %vm2463, %v1954
      %2594 = vst.msk [vmem:[%s226 + $0x410] sm:$0xff] %vm2463, %v1956
      %2595 = vst.msk [vmem:[%s226 + $0x418] sm:$0xff] %vm2463, %v1958
      %2596 = vst.msk [vmem:[%s226 + $0x420] sm:$0xff] %vm2463, %v1960
      %2597 = vst.msk [vmem:[%s226 + $0x428] sm:$0xff] %vm2463, %v1962
      %2598 = vst.msk [vmem:[%s226 + $0x430] sm:$0xff] %vm2463, %v1964
      %2599 = vst.msk [vmem:[%s226 + $0x438] sm:$0xff] %vm2463, %v1966
      %2600 = vst.msk [vmem:[%s226 + $0x440] sm:$0xff] %vm2463, %v1968
      %2601 = vst.msk [vmem:[%s226 + $0x448] sm:$0xff] %vm2463, %v1970
      %2602 = vst.msk [vmem:[%s226 + $0x450] sm:$0xff] %vm2463, %v1972
      %2603 = vst.msk [vmem:[%s226 + $0x458] sm:$0xff] %vm2463, %v1974
      %2604 = vst.msk [vmem:[%s226 + $0x460] sm:$0xff] %vm2463, %v1976
      %2605 = vst.msk [vmem:[%s226 + $0x468] sm:$0xff] %vm2463, %v1978
      %2606 = vst.msk [vmem:[%s226 + $0x470] sm:$0xff] %vm2463, %v1980
      %2607 = vst.msk [vmem:[%s226 + $0x478] sm:$0xff] %vm2463, %v1982
      %2608 = vst.msk [vmem:[%s226 + $0x480] sm:$0xff] %vm2463, %v1984
      %2609 = vst.msk [vmem:[%s226 + $0x488] sm:$0xff] %vm2463, %v1986
      %2610 = vst.msk [vmem:[%s226 + $0x490] sm:$0xff] %vm2463, %v1988
      %2611 = vst.msk [vmem:[%s226 + $0x498] sm:$0xff] %vm2463, %v1990
      %2612 = vst.msk [vmem:[%s226 + $0x4a0] sm:$0xff] %vm2463, %v1992
      %2613 = vst.msk [vmem:[%s226 + $0x4a8] sm:$0xff] %vm2463, %v1994
      %2614 = vst.msk [vmem:[%s226 + $0x4b0] sm:$0xff] %vm2463, %v1996
      %2615 = vst.msk [vmem:[%s226 + $0x4b8] sm:$0xff] %vm2463, %v1998
      %2616 = vst.msk [vmem:[%s226 + $0x4c0] sm:$0xff] %vm2463, %v2000
      %2617 = vst.msk [vmem:[%s226 + $0x4c8] sm:$0xff] %vm2463, %v2002
      %2618 = vst.msk [vmem:[%s226 + $0x4d0] sm:$0xff] %vm2463, %v2004
      %2619 = vst.msk [vmem:[%s226 + $0x4d8] sm:$0xff] %vm2463, %v2006
      %2620 = vst.msk [vmem:[%s226 + $0x4e0] sm:$0xff] %vm2463, %v2008
      %2621 = vst.msk [vmem:[%s226 + $0x4e8] sm:$0xff] %vm2463, %v2010
      %2622 = vst.msk [vmem:[%s226 + $0x4f0] sm:$0xff] %vm2463, %v2012
      %2623 = vst.msk [vmem:[%s226 + $0x4f8] sm:$0xff] %vm2463, %v2014
      %2624 = vst.msk [vmem:[%s226 + $0x500] sm:$0xff] %vm2463, %v2016
      %2625 = vst.msk [vmem:[%s226 + $0x508] sm:$0xff] %vm2463, %v2018
      %2626 = vst.msk [vmem:[%s226 + $0x510] sm:$0xff] %vm2463, %v2020
      %2627 = vst.msk [vmem:[%s226 + $0x518] sm:$0xff] %vm2463, %v2022
      %2628 = vst.msk [vmem:[%s226 + $0x520] sm:$0xff] %vm2463, %v2024
      %2629 = vst.msk [vmem:[%s226 + $0x528] sm:$0xff] %vm2463, %v2026
      %2630 = vst.msk [vmem:[%s226 + $0x530] sm:$0xff] %vm2463, %v2028
      %2631 = vst.msk [vmem:[%s226 + $0x538] sm:$0xff] %vm2463, %v2030
      %2632 = vst.msk [vmem:[%s226 + $0x540] sm:$0xff] %vm2463, %v2032
      %2633 = vst.msk [vmem:[%s226 + $0x548] sm:$0xff] %vm2463, %v2034
      %2634 = vst.msk [vmem:[%s226 + $0x550] sm:$0xff] %vm2463, %v2036
      %2635 = vst.msk [vmem:[%s226 + $0x558] sm:$0xff] %vm2463, %v2038
      %2636 = vst.msk [vmem:[%s226 + $0x560] sm:$0xff] %vm2463, %v2040
      %2637 = vst.msk [vmem:[%s226 + $0x568] sm:$0xff] %vm2463, %v2042
      %2638 = vst.msk [vmem:[%s226 + $0x570] sm:$0xff] %vm2463, %v2044
      %2639 = vst.msk [vmem:[%s226 + $0x578] sm:$0xff] %vm2463, %v2046
      %2640 = vst.msk [vmem:[%s226 + $0x580] sm:$0xff] %vm2463, %v2048
      %2641 = vst.msk [vmem:[%s226 + $0x588] sm:$0xff] %vm2463, %v2050
      %2642 = vst.msk [vmem:[%s226 + $0x590] sm:$0xff] %vm2463, %v2052
      %2643 = vst.msk [vmem:[%s226 + $0x598] sm:$0xff] %vm2463, %v2054
      %2644 = vst.msk [vmem:[%s226 + $0x5a0] sm:$0xff] %vm2463, %v2056
      %2645 = vst.msk [vmem:[%s226 + $0x5a8] sm:$0xff] %vm2463, %v2058
      %2646 = vst.msk [vmem:[%s226 + $0x5b0] sm:$0xff] %vm2463, %v2060
      %2647 = vst.msk [vmem:[%s226 + $0x5b8] sm:$0xff] %vm2463, %v2062
      %2648 = vst.msk [vmem:[%s226 + $0x5c0] sm:$0xff] %vm2463, %v2064
      %2649 = vst.msk [vmem:[%s226 + $0x5c8] sm:$0xff] %vm2463, %v2066
      %2650 = vst.msk [vmem:[%s226 + $0x5d0] sm:$0xff] %vm2463, %v2068
      %2651 = vst.msk [vmem:[%s226 + $0x5d8] sm:$0xff] %vm2463, %v2070
      %2652 = vst.msk [vmem:[%s226 + $0x5e0] sm:$0xff] %vm2463, %v2072
      %2653 = vst.msk [vmem:[%s226 + $0x5e8] sm:$0xff] %vm2463, %v2074
      %2654 = vst.msk [vmem:[%s226 + $0x5f0] sm:$0xff] %vm2463, %v2076
      %2655 = vst.msk [vmem:[%s226 + $0x5f8] sm:$0xff] %vm2463, %v2078
      %2656 = vst.msk [vmem:[%s226 + $0x600] sm:$0xff] %vm2463, %v2080
      %2657 = vst.msk [vmem:[%s226 + $0x608] sm:$0xff] %vm2463, %v2082
      %2658 = vst.msk [vmem:[%s226 + $0x610] sm:$0xff] %vm2463, %v2084
      %2659 = vst.msk [vmem:[%s226 + $0x618] sm:$0xff] %vm2463, %v2086
      %2660 = vst.msk [vmem:[%s226 + $0x620] sm:$0xff] %vm2463, %v2088
      %2661 = vst.msk [vmem:[%s226 + $0x628] sm:$0xff] %vm2463, %v2090
      %2662 = vst.msk [vmem:[%s226 + $0x630] sm:$0xff] %vm2463, %v2092
      %2663 = vst.msk [vmem:[%s226 + $0x638] sm:$0xff] %vm2463, %v2094
      %2664 = vst.msk [vmem:[%s226 + $0x640] sm:$0xff] %vm2463, %v2096
      %2665 = vst.msk [vmem:[%s226 + $0x648] sm:$0xff] %vm2463, %v2098
      %2666 = vst.msk [vmem:[%s226 + $0x650] sm:$0xff] %vm2463, %v2100
      %2667 = vst.msk [vmem:[%s226 + $0x658] sm:$0xff] %vm2463, %v2102
      %2668 = vst.msk [vmem:[%s226 + $0x660] sm:$0xff] %vm2463, %v2104
      %2669 = vst.msk [vmem:[%s226 + $0x668] sm:$0xff] %vm2463, %v2106
      %2670 = vst.msk [vmem:[%s226 + $0x670] sm:$0xff] %vm2463, %v2108
      %2671 = vst.msk [vmem:[%s226 + $0x678] sm:$0xff] %vm2463, %v2110
      %2672 = vst.msk [vmem:[%s226 + $0x680] sm:$0xff] %vm2463, %v2112
      %2673 = vst.msk [vmem:[%s226 + $0x688] sm:$0xff] %vm2463, %v2114
      %2674 = vst.msk [vmem:[%s226 + $0x690] sm:$0xff] %vm2463, %v2116
      %2675 = vst.msk [vmem:[%s226 + $0x698] sm:$0xff] %vm2463, %v2118
      %2676 = vst.msk [vmem:[%s226 + $0x6a0] sm:$0xff] %vm2463, %v2120
      %2677 = vst.msk [vmem:[%s226 + $0x6a8] sm:$0xff] %vm2463, %v2122
      %2678 = vst.msk [vmem:[%s226 + $0x6b0] sm:$0xff] %vm2463, %v2124
      %2679 = vst.msk [vmem:[%s226 + $0x6b8] sm:$0xff] %vm2463, %v2126
      %2680 = vst.msk [vmem:[%s226 + $0x6c0] sm:$0xff] %vm2463, %v2128
      %2681 = vst.msk [vmem:[%s226 + $0x6c8] sm:$0xff] %vm2463, %v2130
      %2682 = vst.msk [vmem:[%s226 + $0x6d0] sm:$0xff] %vm2463, %v2132
      %2683 = vst.msk [vmem:[%s226 + $0x6d8] sm:$0xff] %vm2463, %v2134
      %2684 = vst.msk [vmem:[%s226 + $0x6e0] sm:$0xff] %vm2463, %v2136
      %2685 = vst.msk [vmem:[%s226 + $0x6e8] sm:$0xff] %vm2463, %v2138
      %2686 = vst.msk [vmem:[%s226 + $0x6f0] sm:$0xff] %vm2463, %v2140
      %2687 = vst.msk [vmem:[%s226 + $0x6f8] sm:$0xff] %vm2463, %v2142
      %2688 = vst.msk [vmem:[%s226 + $0x700] sm:$0xff] %vm2463, %v2144
      %2689 = vst.msk [vmem:[%s226 + $0x708] sm:$0xff] %vm2463, %v2146
      %2690 = vst.msk [vmem:[%s226 + $0x710] sm:$0xff] %vm2463, %v2148
      %2691 = vst.msk [vmem:[%s226 + $0x718] sm:$0xff] %vm2463, %v2150
      %2692 = vst.msk [vmem:[%s226 + $0x720] sm:$0xff] %vm2463, %v2152
      %2693 = vst.msk [vmem:[%s226 + $0x728] sm:$0xff] %vm2463, %v2154
      %2694 = vst.msk [vmem:[%s226 + $0x730] sm:$0xff] %vm2463, %v2156
      %2695 = vst.msk [vmem:[%s226 + $0x738] sm:$0xff] %vm2463, %v2158
      %2696 = vst.msk [vmem:[%s226 + $0x740] sm:$0xff] %vm2463, %v2160
      %2697 = vst.msk [vmem:[%s226 + $0x748] sm:$0xff] %vm2463, %v2162
      %2698 = vst.msk [vmem:[%s226 + $0x750] sm:$0xff] %vm2463, %v2164
      %2699 = vst.msk [vmem:[%s226 + $0x758] sm:$0xff] %vm2463, %v2166
      %2700 = vst.msk [vmem:[%s226 + $0x760] sm:$0xff] %vm2463, %v2168
      %2701 = vst.msk [vmem:[%s226 + $0x768] sm:$0xff] %vm2463, %v2170
      %2702 = vst.msk [vmem:[%s226 + $0x770] sm:$0xff] %vm2463, %v2172
      %2703 = vst.msk [vmem:[%s226 + $0x778] sm:$0xff] %vm2463, %v2174
      %2704 = vst.msk [vmem:[%s226 + $0x780] sm:$0xff] %vm2463, %v2176
      %2705 = vst.msk [vmem:[%s226 + $0x788] sm:$0xff] %vm2463, %v2178
      %2706 = vst.msk [vmem:[%s226 + $0x790] sm:$0xff] %vm2463, %v2180
      %2707 = vst.msk [vmem:[%s226 + $0x798] sm:$0xff] %vm2463, %v2182
      %2708 = vst.msk [vmem:[%s226 + $0x7a0] sm:$0xff] %vm2463, %v2184
      %2709 = vst.msk [vmem:[%s226 + $0x7a8] sm:$0xff] %vm2463, %v2186
      %2710 = vst.msk [vmem:[%s226 + $0x7b0] sm:$0xff] %vm2463, %v2188
      %2711 = vst.msk [vmem:[%s226 + $0x7b8] sm:$0xff] %vm2463, %v2190
      %2712 = vst.msk [vmem:[%s226 + $0x7c0] sm:$0xff] %vm2463, %v2192
      %2713 = vst.msk [vmem:[%s226 + $0x7c8] sm:$0xff] %vm2463, %v2194
      %2714 = vst.msk [vmem:[%s226 + $0x7d0] sm:$0xff] %vm2463, %v2196
      %2715 = vst.msk [vmem:[%s226 + $0x7d8] sm:$0xff] %vm2463, %v2198
      %2716 = vst.msk [vmem:[%s226 + $0x7e0] sm:$0xff] %vm2463, %v2200
      %2717 = vst.msk [vmem:[%s226 + $0x7e8] sm:$0xff] %vm2463, %v2202
      %2718 = vst.msk [vmem:[%s226 + $0x7f0] sm:$0xff] %vm2463, %v2204
      %2719 = vst.msk [vmem:[%s226 + $0x7f8] sm:$0xff] %vm2463, %v2206
      %v2720 = vld [vmem:[#allocation2] sm:$0xff]
      %v2721 = vld [vmem:[#allocation2 + $0x8] sm:$0xff]
      %v2722 = vld [vmem:[#allocation2 + $0x10] sm:$0xff]
      %v2723 = vld [vmem:[#allocation2 + $0x18] sm:$0xff]
      %v2724 = vld [vmem:[#allocation2 + $0x20] sm:$0xff]
      %v2725 = vld [vmem:[#allocation2 + $0x28] sm:$0xff]
      %v2726 = vld [vmem:[#allocation2 + $0x30] sm:$0xff]
      %v2727 = vld [vmem:[#allocation2 + $0x38] sm:$0xff]
      %v2728 = vld [vmem:[#allocation2 + $0x40] sm:$0xff]
      %v2729 = vld [vmem:[#allocation2 + $0x48] sm:$0xff]
      %v2730 = vld [vmem:[#allocation2 + $0x50] sm:$0xff]
      %v2731 = vld [vmem:[#allocation2 + $0x58] sm:$0xff]
      %v2732 = vld [vmem:[#allocation2 + $0x60] sm:$0xff]
      %v2733 = vld [vmem:[#allocation2 + $0x68] sm:$0xff]
      %v2734 = vld [vmem:[#allocation2 + $0x70] sm:$0xff]
      %v2735 = vld [vmem:[#allocation2 + $0x78] sm:$0xff]
      %v2736 = vld [vmem:[#allocation2 + $0x80] sm:$0xff]
      %v2737 = vld [vmem:[#allocation2 + $0x88] sm:$0xff]
      %v2738 = vld [vmem:[#allocation2 + $0x90] sm:$0xff]
      %v2739 = vld [vmem:[#allocation2 + $0x98] sm:$0xff]
      %v2740 = vld [vmem:[#allocation2 + $0xa0] sm:$0xff]
      %v2741 = vld [vmem:[#allocation2 + $0xa8] sm:$0xff]
      %v2742 = vld [vmem:[#allocation2 + $0xb0] sm:$0xff]
      %v2743 = vld [vmem:[#allocation2 + $0xb8] sm:$0xff]
      %v2744 = vld [vmem:[#allocation2 + $0xc0] sm:$0xff]
      %v2745 = vld [vmem:[#allocation2 + $0xc8] sm:$0xff]
      %v2746 = vld [vmem:[#allocation2 + $0xd0] sm:$0xff]
      %v2747 = vld [vmem:[#allocation2 + $0xd8] sm:$0xff]
      %v2748 = vld [vmem:[#allocation2 + $0xe0] sm:$0xff]
      %v2749 = vld [vmem:[#allocation2 + $0xe8] sm:$0xff]
      %v2750 = vld [vmem:[#allocation2 + $0xf0] sm:$0xff]
      %v2751 = vld [vmem:[#allocation2 + $0xf8] sm:$0xff]
      %v2752 = vld [vmem:[#allocation2 + $0x100] sm:$0xff]
      %v2753 = vld [vmem:[#allocation2 + $0x108] sm:$0xff]
      %v2754 = vld [vmem:[#allocation2 + $0x110] sm:$0xff]
      %v2755 = vld [vmem:[#allocation2 + $0x118] sm:$0xff]
      %v2756 = vld [vmem:[#allocation2 + $0x120] sm:$0xff]
      %v2757 = vld [vmem:[#allocation2 + $0x128] sm:$0xff]
      %v2758 = vld [vmem:[#allocation2 + $0x130] sm:$0xff]
      %v2759 = vld [vmem:[#allocation2 + $0x138] sm:$0xff]
      %v2760 = vld [vmem:[#allocation2 + $0x140] sm:$0xff]
      %v2761 = vld [vmem:[#allocation2 + $0x148] sm:$0xff]
      %v2762 = vld [vmem:[#allocation2 + $0x150] sm:$0xff]
      %v2763 = vld [vmem:[#allocation2 + $0x158] sm:$0xff]
      %v2764 = vld [vmem:[#allocation2 + $0x160] sm:$0xff]
      %v2765 = vld [vmem:[#allocation2 + $0x168] sm:$0xff]
      %v2766 = vld [vmem:[#allocation2 + $0x170] sm:$0xff]
      %v2767 = vld [vmem:[#allocation2 + $0x178] sm:$0xff]
      %v2768 = vld [vmem:[#allocation2 + $0x180] sm:$0xff]
      %v2769 = vld [vmem:[#allocation2 + $0x188] sm:$0xff]
      %v2770 = vld [vmem:[#allocation2 + $0x190] sm:$0xff]
      %v2771 = vld [vmem:[#allocation2 + $0x198] sm:$0xff]
      %v2772 = vld [vmem:[#allocation2 + $0x1a0] sm:$0xff]
      %v2773 = vld [vmem:[#allocation2 + $0x1a8] sm:$0xff]
      %v2774 = vld [vmem:[#allocation2 + $0x1b0] sm:$0xff]
      %v2775 = vld [vmem:[#allocation2 + $0x1b8] sm:$0xff]
      %v2776 = vld [vmem:[#allocation2 + $0x1c0] sm:$0xff]
      %v2777 = vld [vmem:[#allocation2 + $0x1c8] sm:$0xff]
      %v2778 = vld [vmem:[#allocation2 + $0x1d0] sm:$0xff]
      %v2779 = vld [vmem:[#allocation2 + $0x1d8] sm:$0xff]
      %v2780 = vld [vmem:[#allocation2 + $0x1e0] sm:$0xff]
      %v2781 = vld [vmem:[#allocation2 + $0x1e8] sm:$0xff]
      %v2782 = vld [vmem:[#allocation2 + $0x1f0] sm:$0xff]
      %v2783 = vld [vmem:[#allocation2 + $0x1f8] sm:$0xff]
      %2848 = vrot.lane.b32.xlu0 %v2720, 16
      %v2849 = vpop.permute.xlu0 %2848
      %2850 = vrot.lane.b32.xlu0 %v2721, 16
      %v2851 = vpop.permute.xlu0 %2850
      %2852 = vrot.lane.b32.xlu0 %v2722, 16
      %v2853 = vpop.permute.xlu0 %2852
      %2854 = vrot.lane.b32.xlu0 %v2723, 16
      %v2855 = vpop.permute.xlu0 %2854
      %2856 = vrot.lane.b32.xlu0 %v2724, 16
      %v2857 = vpop.permute.xlu0 %2856
      %2858 = vrot.lane.b32.xlu0 %v2725, 16
      %v2859 = vpop.permute.xlu0 %2858
      %2860 = vrot.lane.b32.xlu0 %v2726, 16
      %v2861 = vpop.permute.xlu0 %2860
      %2862 = vrot.lane.b32.xlu0 %v2727, 16
      %v2863 = vpop.permute.xlu0 %2862
      %2864 = vrot.lane.b32.xlu0 %v2728, 16
      %v2865 = vpop.permute.xlu0 %2864
      %2866 = vrot.lane.b32.xlu0 %v2729, 16
      %v2867 = vpop.permute.xlu0 %2866
      %2868 = vrot.lane.b32.xlu0 %v2730, 16
      %v2869 = vpop.permute.xlu0 %2868
      %2870 = vrot.lane.b32.xlu0 %v2731, 16
      %v2871 = vpop.permute.xlu0 %2870
      %2872 = vrot.lane.b32.xlu0 %v2732, 16
      %v2873 = vpop.permute.xlu0 %2872
      %2874 = vrot.lane.b32.xlu0 %v2733, 16
      %v2875 = vpop.permute.xlu0 %2874
      %2876 = vrot.lane.b32.xlu0 %v2734, 16
      %v2877 = vpop.permute.xlu0 %2876
      %2878 = vrot.lane.b32.xlu0 %v2735, 16
      %v2879 = vpop.permute.xlu0 %2878
      %2880 = vrot.lane.b32.xlu0 %v2736, 16
      %v2881 = vpop.permute.xlu0 %2880
      %2882 = vrot.lane.b32.xlu0 %v2737, 16
      %v2883 = vpop.permute.xlu0 %2882
      %2884 = vrot.lane.b32.xlu0 %v2738, 16
      %v2885 = vpop.permute.xlu0 %2884
      %2886 = vrot.lane.b32.xlu0 %v2739, 16
      %v2887 = vpop.permute.xlu0 %2886
      %2888 = vrot.lane.b32.xlu0 %v2740, 16
      %v2889 = vpop.permute.xlu0 %2888
      %2890 = vrot.lane.b32.xlu0 %v2741, 16
      %v2891 = vpop.permute.xlu0 %2890
      %2892 = vrot.lane.b32.xlu0 %v2742, 16
      %v2893 = vpop.permute.xlu0 %2892
      %2894 = vrot.lane.b32.xlu0 %v2743, 16
      %v2895 = vpop.permute.xlu0 %2894
      %2896 = vrot.lane.b32.xlu0 %v2744, 16
      %v2897 = vpop.permute.xlu0 %2896
      %2898 = vrot.lane.b32.xlu0 %v2745, 16
      %v2899 = vpop.permute.xlu0 %2898
      %2900 = vrot.lane.b32.xlu0 %v2746, 16
      %v2901 = vpop.permute.xlu0 %2900
      %2902 = vrot.lane.b32.xlu0 %v2747, 16
      %v2903 = vpop.permute.xlu0 %2902
      %2904 = vrot.lane.b32.xlu0 %v2748, 16
      %v2905 = vpop.permute.xlu0 %2904
      %2906 = vrot.lane.b32.xlu0 %v2749, 16
      %v2907 = vpop.permute.xlu0 %2906
      %2908 = vrot.lane.b32.xlu0 %v2750, 16
      %v2909 = vpop.permute.xlu0 %2908
      %2910 = vrot.lane.b32.xlu0 %v2751, 16
      %v2911 = vpop.permute.xlu0 %2910
      %2912 = vrot.lane.b32.xlu0 %v2752, 16
      %v2913 = vpop.permute.xlu0 %2912
      %2914 = vrot.lane.b32.xlu0 %v2753, 16
      %v2915 = vpop.permute.xlu0 %2914
      %2916 = vrot.lane.b32.xlu0 %v2754, 16
      %v2917 = vpop.permute.xlu0 %2916
      %2918 = vrot.lane.b32.xlu0 %v2755, 16
      %v2919 = vpop.permute.xlu0 %2918
      %2920 = vrot.lane.b32.xlu0 %v2756, 16
      %v2921 = vpop.permute.xlu0 %2920
      %2922 = vrot.lane.b32.xlu0 %v2757, 16
      %v2923 = vpop.permute.xlu0 %2922
      %2924 = vrot.lane.b32.xlu0 %v2758, 16
      %v2925 = vpop.permute.xlu0 %2924
      %2926 = vrot.lane.b32.xlu0 %v2759, 16
      %v2927 = vpop.permute.xlu0 %2926
      %2928 = vrot.lane.b32.xlu0 %v2760, 16
      %v2929 = vpop.permute.xlu0 %2928
      %2930 = vrot.lane.b32.xlu0 %v2761, 16
      %v2931 = vpop.permute.xlu0 %2930
      %2932 = vrot.lane.b32.xlu0 %v2762, 16
      %v2933 = vpop.permute.xlu0 %2932
      %2934 = vrot.lane.b32.xlu0 %v2763, 16
      %v2935 = vpop.permute.xlu0 %2934
      %2936 = vrot.lane.b32.xlu0 %v2764, 16
      %v2937 = vpop.permute.xlu0 %2936
      %2938 = vrot.lane.b32.xlu0 %v2765, 16
      %v2939 = vpop.permute.xlu0 %2938
      %2940 = vrot.lane.b32.xlu0 %v2766, 16
      %v2941 = vpop.permute.xlu0 %2940
      %2942 = vrot.lane.b32.xlu0 %v2767, 16
      %v2943 = vpop.permute.xlu0 %2942
      %2944 = vrot.lane.b32.xlu0 %v2768, 16
      %v2945 = vpop.permute.xlu0 %2944
      %2946 = vrot.lane.b32.xlu0 %v2769, 16
      %v2947 = vpop.permute.xlu0 %2946
      %2948 = vrot.lane.b32.xlu0 %v2770, 16
      %v2949 = vpop.permute.xlu0 %2948
      %2950 = vrot.lane.b32.xlu0 %v2771, 16
      %v2951 = vpop.permute.xlu0 %2950
      %2952 = vrot.lane.b32.xlu0 %v2772, 16
      %v2953 = vpop.permute.xlu0 %2952
      %2954 = vrot.lane.b32.xlu0 %v2773, 16
      %v2955 = vpop.permute.xlu0 %2954
      %2956 = vrot.lane.b32.xlu0 %v2774, 16
      %v2957 = vpop.permute.xlu0 %2956
      %2958 = vrot.lane.b32.xlu0 %v2775, 16
      %v2959 = vpop.permute.xlu0 %2958
      %2960 = vrot.lane.b32.xlu0 %v2776, 16
      %v2961 = vpop.permute.xlu0 %2960
      %2962 = vrot.lane.b32.xlu0 %v2777, 16
      %v2963 = vpop.permute.xlu0 %2962
      %2964 = vrot.lane.b32.xlu0 %v2778, 16
      %v2965 = vpop.permute.xlu0 %2964
      %2966 = vrot.lane.b32.xlu0 %v2779, 16
      %v2967 = vpop.permute.xlu0 %2966
      %2968 = vrot.lane.b32.xlu0 %v2780, 16
      %v2969 = vpop.permute.xlu0 %2968
      %2970 = vrot.lane.b32.xlu0 %v2781, 16
      %v2971 = vpop.permute.xlu0 %2970
      %2972 = vrot.lane.b32.xlu0 %v2782, 16
      %v2973 = vpop.permute.xlu0 %2972
      %2974 = vrot.lane.b32.xlu0 %v2783, 16
      %v2975 = vpop.permute.xlu0 %2974
      %vm3040 = vcmask 261248
      %3041 = vst.msk [vmem:[%s226] sm:$0xff] %vm3040, %v2849
      %3042 = vst.msk [vmem:[%s226 + $0x10] sm:$0xff] %vm3040, %v2851
      %3043 = vst.msk [vmem:[%s226 + $0x20] sm:$0xff] %vm3040, %v2853
      %3044 = vst.msk [vmem:[%s226 + $0x30] sm:$0xff] %vm3040, %v2855
      %3045 = vst.msk [vmem:[%s226 + $0x40] sm:$0xff] %vm3040, %v2857
      %3046 = vst.msk [vmem:[%s226 + $0x50] sm:$0xff] %vm3040, %v2859
      %3047 = vst.msk [vmem:[%s226 + $0x60] sm:$0xff] %vm3040, %v2861
      %3048 = vst.msk [vmem:[%s226 + $0x70] sm:$0xff] %vm3040, %v2863
      %3049 = vst.msk [vmem:[%s226 + $0x100] sm:$0xff] %vm3040, %v2865
      %3050 = vst.msk [vmem:[%s226 + $0x110] sm:$0xff] %vm3040, %v2867
      %3051 = vst.msk [vmem:[%s226 + $0x120] sm:$0xff] %vm3040, %v2869
      %3052 = vst.msk [vmem:[%s226 + $0x130] sm:$0xff] %vm3040, %v2871
      %3053 = vst.msk [vmem:[%s226 + $0x140] sm:$0xff] %vm3040, %v2873
      %3054 = vst.msk [vmem:[%s226 + $0x150] sm:$0xff] %vm3040, %v2875
      %3055 = vst.msk [vmem:[%s226 + $0x160] sm:$0xff] %vm3040, %v2877
      %3056 = vst.msk [vmem:[%s226 + $0x170] sm:$0xff] %vm3040, %v2879
      %3057 = vst.msk [vmem:[%s226 + $0x200] sm:$0xff] %vm3040, %v2881
      %3058 = vst.msk [vmem:[%s226 + $0x210] sm:$0xff] %vm3040, %v2883
      %3059 = vst.msk [vmem:[%s226 + $0x220] sm:$0xff] %vm3040, %v2885
      %3060 = vst.msk [vmem:[%s226 + $0x230] sm:$0xff] %vm3040, %v2887
      %3061 = vst.msk [vmem:[%s226 + $0x240] sm:$0xff] %vm3040, %v2889
      %3062 = vst.msk [vmem:[%s226 + $0x250] sm:$0xff] %vm3040, %v2891
      %3063 = vst.msk [vmem:[%s226 + $0x260] sm:$0xff] %vm3040, %v2893
      %3064 = vst.msk [vmem:[%s226 + $0x270] sm:$0xff] %vm3040, %v2895
      %3065 = vst.msk [vmem:[%s226 + $0x300] sm:$0xff] %vm3040, %v2897
      %3066 = vst.msk [vmem:[%s226 + $0x310] sm:$0xff] %vm3040, %v2899
      %3067 = vst.msk [vmem:[%s226 + $0x320] sm:$0xff] %vm3040, %v2901
      %3068 = vst.msk [vmem:[%s226 + $0x330] sm:$0xff] %vm3040, %v2903
      %3069 = vst.msk [vmem:[%s226 + $0x340] sm:$0xff] %vm3040, %v2905
      %3070 = vst.msk [vmem:[%s226 + $0x350] sm:$0xff] %vm3040, %v2907
      %3071 = vst.msk [vmem:[%s226 + $0x360] sm:$0xff] %vm3040, %v2909
      %3072 = vst.msk [vmem:[%s226 + $0x370] sm:$0xff] %vm3040, %v2911
      %3073 = vst.msk [vmem:[%s226 + $0x400] sm:$0xff] %vm3040, %v2913
      %3074 = vst.msk [vmem:[%s226 + $0x410] sm:$0xff] %vm3040, %v2915
      %3075 = vst.msk [vmem:[%s226 + $0x420] sm:$0xff] %vm3040, %v2917
      %3076 = vst.msk [vmem:[%s226 + $0x430] sm:$0xff] %vm3040, %v2919
      %3077 = vst.msk [vmem:[%s226 + $0x440] sm:$0xff] %vm3040, %v2921
      %3078 = vst.msk [vmem:[%s226 + $0x450] sm:$0xff] %vm3040, %v2923
      %3079 = vst.msk [vmem:[%s226 + $0x460] sm:$0xff] %vm3040, %v2925
      %3080 = vst.msk [vmem:[%s226 + $0x470] sm:$0xff] %vm3040, %v2927
      %3081 = vst.msk [vmem:[%s226 + $0x500] sm:$0xff] %vm3040, %v2929
      %3082 = vst.msk [vmem:[%s226 + $0x510] sm:$0xff] %vm3040, %v2931
      %3083 = vst.msk [vmem:[%s226 + $0x520] sm:$0xff] %vm3040, %v2933
      %3084 = vst.msk [vmem:[%s226 + $0x530] sm:$0xff] %vm3040, %v2935
      %3085 = vst.msk [vmem:[%s226 + $0x540] sm:$0xff] %vm3040, %v2937
      %3086 = vst.msk [vmem:[%s226 + $0x550] sm:$0xff] %vm3040, %v2939
      %3087 = vst.msk [vmem:[%s226 + $0x560] sm:$0xff] %vm3040, %v2941
      %3088 = vst.msk [vmem:[%s226 + $0x570] sm:$0xff] %vm3040, %v2943
      %3089 = vst.msk [vmem:[%s226 + $0x600] sm:$0xff] %vm3040, %v2945
      %3090 = vst.msk [vmem:[%s226 + $0x610] sm:$0xff] %vm3040, %v2947
      %3091 = vst.msk [vmem:[%s226 + $0x620] sm:$0xff] %vm3040, %v2949
      %3092 = vst.msk [vmem:[%s226 + $0x630] sm:$0xff] %vm3040, %v2951
      %3093 = vst.msk [vmem:[%s226 + $0x640] sm:$0xff] %vm3040, %v2953
      %3094 = vst.msk [vmem:[%s226 + $0x650] sm:$0xff] %vm3040, %v2955
      %3095 = vst.msk [vmem:[%s226 + $0x660] sm:$0xff] %vm3040, %v2957
      %3096 = vst.msk [vmem:[%s226 + $0x670] sm:$0xff] %vm3040, %v2959
      %3097 = vst.msk [vmem:[%s226 + $0x700] sm:$0xff] %vm3040, %v2961
      %3098 = vst.msk [vmem:[%s226 + $0x710] sm:$0xff] %vm3040, %v2963
      %3099 = vst.msk [vmem:[%s226 + $0x720] sm:$0xff] %vm3040, %v2965
      %3100 = vst.msk [vmem:[%s226 + $0x730] sm:$0xff] %vm3040, %v2967
      %3101 = vst.msk [vmem:[%s226 + $0x740] sm:$0xff] %vm3040, %v2969
      %3102 = vst.msk [vmem:[%s226 + $0x750] sm:$0xff] %vm3040, %v2971
      %3103 = vst.msk [vmem:[%s226 + $0x760] sm:$0xff] %vm3040, %v2973
      %3104 = vst.msk [vmem:[%s226 + $0x770] sm:$0xff] %vm3040, %v2975
      %v3105 = vld [vmem:[#allocation2] sm:$0xff]
      %v3106 = vld [vmem:[#allocation2 + $0x8] sm:$0xff]
      %v3107 = vld [vmem:[#allocation2 + $0x10] sm:$0xff]
      %v3108 = vld [vmem:[#allocation2 + $0x18] sm:$0xff]
      %v3109 = vld [vmem:[#allocation2 + $0x20] sm:$0xff]
      %v3110 = vld [vmem:[#allocation2 + $0x28] sm:$0xff]
      %v3111 = vld [vmem:[#allocation2 + $0x30] sm:$0xff]
      %v3112 = vld [vmem:[#allocation2 + $0x38] sm:$0xff]
      %v3113 = vld [vmem:[#allocation2 + $0x40] sm:$0xff]
      %v3114 = vld [vmem:[#allocation2 + $0x48] sm:$0xff]
      %v3115 = vld [vmem:[#allocation2 + $0x50] sm:$0xff]
      %v3116 = vld [vmem:[#allocation2 + $0x58] sm:$0xff]
      %v3117 = vld [vmem:[#allocation2 + $0x60] sm:$0xff]
      %v3118 = vld [vmem:[#allocation2 + $0x68] sm:$0xff]
      %v3119 = vld [vmem:[#allocation2 + $0x70] sm:$0xff]
      %v3120 = vld [vmem:[#allocation2 + $0x78] sm:$0xff]
      %v3121 = vld [vmem:[#allocation2 + $0x80] sm:$0xff]
      %v3122 = vld [vmem:[#allocation2 + $0x88] sm:$0xff]
      %v3123 = vld [vmem:[#allocation2 + $0x90] sm:$0xff]
      %v3124 = vld [vmem:[#allocation2 + $0x98] sm:$0xff]
      %v3125 = vld [vmem:[#allocation2 + $0xa0] sm:$0xff]
      %v3126 = vld [vmem:[#allocation2 + $0xa8] sm:$0xff]
      %v3127 = vld [vmem:[#allocation2 + $0xb0] sm:$0xff]
      %v3128 = vld [vmem:[#allocation2 + $0xb8] sm:$0xff]
      %v3129 = vld [vmem:[#allocation2 + $0xc0] sm:$0xff]
      %v3130 = vld [vmem:[#allocation2 + $0xc8] sm:$0xff]
      %v3131 = vld [vmem:[#allocation2 + $0xd0] sm:$0xff]
      %v3132 = vld [vmem:[#allocation2 + $0xd8] sm:$0xff]
      %v3133 = vld [vmem:[#allocation2 + $0xe0] sm:$0xff]
      %v3134 = vld [vmem:[#allocation2 + $0xe8] sm:$0xff]
      %v3135 = vld [vmem:[#allocation2 + $0xf0] sm:$0xff]
      %v3136 = vld [vmem:[#allocation2 + $0xf8] sm:$0xff]
      %v3137 = vld [vmem:[#allocation2 + $0x100] sm:$0xff]
      %v3138 = vld [vmem:[#allocation2 + $0x108] sm:$0xff]
      %v3139 = vld [vmem:[#allocation2 + $0x110] sm:$0xff]
      %v3140 = vld [vmem:[#allocation2 + $0x118] sm:$0xff]
      %v3141 = vld [vmem:[#allocation2 + $0x120] sm:$0xff]
      %v3142 = vld [vmem:[#allocation2 + $0x128] sm:$0xff]
      %v3143 = vld [vmem:[#allocation2 + $0x130] sm:$0xff]
      %v3144 = vld [vmem:[#allocation2 + $0x138] sm:$0xff]
      %v3145 = vld [vmem:[#allocation2 + $0x140] sm:$0xff]
      %v3146 = vld [vmem:[#allocation2 + $0x148] sm:$0xff]
      %v3147 = vld [vmem:[#allocation2 + $0x150] sm:$0xff]
      %v3148 = vld [vmem:[#allocation2 + $0x158] sm:$0xff]
      %v3149 = vld [vmem:[#allocation2 + $0x160] sm:$0xff]
      %v3150 = vld [vmem:[#allocation2 + $0x168] sm:$0xff]
      %v3151 = vld [vmem:[#allocation2 + $0x170] sm:$0xff]
      %v3152 = vld [vmem:[#allocation2 + $0x178] sm:$0xff]
      %v3153 = vld [vmem:[#allocation2 + $0x180] sm:$0xff]
      %v3154 = vld [vmem:[#allocation2 + $0x188] sm:$0xff]
      %v3155 = vld [vmem:[#allocation2 + $0x190] sm:$0xff]
      %v3156 = vld [vmem:[#allocation2 + $0x198] sm:$0xff]
      %v3157 = vld [vmem:[#allocation2 + $0x1a0] sm:$0xff]
      %v3158 = vld [vmem:[#allocation2 + $0x1a8] sm:$0xff]
      %v3159 = vld [vmem:[#allocation2 + $0x1b0] sm:$0xff]
      %v3160 = vld [vmem:[#allocation2 + $0x1b8] sm:$0xff]
      %v3161 = vld [vmem:[#allocation2 + $0x1c0] sm:$0xff]
      %v3162 = vld [vmem:[#allocation2 + $0x1c8] sm:$0xff]
      %v3163 = vld [vmem:[#allocation2 + $0x1d0] sm:$0xff]
      %v3164 = vld [vmem:[#allocation2 + $0x1d8] sm:$0xff]
      %v3165 = vld [vmem:[#allocation2 + $0x1e0] sm:$0xff]
      %v3166 = vld [vmem:[#allocation2 + $0x1e8] sm:$0xff]
      %v3167 = vld [vmem:[#allocation2 + $0x1f0] sm:$0xff]
      %v3168 = vld [vmem:[#allocation2 + $0x1f8] sm:$0xff]
      %3233 = vrot.lane.b32.xlu0 %v3105, 32
      %v3234 = vpop.permute.xlu0 %3233
      %3235 = vrot.lane.b32.xlu0 %v3106, 32
      %v3236 = vpop.permute.xlu0 %3235
      %3237 = vrot.lane.b32.xlu0 %v3107, 32
      %v3238 = vpop.permute.xlu0 %3237
      %3239 = vrot.lane.b32.xlu0 %v3108, 32
      %v3240 = vpop.permute.xlu0 %3239
      %3241 = vrot.lane.b32.xlu0 %v3109, 32
      %v3242 = vpop.permute.xlu0 %3241
      %3243 = vrot.lane.b32.xlu0 %v3110, 32
      %v3244 = vpop.permute.xlu0 %3243
      %3245 = vrot.lane.b32.xlu0 %v3111, 32
      %v3246 = vpop.permute.xlu0 %3245
      %3247 = vrot.lane.b32.xlu0 %v3112, 32
      %v3248 = vpop.permute.xlu0 %3247
      %3249 = vrot.lane.b32.xlu0 %v3113, 32
      %v3250 = vpop.permute.xlu0 %3249
      %3251 = vrot.lane.b32.xlu0 %v3114, 32
      %v3252 = vpop.permute.xlu0 %3251
      %3253 = vrot.lane.b32.xlu0 %v3115, 32
      %v3254 = vpop.permute.xlu0 %3253
      %3255 = vrot.lane.b32.xlu0 %v3116, 32
      %v3256 = vpop.permute.xlu0 %3255
      %3257 = vrot.lane.b32.xlu0 %v3117, 32
      %v3258 = vpop.permute.xlu0 %3257
      %3259 = vrot.lane.b32.xlu0 %v3118, 32
      %v3260 = vpop.permute.xlu0 %3259
      %3261 = vrot.lane.b32.xlu0 %v3119, 32
      %v3262 = vpop.permute.xlu0 %3261
      %3263 = vrot.lane.b32.xlu0 %v3120, 32
      %v3264 = vpop.permute.xlu0 %3263
      %3265 = vrot.lane.b32.xlu0 %v3121, 32
      %v3266 = vpop.permute.xlu0 %3265
      %3267 = vrot.lane.b32.xlu0 %v3122, 32
      %v3268 = vpop.permute.xlu0 %3267
      %3269 = vrot.lane.b32.xlu0 %v3123, 32
      %v3270 = vpop.permute.xlu0 %3269
      %3271 = vrot.lane.b32.xlu0 %v3124, 32
      %v3272 = vpop.permute.xlu0 %3271
      %3273 = vrot.lane.b32.xlu0 %v3125, 32
      %v3274 = vpop.permute.xlu0 %3273
      %3275 = vrot.lane.b32.xlu0 %v3126, 32
      %v3276 = vpop.permute.xlu0 %3275
      %3277 = vrot.lane.b32.xlu0 %v3127, 32
      %v3278 = vpop.permute.xlu0 %3277
      %3279 = vrot.lane.b32.xlu0 %v3128, 32
      %v3280 = vpop.permute.xlu0 %3279
      %3281 = vrot.lane.b32.xlu0 %v3129, 32
      %v3282 = vpop.permute.xlu0 %3281
      %3283 = vrot.lane.b32.xlu0 %v3130, 32
      %v3284 = vpop.permute.xlu0 %3283
      %3285 = vrot.lane.b32.xlu0 %v3131, 32
      %v3286 = vpop.permute.xlu0 %3285
      %3287 = vrot.lane.b32.xlu0 %v3132, 32
      %v3288 = vpop.permute.xlu0 %3287
      %3289 = vrot.lane.b32.xlu0 %v3133, 32
      %v3290 = vpop.permute.xlu0 %3289
      %3291 = vrot.lane.b32.xlu0 %v3134, 32
      %v3292 = vpop.permute.xlu0 %3291
      %3293 = vrot.lane.b32.xlu0 %v3135, 32
      %v3294 = vpop.permute.xlu0 %3293
      %3295 = vrot.lane.b32.xlu0 %v3136, 32
      %v3296 = vpop.permute.xlu0 %3295
      %3297 = vrot.lane.b32.xlu0 %v3137, 32
      %v3298 = vpop.permute.xlu0 %3297
      %3299 = vrot.lane.b32.xlu0 %v3138, 32
      %v3300 = vpop.permute.xlu0 %3299
      %3301 = vrot.lane.b32.xlu0 %v3139, 32
      %v3302 = vpop.permute.xlu0 %3301
      %3303 = vrot.lane.b32.xlu0 %v3140, 32
      %v3304 = vpop.permute.xlu0 %3303
      %3305 = vrot.lane.b32.xlu0 %v3141, 32
      %v3306 = vpop.permute.xlu0 %3305
      %3307 = vrot.lane.b32.xlu0 %v3142, 32
      %v3308 = vpop.permute.xlu0 %3307
      %3309 = vrot.lane.b32.xlu0 %v3143, 32
      %v3310 = vpop.permute.xlu0 %3309
      %3311 = vrot.lane.b32.xlu0 %v3144, 32
      %v3312 = vpop.permute.xlu0 %3311
      %3313 = vrot.lane.b32.xlu0 %v3145, 32
      %v3314 = vpop.permute.xlu0 %3313
      %3315 = vrot.lane.b32.xlu0 %v3146, 32
      %v3316 = vpop.permute.xlu0 %3315
      %3317 = vrot.lane.b32.xlu0 %v3147, 32
      %v3318 = vpop.permute.xlu0 %3317
      %3319 = vrot.lane.b32.xlu0 %v3148, 32
      %v3320 = vpop.permute.xlu0 %3319
      %3321 = vrot.lane.b32.xlu0 %v3149, 32
      %v3322 = vpop.permute.xlu0 %3321
      %3323 = vrot.lane.b32.xlu0 %v3150, 32
      %v3324 = vpop.permute.xlu0 %3323
      %3325 = vrot.lane.b32.xlu0 %v3151, 32
      %v3326 = vpop.permute.xlu0 %3325
      %3327 = vrot.lane.b32.xlu0 %v3152, 32
      %v3328 = vpop.permute.xlu0 %3327
      %3329 = vrot.lane.b32.xlu0 %v3153, 32
      %v3330 = vpop.permute.xlu0 %3329
      %3331 = vrot.lane.b32.xlu0 %v3154, 32
      %v3332 = vpop.permute.xlu0 %3331
      %3333 = vrot.lane.b32.xlu0 %v3155, 32
      %v3334 = vpop.permute.xlu0 %3333
      %3335 = vrot.lane.b32.xlu0 %v3156, 32
      %v3336 = vpop.permute.xlu0 %3335
      %3337 = vrot.lane.b32.xlu0 %v3157, 32
      %v3338 = vpop.permute.xlu0 %3337
      %3339 = vrot.lane.b32.xlu0 %v3158, 32
      %v3340 = vpop.permute.xlu0 %3339
      %3341 = vrot.lane.b32.xlu0 %v3159, 32
      %v3342 = vpop.permute.xlu0 %3341
      %3343 = vrot.lane.b32.xlu0 %v3160, 32
      %v3344 = vpop.permute.xlu0 %3343
      %3345 = vrot.lane.b32.xlu0 %v3161, 32
      %v3346 = vpop.permute.xlu0 %3345
      %3347 = vrot.lane.b32.xlu0 %v3162, 32
      %v3348 = vpop.permute.xlu0 %3347
      %3349 = vrot.lane.b32.xlu0 %v3163, 32
      %v3350 = vpop.permute.xlu0 %3349
      %3351 = vrot.lane.b32.xlu0 %v3164, 32
      %v3352 = vpop.permute.xlu0 %3351
      %3353 = vrot.lane.b32.xlu0 %v3165, 32
      %v3354 = vpop.permute.xlu0 %3353
      %3355 = vrot.lane.b32.xlu0 %v3166, 32
      %v3356 = vpop.permute.xlu0 %3355
      %3357 = vrot.lane.b32.xlu0 %v3167, 32
      %v3358 = vpop.permute.xlu0 %3357
      %3359 = vrot.lane.b32.xlu0 %v3168, 32
      %v3360 = vpop.permute.xlu0 %3359
      %vm3425 = vcmask 523648
      %3426 = vst.msk [vmem:[%s226] sm:$0xff] %vm3425, %v3234
      %3427 = vst.msk [vmem:[%s226 + $0x10] sm:$0xff] %vm3425, %v3236
      %3428 = vst.msk [vmem:[%s226 + $0x20] sm:$0xff] %vm3425, %v3238
      %3429 = vst.msk [vmem:[%s226 + $0x30] sm:$0xff] %vm3425, %v3240
      %3430 = vst.msk [vmem:[%s226 + $0x40] sm:$0xff] %vm3425, %v3242
      %3431 = vst.msk [vmem:[%s226 + $0x50] sm:$0xff] %vm3425, %v3244
      %3432 = vst.msk [vmem:[%s226 + $0x60] sm:$0xff] %vm3425, %v3246
      %3433 = vst.msk [vmem:[%s226 + $0x70] sm:$0xff] %vm3425, %v3248
      %3434 = vst.msk [vmem:[%s226 + $0x100] sm:$0xff] %vm3425, %v3250
      %3435 = vst.msk [vmem:[%s226 + $0x110] sm:$0xff] %vm3425, %v3252
      %3436 = vst.msk [vmem:[%s226 + $0x120] sm:$0xff] %vm3425, %v3254
      %3437 = vst.msk [vmem:[%s226 + $0x130] sm:$0xff] %vm3425, %v3256
      %3438 = vst.msk [vmem:[%s226 + $0x140] sm:$0xff] %vm3425, %v3258
      %3439 = vst.msk [vmem:[%s226 + $0x150] sm:$0xff] %vm3425, %v3260
      %3440 = vst.msk [vmem:[%s226 + $0x160] sm:$0xff] %vm3425, %v3262
      %3441 = vst.msk [vmem:[%s226 + $0x170] sm:$0xff] %vm3425, %v3264
      %3442 = vst.msk [vmem:[%s226 + $0x200] sm:$0xff] %vm3425, %v3266
      %3443 = vst.msk [vmem:[%s226 + $0x210] sm:$0xff] %vm3425, %v3268
      %3444 = vst.msk [vmem:[%s226 + $0x220] sm:$0xff] %vm3425, %v3270
      %3445 = vst.msk [vmem:[%s226 + $0x230] sm:$0xff] %vm3425, %v3272
      %3446 = vst.msk [vmem:[%s226 + $0x240] sm:$0xff] %vm3425, %v3274
      %3447 = vst.msk [vmem:[%s226 + $0x250] sm:$0xff] %vm3425, %v3276
      %3448 = vst.msk [vmem:[%s226 + $0x260] sm:$0xff] %vm3425, %v3278
      %3449 = vst.msk [vmem:[%s226 + $0x270] sm:$0xff] %vm3425, %v3280
      %3450 = vst.msk [vmem:[%s226 + $0x300] sm:$0xff] %vm3425, %v3282
      %3451 = vst.msk [vmem:[%s226 + $0x310] sm:$0xff] %vm3425, %v3284
      %3452 = vst.msk [vmem:[%s226 + $0x320] sm:$0xff] %vm3425, %v3286
      %3453 = vst.msk [vmem:[%s226 + $0x330] sm:$0xff] %vm3425, %v3288
      %3454 = vst.msk [vmem:[%s226 + $0x340] sm:$0xff] %vm3425, %v3290
      %3455 = vst.msk [vmem:[%s226 + $0x350] sm:$0xff] %vm3425, %v3292
      %3456 = vst.msk [vmem:[%s226 + $0x360] sm:$0xff] %vm3425, %v3294
      %3457 = vst.msk [vmem:[%s226 + $0x370] sm:$0xff] %vm3425, %v3296
      %3458 = vst.msk [vmem:[%s226 + $0x400] sm:$0xff] %vm3425, %v3298
      %3459 = vst.msk [vmem:[%s226 + $0x410] sm:$0xff] %vm3425, %v3300
      %3460 = vst.msk [vmem:[%s226 + $0x420] sm:$0xff] %vm3425, %v3302
      %3461 = vst.msk [vmem:[%s226 + $0x430] sm:$0xff] %vm3425, %v3304
      %3462 = vst.msk [vmem:[%s226 + $0x440] sm:$0xff] %vm3425, %v3306
      %3463 = vst.msk [vmem:[%s226 + $0x450] sm:$0xff] %vm3425, %v3308
      %3464 = vst.msk [vmem:[%s226 + $0x460] sm:$0xff] %vm3425, %v3310
      %3465 = vst.msk [vmem:[%s226 + $0x470] sm:$0xff] %vm3425, %v3312
      %3466 = vst.msk [vmem:[%s226 + $0x500] sm:$0xff] %vm3425, %v3314
      %3467 = vst.msk [vmem:[%s226 + $0x510] sm:$0xff] %vm3425, %v3316
      %3468 = vst.msk [vmem:[%s226 + $0x520] sm:$0xff] %vm3425, %v3318
      %3469 = vst.msk [vmem:[%s226 + $0x530] sm:$0xff] %vm3425, %v3320
      %3470 = vst.msk [vmem:[%s226 + $0x540] sm:$0xff] %vm3425, %v3322
      %3471 = vst.msk [vmem:[%s226 + $0x550] sm:$0xff] %vm3425, %v3324
      %3472 = vst.msk [vmem:[%s226 + $0x560] sm:$0xff] %vm3425, %v3326
      %3473 = vst.msk [vmem:[%s226 + $0x570] sm:$0xff] %vm3425, %v3328
      %3474 = vst.msk [vmem:[%s226 + $0x600] sm:$0xff] %vm3425, %v3330
      %3475 = vst.msk [vmem:[%s226 + $0x610] sm:$0xff] %vm3425, %v3332
      %3476 = vst.msk [vmem:[%s226 + $0x620] sm:$0xff] %vm3425, %v3334
      %3477 = vst.msk [vmem:[%s226 + $0x630] sm:$0xff] %vm3425, %v3336
      %3478 = vst.msk [vmem:[%s226 + $0x640] sm:$0xff] %vm3425, %v3338
      %3479 = vst.msk [vmem:[%s226 + $0x650] sm:$0xff] %vm3425, %v3340
      %3480 = vst.msk [vmem:[%s226 + $0x660] sm:$0xff] %vm3425, %v3342
      %3481 = vst.msk [vmem:[%s226 + $0x670] sm:$0xff] %vm3425, %v3344
      %3482 = vst.msk [vmem:[%s226 + $0x700] sm:$0xff] %vm3425, %v3346
      %3483 = vst.msk [vmem:[%s226 + $0x710] sm:$0xff] %vm3425, %v3348
      %3484 = vst.msk [vmem:[%s226 + $0x720] sm:$0xff] %vm3425, %v3350
      %3485 = vst.msk [vmem:[%s226 + $0x730] sm:$0xff] %vm3425, %v3352
      %3486 = vst.msk [vmem:[%s226 + $0x740] sm:$0xff] %vm3425, %v3354
      %3487 = vst.msk [vmem:[%s226 + $0x750] sm:$0xff] %vm3425, %v3356
      %3488 = vst.msk [vmem:[%s226 + $0x760] sm:$0xff] %vm3425, %v3358
      %3489 = vst.msk [vmem:[%s226 + $0x770] sm:$0xff] %vm3425, %v3360
      %v3490 = vld [vmem:[#allocation2] sm:$0xff]
      %v3491 = vld [vmem:[#allocation2 + $0x8] sm:$0xff]
      %v3492 = vld [vmem:[#allocation2 + $0x10] sm:$0xff]
      %v3493 = vld [vmem:[#allocation2 + $0x18] sm:$0xff]
      %v3494 = vld [vmem:[#allocation2 + $0x20] sm:$0xff]
      %v3495 = vld [vmem:[#allocation2 + $0x28] sm:$0xff]
      %v3496 = vld [vmem:[#allocation2 + $0x30] sm:$0xff]
      %v3497 = vld [vmem:[#allocation2 + $0x38] sm:$0xff]
      %v3498 = vld [vmem:[#allocation2 + $0x40] sm:$0xff]
      %v3499 = vld [vmem:[#allocation2 + $0x48] sm:$0xff]
      %v3500 = vld [vmem:[#allocation2 + $0x50] sm:$0xff]
      %v3501 = vld [vmem:[#allocation2 + $0x58] sm:$0xff]
      %v3502 = vld [vmem:[#allocation2 + $0x60] sm:$0xff]
      %v3503 = vld [vmem:[#allocation2 + $0x68] sm:$0xff]
      %v3504 = vld [vmem:[#allocation2 + $0x70] sm:$0xff]
      %v3505 = vld [vmem:[#allocation2 + $0x78] sm:$0xff]
      %v3506 = vld [vmem:[#allocation2 + $0x80] sm:$0xff]
      %v3507 = vld [vmem:[#allocation2 + $0x88] sm:$0xff]
      %v3508 = vld [vmem:[#allocation2 + $0x90] sm:$0xff]
      %v3509 = vld [vmem:[#allocation2 + $0x98] sm:$0xff]
      %v3510 = vld [vmem:[#allocation2 + $0xa0] sm:$0xff]
      %v3511 = vld [vmem:[#allocation2 + $0xa8] sm:$0xff]
      %v3512 = vld [vmem:[#allocation2 + $0xb0] sm:$0xff]
      %v3513 = vld [vmem:[#allocation2 + $0xb8] sm:$0xff]
      %v3514 = vld [vmem:[#allocation2 + $0xc0] sm:$0xff]
      %v3515 = vld [vmem:[#allocation2 + $0xc8] sm:$0xff]
      %v3516 = vld [vmem:[#allocation2 + $0xd0] sm:$0xff]
      %v3517 = vld [vmem:[#allocation2 + $0xd8] sm:$0xff]
      %v3518 = vld [vmem:[#allocation2 + $0xe0] sm:$0xff]
      %v3519 = vld [vmem:[#allocation2 + $0xe8] sm:$0xff]
      %v3520 = vld [vmem:[#allocation2 + $0xf0] sm:$0xff]
      %v3521 = vld [vmem:[#allocation2 + $0xf8] sm:$0xff]
      %v3522 = vld [vmem:[#allocation2 + $0x100] sm:$0xff]
      %v3523 = vld [vmem:[#allocation2 + $0x108] sm:$0xff]
      %v3524 = vld [vmem:[#allocation2 + $0x110] sm:$0xff]
      %v3525 = vld [vmem:[#allocation2 + $0x118] sm:$0xff]
      %v3526 = vld [vmem:[#allocation2 + $0x120] sm:$0xff]
      %v3527 = vld [vmem:[#allocation2 + $0x128] sm:$0xff]
      %v3528 = vld [vmem:[#allocation2 + $0x130] sm:$0xff]
      %v3529 = vld [vmem:[#allocation2 + $0x138] sm:$0xff]
      %v3530 = vld [vmem:[#allocation2 + $0x140] sm:$0xff]
      %v3531 = vld [vmem:[#allocation2 + $0x148] sm:$0xff]
      %v3532 = vld [vmem:[#allocation2 + $0x150] sm:$0xff]
      %v3533 = vld [vmem:[#allocation2 + $0x158] sm:$0xff]
      %v3534 = vld [vmem:[#allocation2 + $0x160] sm:$0xff]
      %v3535 = vld [vmem:[#allocation2 + $0x168] sm:$0xff]
      %v3536 = vld [vmem:[#allocation2 + $0x170] sm:$0xff]
      %v3537 = vld [vmem:[#allocation2 + $0x178] sm:$0xff]
      %v3538 = vld [vmem:[#allocation2 + $0x180] sm:$0xff]
      %v3539 = vld [vmem:[#allocation2 + $0x188] sm:$0xff]
      %v3540 = vld [vmem:[#allocation2 + $0x190] sm:$0xff]
      %v3541 = vld [vmem:[#allocation2 + $0x198] sm:$0xff]
      %v3542 = vld [vmem:[#allocation2 + $0x1a0] sm:$0xff]
      %v3543 = vld [vmem:[#allocation2 + $0x1a8] sm:$0xff]
      %v3544 = vld [vmem:[#allocation2 + $0x1b0] sm:$0xff]
      %v3545 = vld [vmem:[#allocation2 + $0x1b8] sm:$0xff]
      %v3546 = vld [vmem:[#allocation2 + $0x1c0] sm:$0xff]
      %v3547 = vld [vmem:[#allocation2 + $0x1c8] sm:$0xff]
      %v3548 = vld [vmem:[#allocation2 + $0x1d0] sm:$0xff]
      %v3549 = vld [vmem:[#allocation2 + $0x1d8] sm:$0xff]
      %v3550 = vld [vmem:[#allocation2 + $0x1e0] sm:$0xff]
      %v3551 = vld [vmem:[#allocation2 + $0x1e8] sm:$0xff]
      %v3552 = vld [vmem:[#allocation2 + $0x1f0] sm:$0xff]
      %v3553 = vld [vmem:[#allocation2 + $0x1f8] sm:$0xff]
      %3618 = vrot.lane.b32.xlu0 %v3490, 112
      %v3619 = vpop.permute.xlu0 %3618
      %3620 = vrot.lane.b32.xlu0 %v3491, 112
      %v3621 = vpop.permute.xlu0 %3620
      %3622 = vrot.lane.b32.xlu0 %v3492, 112
      %v3623 = vpop.permute.xlu0 %3622
      %3624 = vrot.lane.b32.xlu0 %v3493, 112
      %v3625 = vpop.permute.xlu0 %3624
      %3626 = vrot.lane.b32.xlu0 %v3494, 112
      %v3627 = vpop.permute.xlu0 %3626
      %3628 = vrot.lane.b32.xlu0 %v3495, 112
      %v3629 = vpop.permute.xlu0 %3628
      %3630 = vrot.lane.b32.xlu0 %v3496, 112
      %v3631 = vpop.permute.xlu0 %3630
      %3632 = vrot.lane.b32.xlu0 %v3497, 112
      %v3633 = vpop.permute.xlu0 %3632
      %3634 = vrot.lane.b32.xlu0 %v3498, 112
      %v3635 = vpop.permute.xlu0 %3634
      %3636 = vrot.lane.b32.xlu0 %v3499, 112
      %v3637 = vpop.permute.xlu0 %3636
      %3638 = vrot.lane.b32.xlu0 %v3500, 112
      %v3639 = vpop.permute.xlu0 %3638
      %3640 = vrot.lane.b32.xlu0 %v3501, 112
      %v3641 = vpop.permute.xlu0 %3640
      %3642 = vrot.lane.b32.xlu0 %v3502, 112
      %v3643 = vpop.permute.xlu0 %3642
      %3644 = vrot.lane.b32.xlu0 %v3503, 112
      %v3645 = vpop.permute.xlu0 %3644
      %3646 = vrot.lane.b32.xlu0 %v3504, 112
      %v3647 = vpop.permute.xlu0 %3646
      %3648 = vrot.lane.b32.xlu0 %v3505, 112
      %v3649 = vpop.permute.xlu0 %3648
      %3650 = vrot.lane.b32.xlu0 %v3506, 112
      %v3651 = vpop.permute.xlu0 %3650
      %3652 = vrot.lane.b32.xlu0 %v3507, 112
      %v3653 = vpop.permute.xlu0 %3652
      %3654 = vrot.lane.b32.xlu0 %v3508, 112
      %v3655 = vpop.permute.xlu0 %3654
      %3656 = vrot.lane.b32.xlu0 %v3509, 112
      %v3657 = vpop.permute.xlu0 %3656
      %3658 = vrot.lane.b32.xlu0 %v3510, 112
      %v3659 = vpop.permute.xlu0 %3658
      %3660 = vrot.lane.b32.xlu0 %v3511, 112
      %v3661 = vpop.permute.xlu0 %3660
      %3662 = vrot.lane.b32.xlu0 %v3512, 112
      %v3663 = vpop.permute.xlu0 %3662
      %3664 = vrot.lane.b32.xlu0 %v3513, 112
      %v3665 = vpop.permute.xlu0 %3664
      %3666 = vrot.lane.b32.xlu0 %v3514, 112
      %v3667 = vpop.permute.xlu0 %3666
      %3668 = vrot.lane.b32.xlu0 %v3515, 112
      %v3669 = vpop.permute.xlu0 %3668
      %3670 = vrot.lane.b32.xlu0 %v3516, 112
      %v3671 = vpop.permute.xlu0 %3670
      %3672 = vrot.lane.b32.xlu0 %v3517, 112
      %v3673 = vpop.permute.xlu0 %3672
      %3674 = vrot.lane.b32.xlu0 %v3518, 112
      %v3675 = vpop.permute.xlu0 %3674
      %3676 = vrot.lane.b32.xlu0 %v3519, 112
      %v3677 = vpop.permute.xlu0 %3676
      %3678 = vrot.lane.b32.xlu0 %v3520, 112
      %v3679 = vpop.permute.xlu0 %3678
      %3680 = vrot.lane.b32.xlu0 %v3521, 112
      %v3681 = vpop.permute.xlu0 %3680
      %3682 = vrot.lane.b32.xlu0 %v3522, 112
      %v3683 = vpop.permute.xlu0 %3682
      %3684 = vrot.lane.b32.xlu0 %v3523, 112
      %v3685 = vpop.permute.xlu0 %3684
      %3686 = vrot.lane.b32.xlu0 %v3524, 112
      %v3687 = vpop.permute.xlu0 %3686
      %3688 = vrot.lane.b32.xlu0 %v3525, 112
      %v3689 = vpop.permute.xlu0 %3688
      %3690 = vrot.lane.b32.xlu0 %v3526, 112
      %v3691 = vpop.permute.xlu0 %3690
      %3692 = vrot.lane.b32.xlu0 %v3527, 112
      %v3693 = vpop.permute.xlu0 %3692
      %3694 = vrot.lane.b32.xlu0 %v3528, 112
      %v3695 = vpop.permute.xlu0 %3694
      %3696 = vrot.lane.b32.xlu0 %v3529, 112
      %v3697 = vpop.permute.xlu0 %3696
      %3698 = vrot.lane.b32.xlu0 %v3530, 112
      %v3699 = vpop.permute.xlu0 %3698
      %3700 = vrot.lane.b32.xlu0 %v3531, 112
      %v3701 = vpop.permute.xlu0 %3700
      %3702 = vrot.lane.b32.xlu0 %v3532, 112
      %v3703 = vpop.permute.xlu0 %3702
      %3704 = vrot.lane.b32.xlu0 %v3533, 112
      %v3705 = vpop.permute.xlu0 %3704
      %3706 = vrot.lane.b32.xlu0 %v3534, 112
      %v3707 = vpop.permute.xlu0 %3706
      %3708 = vrot.lane.b32.xlu0 %v3535, 112
      %v3709 = vpop.permute.xlu0 %3708
      %3710 = vrot.lane.b32.xlu0 %v3536, 112
      %v3711 = vpop.permute.xlu0 %3710
      %3712 = vrot.lane.b32.xlu0 %v3537, 112
      %v3713 = vpop.permute.xlu0 %3712
      %3714 = vrot.lane.b32.xlu0 %v3538, 112
      %v3715 = vpop.permute.xlu0 %3714
      %3716 = vrot.lane.b32.xlu0 %v3539, 112
      %v3717 = vpop.permute.xlu0 %3716
      %3718 = vrot.lane.b32.xlu0 %v3540, 112
      %v3719 = vpop.permute.xlu0 %3718
      %3720 = vrot.lane.b32.xlu0 %v3541, 112
      %v3721 = vpop.permute.xlu0 %3720
      %3722 = vrot.lane.b32.xlu0 %v3542, 112
      %v3723 = vpop.permute.xlu0 %3722
      %3724 = vrot.lane.b32.xlu0 %v3543, 112
      %v3725 = vpop.permute.xlu0 %3724
      %3726 = vrot.lane.b32.xlu0 %v3544, 112
      %v3727 = vpop.permute.xlu0 %3726
      %3728 = vrot.lane.b32.xlu0 %v3545, 112
      %v3729 = vpop.permute.xlu0 %3728
      %3730 = vrot.lane.b32.xlu0 %v3546, 112
      %v3731 = vpop.permute.xlu0 %3730
      %3732 = vrot.lane.b32.xlu0 %v3547, 112
      %v3733 = vpop.permute.xlu0 %3732
      %3734 = vrot.lane.b32.xlu0 %v3548, 112
      %v3735 = vpop.permute.xlu0 %3734
      %3736 = vrot.lane.b32.xlu0 %v3549, 112
      %v3737 = vpop.permute.xlu0 %3736
      %3738 = vrot.lane.b32.xlu0 %v3550, 112
      %v3739 = vpop.permute.xlu0 %3738
      %3740 = vrot.lane.b32.xlu0 %v3551, 112
      %v3741 = vpop.permute.xlu0 %3740
      %3742 = vrot.lane.b32.xlu0 %v3552, 112
      %v3743 = vpop.permute.xlu0 %3742
      %3744 = vrot.lane.b32.xlu0 %v3553, 112
      %v3745 = vpop.permute.xlu0 %3744
      %s3810 = scalar_lea.vmem %s226, 8
      %3811 = vst.msk [vmem:[%s3810] sm:$0xff] %vm3040, %v3619
      %3812 = vst.msk [vmem:[%s3810 + $0x10] sm:$0xff] %vm3040, %v3621
      %3813 = vst.msk [vmem:[%s3810 + $0x20] sm:$0xff] %vm3040, %v3623
      %3814 = vst.msk [vmem:[%s3810 + $0x30] sm:$0xff] %vm3040, %v3625
      %3815 = vst.msk [vmem:[%s3810 + $0x40] sm:$0xff] %vm3040, %v3627
      %3816 = vst.msk [vmem:[%s3810 + $0x50] sm:$0xff] %vm3040, %v3629
      %3817 = vst.msk [vmem:[%s3810 + $0x60] sm:$0xff] %vm3040, %v3631
      %3818 = vst.msk [vmem:[%s3810 + $0x70] sm:$0xff] %vm3040, %v3633
      %3819 = vst.msk [vmem:[%s3810 + $0x100] sm:$0xff] %vm3040, %v3635
      %3820 = vst.msk [vmem:[%s3810 + $0x110] sm:$0xff] %vm3040, %v3637
      %3821 = vst.msk [vmem:[%s3810 + $0x120] sm:$0xff] %vm3040, %v3639
      %3822 = vst.msk [vmem:[%s3810 + $0x130] sm:$0xff] %vm3040, %v3641
      %3823 = vst.msk [vmem:[%s3810 + $0x140] sm:$0xff] %vm3040, %v3643
      %3824 = vst.msk [vmem:[%s3810 + $0x150] sm:$0xff] %vm3040, %v3645
      %3825 = vst.msk [vmem:[%s3810 + $0x160] sm:$0xff] %vm3040, %v3647
      %3826 = vst.msk [vmem:[%s3810 + $0x170] sm:$0xff] %vm3040, %v3649
      %3827 = vst.msk [vmem:[%s3810 + $0x200] sm:$0xff] %vm3040, %v3651
      %3828 = vst.msk [vmem:[%s3810 + $0x210] sm:$0xff] %vm3040, %v3653
      %3829 = vst.msk [vmem:[%s3810 + $0x220] sm:$0xff] %vm3040, %v3655
      %3830 = vst.msk [vmem:[%s3810 + $0x230] sm:$0xff] %vm3040, %v3657
      %3831 = vst.msk [vmem:[%s3810 + $0x240] sm:$0xff] %vm3040, %v3659
      %3832 = vst.msk [vmem:[%s3810 + $0x250] sm:$0xff] %vm3040, %v3661
      %3833 = vst.msk [vmem:[%s3810 + $0x260] sm:$0xff] %vm3040, %v3663
      %3834 = vst.msk [vmem:[%s3810 + $0x270] sm:$0xff] %vm3040, %v3665
      %3835 = vst.msk [vmem:[%s3810 + $0x300] sm:$0xff] %vm3040, %v3667
      %3836 = vst.msk [vmem:[%s3810 + $0x310] sm:$0xff] %vm3040, %v3669
      %3837 = vst.msk [vmem:[%s3810 + $0x320] sm:$0xff] %vm3040, %v3671
      %3838 = vst.msk [vmem:[%s3810 + $0x330] sm:$0xff] %vm3040, %v3673
      %3839 = vst.msk [vmem:[%s3810 + $0x340] sm:$0xff] %vm3040, %v3675
      %3840 = vst.msk [vmem:[%s3810 + $0x350] sm:$0xff] %vm3040, %v3677
      %3841 = vst.msk [vmem:[%s3810 + $0x360] sm:$0xff] %vm3040, %v3679
      %3842 = vst.msk [vmem:[%s3810 + $0x370] sm:$0xff] %vm3040, %v3681
      %3843 = vst.msk [vmem:[%s3810 + $0x400] sm:$0xff] %vm3040, %v3683
      %3844 = vst.msk [vmem:[%s3810 + $0x410] sm:$0xff] %vm3040, %v3685
      %3845 = vst.msk [vmem:[%s3810 + $0x420] sm:$0xff] %vm3040, %v3687
      %3846 = vst.msk [vmem:[%s3810 + $0x430] sm:$0xff] %vm3040, %v3689
      %3847 = vst.msk [vmem:[%s3810 + $0x440] sm:$0xff] %vm3040, %v3691
      %3848 = vst.msk [vmem:[%s3810 + $0x450] sm:$0xff] %vm3040, %v3693
      %3849 = vst.msk [vmem:[%s3810 + $0x460] sm:$0xff] %vm3040, %v3695
      %3850 = vst.msk [vmem:[%s3810 + $0x470] sm:$0xff] %vm3040, %v3697
      %3851 = vst.msk [vmem:[%s3810 + $0x500] sm:$0xff] %vm3040, %v3699
      %3852 = vst.msk [vmem:[%s3810 + $0x510] sm:$0xff] %vm3040, %v3701
      %3853 = vst.msk [vmem:[%s3810 + $0x520] sm:$0xff] %vm3040, %v3703
      %3854 = vst.msk [vmem:[%s3810 + $0x530] sm:$0xff] %vm3040, %v3705
      %3855 = vst.msk [vmem:[%s3810 + $0x540] sm:$0xff] %vm3040, %v3707
      %3856 = vst.msk [vmem:[%s3810 + $0x550] sm:$0xff] %vm3040, %v3709
      %3857 = vst.msk [vmem:[%s3810 + $0x560] sm:$0xff] %vm3040, %v3711
      %3858 = vst.msk [vmem:[%s3810 + $0x570] sm:$0xff] %vm3040, %v3713
      %3859 = vst.msk [vmem:[%s3810 + $0x600] sm:$0xff] %vm3040, %v3715
      %3860 = vst.msk [vmem:[%s3810 + $0x610] sm:$0xff] %vm3040, %v3717
      %3861 = vst.msk [vmem:[%s3810 + $0x620] sm:$0xff] %vm3040, %v3719
      %3862 = vst.msk [vmem:[%s3810 + $0x630] sm:$0xff] %vm3040, %v3721
      %3863 = vst.msk [vmem:[%s3810 + $0x640] sm:$0xff] %vm3040, %v3723
      %3864 = vst.msk [vmem:[%s3810 + $0x650] sm:$0xff] %vm3040, %v3725
      %3865 = vst.msk [vmem:[%s3810 + $0x660] sm:$0xff] %vm3040, %v3727
      %3866 = vst.msk [vmem:[%s3810 + $0x670] sm:$0xff] %vm3040, %v3729
      %3867 = vst.msk [vmem:[%s3810 + $0x700] sm:$0xff] %vm3040, %v3731
      %3868 = vst.msk [vmem:[%s3810 + $0x710] sm:$0xff] %vm3040, %v3733
      %3869 = vst.msk [vmem:[%s3810 + $0x720] sm:$0xff] %vm3040, %v3735
      %3870 = vst.msk [vmem:[%s3810 + $0x730] sm:$0xff] %vm3040, %v3737
      %3871 = vst.msk [vmem:[%s3810 + $0x740] sm:$0xff] %vm3040, %v3739
      %3872 = vst.msk [vmem:[%s3810 + $0x750] sm:$0xff] %vm3040, %v3741
      %3873 = vst.msk [vmem:[%s3810 + $0x760] sm:$0xff] %vm3040, %v3743
      %3874 = vst.msk [vmem:[%s3810 + $0x770] sm:$0xff] %vm3040, %v3745
      %v3875 = vld [vmem:[#allocation2] sm:$0xff]
      %v3876 = vld [vmem:[#allocation2 + $0x8] sm:$0xff]
      %v3877 = vld [vmem:[#allocation2 + $0x10] sm:$0xff]
      %v3878 = vld [vmem:[#allocation2 + $0x18] sm:$0xff]
      %v3879 = vld [vmem:[#allocation2 + $0x20] sm:$0xff]
      %v3880 = vld [vmem:[#allocation2 + $0x28] sm:$0xff]
      %v3881 = vld [vmem:[#allocation2 + $0x30] sm:$0xff]
      %v3882 = vld [vmem:[#allocation2 + $0x38] sm:$0xff]
      %v3883 = vld [vmem:[#allocation2 + $0x40] sm:$0xff]
      %v3884 = vld [vmem:[#allocation2 + $0x48] sm:$0xff]
      %v3885 = vld [vmem:[#allocation2 + $0x50] sm:$0xff]
      %v3886 = vld [vmem:[#allocation2 + $0x58] sm:$0xff]
      %v3887 = vld [vmem:[#allocation2 + $0x60] sm:$0xff]
      %v3888 = vld [vmem:[#allocation2 + $0x68] sm:$0xff]
      %v3889 = vld [vmem:[#allocation2 + $0x70] sm:$0xff]
      %v3890 = vld [vmem:[#allocation2 + $0x78] sm:$0xff]
      %v3891 = vld [vmem:[#allocation2 + $0x80] sm:$0xff]
      %v3892 = vld [vmem:[#allocation2 + $0x88] sm:$0xff]
      %v3893 = vld [vmem:[#allocation2 + $0x90] sm:$0xff]
      %v3894 = vld [vmem:[#allocation2 + $0x98] sm:$0xff]
      %v3895 = vld [vmem:[#allocation2 + $0xa0] sm:$0xff]
      %v3896 = vld [vmem:[#allocation2 + $0xa8] sm:$0xff]
      %v3897 = vld [vmem:[#allocation2 + $0xb0] sm:$0xff]
      %v3898 = vld [vmem:[#allocation2 + $0xb8] sm:$0xff]
      %v3899 = vld [vmem:[#allocation2 + $0xc0] sm:$0xff]
      %v3900 = vld [vmem:[#allocation2 + $0xc8] sm:$0xff]
      %v3901 = vld [vmem:[#allocation2 + $0xd0] sm:$0xff]
      %v3902 = vld [vmem:[#allocation2 + $0xd8] sm:$0xff]
      %v3903 = vld [vmem:[#allocation2 + $0xe0] sm:$0xff]
      %v3904 = vld [vmem:[#allocation2 + $0xe8] sm:$0xff]
      %v3905 = vld [vmem:[#allocation2 + $0xf0] sm:$0xff]
      %v3906 = vld [vmem:[#allocation2 + $0xf8] sm:$0xff]
      %v3907 = vld [vmem:[#allocation2 + $0x100] sm:$0xff]
      %v3908 = vld [vmem:[#allocation2 + $0x108] sm:$0xff]
      %v3909 = vld [vmem:[#allocation2 + $0x110] sm:$0xff]
      %v3910 = vld [vmem:[#allocation2 + $0x118] sm:$0xff]
      %v3911 = vld [vmem:[#allocation2 + $0x120] sm:$0xff]
      %v3912 = vld [vmem:[#allocation2 + $0x128] sm:$0xff]
      %v3913 = vld [vmem:[#allocation2 + $0x130] sm:$0xff]
      %v3914 = vld [vmem:[#allocation2 + $0x138] sm:$0xff]
      %v3915 = vld [vmem:[#allocation2 + $0x140] sm:$0xff]
      %v3916 = vld [vmem:[#allocation2 + $0x148] sm:$0xff]
      %v3917 = vld [vmem:[#allocation2 + $0x150] sm:$0xff]
      %v3918 = vld [vmem:[#allocation2 + $0x158] sm:$0xff]
      %v3919 = vld [vmem:[#allocation2 + $0x160] sm:$0xff]
      %v3920 = vld [vmem:[#allocation2 + $0x168] sm:$0xff]
      %v3921 = vld [vmem:[#allocation2 + $0x170] sm:$0xff]
      %v3922 = vld [vmem:[#allocation2 + $0x178] sm:$0xff]
      %v3923 = vld [vmem:[#allocation2 + $0x180] sm:$0xff]
      %v3924 = vld [vmem:[#allocation2 + $0x188] sm:$0xff]
      %v3925 = vld [vmem:[#allocation2 + $0x190] sm:$0xff]
      %v3926 = vld [vmem:[#allocation2 + $0x198] sm:$0xff]
      %v3927 = vld [vmem:[#allocation2 + $0x1a0] sm:$0xff]
      %v3928 = vld [vmem:[#allocation2 + $0x1a8] sm:$0xff]
      %v3929 = vld [vmem:[#allocation2 + $0x1b0] sm:$0xff]
      %v3930 = vld [vmem:[#allocation2 + $0x1b8] sm:$0xff]
      %v3931 = vld [vmem:[#allocation2 + $0x1c0] sm:$0xff]
      %v3932 = vld [vmem:[#allocation2 + $0x1c8] sm:$0xff]
      %v3933 = vld [vmem:[#allocation2 + $0x1d0] sm:$0xff]
      %v3934 = vld [vmem:[#allocation2 + $0x1d8] sm:$0xff]
      %v3935 = vld [vmem:[#allocation2 + $0x1e0] sm:$0xff]
      %v3936 = vld [vmem:[#allocation2 + $0x1e8] sm:$0xff]
      %v3937 = vld [vmem:[#allocation2 + $0x1f0] sm:$0xff]
      %v3938 = vld [vmem:[#allocation2 + $0x1f8] sm:$0xff]
      %3939 = vst.msk [vmem:[%s3810] sm:$0xff] %vm3425, %v3875
      %3940 = vst.msk [vmem:[%s3810 + $0x10] sm:$0xff] %vm3425, %v3876
      %3941 = vst.msk [vmem:[%s3810 + $0x20] sm:$0xff] %vm3425, %v3877
      %3942 = vst.msk [vmem:[%s3810 + $0x30] sm:$0xff] %vm3425, %v3878
      %3943 = vst.msk [vmem:[%s3810 + $0x40] sm:$0xff] %vm3425, %v3879
      %3944 = vst.msk [vmem:[%s3810 + $0x50] sm:$0xff] %vm3425, %v3880
      %3945 = vst.msk [vmem:[%s3810 + $0x60] sm:$0xff] %vm3425, %v3881
      %3946 = vst.msk [vmem:[%s3810 + $0x70] sm:$0xff] %vm3425, %v3882
      %3947 = vst.msk [vmem:[%s3810 + $0x100] sm:$0xff] %vm3425, %v3883
      %3948 = vst.msk [vmem:[%s3810 + $0x110] sm:$0xff] %vm3425, %v3884
      %3949 = vst.msk [vmem:[%s3810 + $0x120] sm:$0xff] %vm3425, %v3885
      %3950 = vst.msk [vmem:[%s3810 + $0x130] sm:$0xff] %vm3425, %v3886
      %3951 = vst.msk [vmem:[%s3810 + $0x140] sm:$0xff] %vm3425, %v3887
      %3952 = vst.msk [vmem:[%s3810 + $0x150] sm:$0xff] %vm3425, %v3888
      %3953 = vst.msk [vmem:[%s3810 + $0x160] sm:$0xff] %vm3425, %v3889
      %3954 = vst.msk [vmem:[%s3810 + $0x170] sm:$0xff] %vm3425, %v3890
      %3955 = vst.msk [vmem:[%s3810 + $0x200] sm:$0xff] %vm3425, %v3891
      %3956 = vst.msk [vmem:[%s3810 + $0x210] sm:$0xff] %vm3425, %v3892
      %3957 = vst.msk [vmem:[%s3810 + $0x220] sm:$0xff] %vm3425, %v3893
      %3958 = vst.msk [vmem:[%s3810 + $0x230] sm:$0xff] %vm3425, %v3894
      %3959 = vst.msk [vmem:[%s3810 + $0x240] sm:$0xff] %vm3425, %v3895
      %3960 = vst.msk [vmem:[%s3810 + $0x250] sm:$0xff] %vm3425, %v3896
      %3961 = vst.msk [vmem:[%s3810 + $0x260] sm:$0xff] %vm3425, %v3897
      %3962 = vst.msk [vmem:[%s3810 + $0x270] sm:$0xff] %vm3425, %v3898
      %3963 = vst.msk [vmem:[%s3810 + $0x300] sm:$0xff] %vm3425, %v3899
      %3964 = vst.msk [vmem:[%s3810 + $0x310] sm:$0xff] %vm3425, %v3900
      %3965 = vst.msk [vmem:[%s3810 + $0x320] sm:$0xff] %vm3425, %v3901
      %3966 = vst.msk [vmem:[%s3810 + $0x330] sm:$0xff] %vm3425, %v3902
      %3967 = vst.msk [vmem:[%s3810 + $0x340] sm:$0xff] %vm3425, %v3903
      %3968 = vst.msk [vmem:[%s3810 + $0x350] sm:$0xff] %vm3425, %v3904
      %3969 = vst.msk [vmem:[%s3810 + $0x360] sm:$0xff] %vm3425, %v3905
      %3970 = vst.msk [vmem:[%s3810 + $0x370] sm:$0xff] %vm3425, %v3906
      %3971 = vst.msk [vmem:[%s3810 + $0x400] sm:$0xff] %vm3425, %v3907
      %3972 = vst.msk [vmem:[%s3810 + $0x410] sm:$0xff] %vm3425, %v3908
      %3973 = vst.msk [vmem:[%s3810 + $0x420] sm:$0xff] %vm3425, %v3909
      %3974 = vst.msk [vmem:[%s3810 + $0x430] sm:$0xff] %vm3425, %v3910
      %3975 = vst.msk [vmem:[%s3810 + $0x440] sm:$0xff] %vm3425, %v3911
      %3976 = vst.msk [vmem:[%s3810 + $0x450] sm:$0xff] %vm3425, %v3912
      %3977 = vst.msk [vmem:[%s3810 + $0x460] sm:$0xff] %vm3425, %v3913
      %3978 = vst.msk [vmem:[%s3810 + $0x470] sm:$0xff] %vm3425, %v3914
      %3979 = vst.msk [vmem:[%s3810 + $0x500] sm:$0xff] %vm3425, %v3915
      %3980 = vst.msk [vmem:[%s3810 + $0x510] sm:$0xff] %vm3425, %v3916
      %3981 = vst.msk [vmem:[%s3810 + $0x520] sm:$0xff] %vm3425, %v3917
      %3982 = vst.msk [vmem:[%s3810 + $0x530] sm:$0xff] %vm3425, %v3918
      %3983 = vst.msk [vmem:[%s3810 + $0x540] sm:$0xff] %vm3425, %v3919
      %3984 = vst.msk [vmem:[%s3810 + $0x550] sm:$0xff] %vm3425, %v3920
      %3985 = vst.msk [vmem:[%s3810 + $0x560] sm:$0xff] %vm3425, %v3921
      %3986 = vst.msk [vmem:[%s3810 + $0x570] sm:$0xff] %vm3425, %v3922
      %3987 = vst.msk [vmem:[%s3810 + $0x600] sm:$0xff] %vm3425, %v3923
      %3988 = vst.msk [vmem:[%s3810 + $0x610] sm:$0xff] %vm3425, %v3924
      %3989 = vst.msk [vmem:[%s3810 + $0x620] sm:$0xff] %vm3425, %v3925
      %3990 = vst.msk [vmem:[%s3810 + $0x630] sm:$0xff] %vm3425, %v3926
      %3991 = vst.msk [vmem:[%s3810 + $0x640] sm:$0xff] %vm3425, %v3927
      %3992 = vst.msk [vmem:[%s3810 + $0x650] sm:$0xff] %vm3425, %v3928
      %3993 = vst.msk [vmem:[%s3810 + $0x660] sm:$0xff] %vm3425, %v3929
      %3994 = vst.msk [vmem:[%s3810 + $0x670] sm:$0xff] %vm3425, %v3930
      %3995 = vst.msk [vmem:[%s3810 + $0x700] sm:$0xff] %vm3425, %v3931
      %3996 = vst.msk [vmem:[%s3810 + $0x710] sm:$0xff] %vm3425, %v3932
      %3997 = vst.msk [vmem:[%s3810 + $0x720] sm:$0xff] %vm3425, %v3933
      %3998 = vst.msk [vmem:[%s3810 + $0x730] sm:$0xff] %vm3425, %v3934
      %3999 = vst.msk [vmem:[%s3810 + $0x740] sm:$0xff] %vm3425, %v3935
      %4000 = vst.msk [vmem:[%s3810 + $0x750] sm:$0xff] %vm3425, %v3936
      %4001 = vst.msk [vmem:[%s3810 + $0x760] sm:$0xff] %vm3425, %v3937
      %4002 = vst.msk [vmem:[%s3810 + $0x770] sm:$0xff] %vm3425, %v3938
      %v4003 = vld [vmem:[#allocation2] sm:$0xff]
      %v4004 = vld [vmem:[#allocation2 + $0x8] sm:$0xff]
      %v4005 = vld [vmem:[#allocation2 + $0x10] sm:$0xff]
      %v4006 = vld [vmem:[#allocation2 + $0x18] sm:$0xff]
      %v4007 = vld [vmem:[#allocation2 + $0x20] sm:$0xff]
      %v4008 = vld [vmem:[#allocation2 + $0x28] sm:$0xff]
      %v4009 = vld [vmem:[#allocation2 + $0x30] sm:$0xff]
      %v4010 = vld [vmem:[#allocation2 + $0x38] sm:$0xff]
      %v4011 = vld [vmem:[#allocation2 + $0x40] sm:$0xff]
      %v4012 = vld [vmem:[#allocation2 + $0x48] sm:$0xff]
      %v4013 = vld [vmem:[#allocation2 + $0x50] sm:$0xff]
      %v4014 = vld [vmem:[#allocation2 + $0x58] sm:$0xff]
      %v4015 = vld [vmem:[#allocation2 + $0x60] sm:$0xff]
      %v4016 = vld [vmem:[#allocation2 + $0x68] sm:$0xff]
      %v4017 = vld [vmem:[#allocation2 + $0x70] sm:$0xff]
      %v4018 = vld [vmem:[#allocation2 + $0x78] sm:$0xff]
      %v4019 = vld [vmem:[#allocation2 + $0x80] sm:$0xff]
      %v4020 = vld [vmem:[#allocation2 + $0x88] sm:$0xff]
      %v4021 = vld [vmem:[#allocation2 + $0x90] sm:$0xff]
      %v4022 = vld [vmem:[#allocation2 + $0x98] sm:$0xff]
      %v4023 = vld [vmem:[#allocation2 + $0xa0] sm:$0xff]
      %v4024 = vld [vmem:[#allocation2 + $0xa8] sm:$0xff]
      %v4025 = vld [vmem:[#allocation2 + $0xb0] sm:$0xff]
      %v4026 = vld [vmem:[#allocation2 + $0xb8] sm:$0xff]
      %v4027 = vld [vmem:[#allocation2 + $0xc0] sm:$0xff]
      %v4028 = vld [vmem:[#allocation2 + $0xc8] sm:$0xff]
      %v4029 = vld [vmem:[#allocation2 + $0xd0] sm:$0xff]
      %v4030 = vld [vmem:[#allocation2 + $0xd8] sm:$0xff]
      %v4031 = vld [vmem:[#allocation2 + $0xe0] sm:$0xff]
      %v4032 = vld [vmem:[#allocation2 + $0xe8] sm:$0xff]
      %v4033 = vld [vmem:[#allocation2 + $0xf0] sm:$0xff]
      %v4034 = vld [vmem:[#allocation2 + $0xf8] sm:$0xff]
      %v4035 = vld [vmem:[#allocation2 + $0x100] sm:$0xff]
      %v4036 = vld [vmem:[#allocation2 + $0x108] sm:$0xff]
      %v4037 = vld [vmem:[#allocation2 + $0x110] sm:$0xff]
      %v4038 = vld [vmem:[#allocation2 + $0x118] sm:$0xff]
      %v4039 = vld [vmem:[#allocation2 + $0x120] sm:$0xff]
      %v4040 = vld [vmem:[#allocation2 + $0x128] sm:$0xff]
      %v4041 = vld [vmem:[#allocation2 + $0x130] sm:$0xff]
      %v4042 = vld [vmem:[#allocation2 + $0x138] sm:$0xff]
      %v4043 = vld [vmem:[#allocation2 + $0x140] sm:$0xff]
      %v4044 = vld [vmem:[#allocation2 + $0x148] sm:$0xff]
      %v4045 = vld [vmem:[#allocation2 + $0x150] sm:$0xff]
      %v4046 = vld [vmem:[#allocation2 + $0x158] sm:$0xff]
      %v4047 = vld [vmem:[#allocation2 + $0x160] sm:$0xff]
      %v4048 = vld [vmem:[#allocation2 + $0x168] sm:$0xff]
      %v4049 = vld [vmem:[#allocation2 + $0x170] sm:$0xff]
      %v4050 = vld [vmem:[#allocation2 + $0x178] sm:$0xff]
      %v4051 = vld [vmem:[#allocation2 + $0x180] sm:$0xff]
      %v4052 = vld [vmem:[#allocation2 + $0x188] sm:$0xff]
      %v4053 = vld [vmem:[#allocation2 + $0x190] sm:$0xff]
      %v4054 = vld [vmem:[#allocation2 + $0x198] sm:$0xff]
      %v4055 = vld [vmem:[#allocation2 + $0x1a0] sm:$0xff]
      %v4056 = vld [vmem:[#allocation2 + $0x1a8] sm:$0xff]
      %v4057 = vld [vmem:[#allocation2 + $0x1b0] sm:$0xff]
      %v4058 = vld [vmem:[#allocation2 + $0x1b8] sm:$0xff]
      %v4059 = vld [vmem:[#allocation2 + $0x1c0] sm:$0xff]
      %v4060 = vld [vmem:[#allocation2 + $0x1c8] sm:$0xff]
      %v4061 = vld [vmem:[#allocation2 + $0x1d0] sm:$0xff]
      %v4062 = vld [vmem:[#allocation2 + $0x1d8] sm:$0xff]
      %v4063 = vld [vmem:[#allocation2 + $0x1e0] sm:$0xff]
      %v4064 = vld [vmem:[#allocation2 + $0x1e8] sm:$0xff]
      %v4065 = vld [vmem:[#allocation2 + $0x1f0] sm:$0xff]
      %v4066 = vld [vmem:[#allocation2 + $0x1f8] sm:$0xff]
      %4131 = vrot.lane.b32.xlu0 %v4003, 80
      %v4132 = vpop.permute.xlu0 %4131
      %4133 = vrot.lane.b32.xlu0 %v4004, 80
      %v4134 = vpop.permute.xlu0 %4133
      %4135 = vrot.lane.b32.xlu0 %v4005, 80
      %v4136 = vpop.permute.xlu0 %4135
      %4137 = vrot.lane.b32.xlu0 %v4006, 80
      %v4138 = vpop.permute.xlu0 %4137
      %4139 = vrot.lane.b32.xlu0 %v4007, 80
      %v4140 = vpop.permute.xlu0 %4139
      %4141 = vrot.lane.b32.xlu0 %v4008, 80
      %v4142 = vpop.permute.xlu0 %4141
      %4143 = vrot.lane.b32.xlu0 %v4009, 80
      %v4144 = vpop.permute.xlu0 %4143
      %4145 = vrot.lane.b32.xlu0 %v4010, 80
      %v4146 = vpop.permute.xlu0 %4145
      %4147 = vrot.lane.b32.xlu0 %v4011, 80
      %v4148 = vpop.permute.xlu0 %4147
      %4149 = vrot.lane.b32.xlu0 %v4012, 80
      %v4150 = vpop.permute.xlu0 %4149
      %4151 = vrot.lane.b32.xlu0 %v4013, 80
      %v4152 = vpop.permute.xlu0 %4151
      %4153 = vrot.lane.b32.xlu0 %v4014, 80
      %v4154 = vpop.permute.xlu0 %4153
      %4155 = vrot.lane.b32.xlu0 %v4015, 80
      %v4156 = vpop.permute.xlu0 %4155
      %4157 = vrot.lane.b32.xlu0 %v4016, 80
      %v4158 = vpop.permute.xlu0 %4157
      %4159 = vrot.lane.b32.xlu0 %v4017, 80
      %v4160 = vpop.permute.xlu0 %4159
      %4161 = vrot.lane.b32.xlu0 %v4018, 80
      %v4162 = vpop.permute.xlu0 %4161
      %4163 = vrot.lane.b32.xlu0 %v4019, 80
      %v4164 = vpop.permute.xlu0 %4163
      %4165 = vrot.lane.b32.xlu0 %v4020, 80
      %v4166 = vpop.permute.xlu0 %4165
      %4167 = vrot.lane.b32.xlu0 %v4021, 80
      %v4168 = vpop.permute.xlu0 %4167
      %4169 = vrot.lane.b32.xlu0 %v4022, 80
      %v4170 = vpop.permute.xlu0 %4169
      %4171 = vrot.lane.b32.xlu0 %v4023, 80
      %v4172 = vpop.permute.xlu0 %4171
      %4173 = vrot.lane.b32.xlu0 %v4024, 80
      %v4174 = vpop.permute.xlu0 %4173
      %4175 = vrot.lane.b32.xlu0 %v4025, 80
      %v4176 = vpop.permute.xlu0 %4175
      %4177 = vrot.lane.b32.xlu0 %v4026, 80
      %v4178 = vpop.permute.xlu0 %4177
      %4179 = vrot.lane.b32.xlu0 %v4027, 80
      %v4180 = vpop.permute.xlu0 %4179
      %4181 = vrot.lane.b32.xlu0 %v4028, 80
      %v4182 = vpop.permute.xlu0 %4181
      %4183 = vrot.lane.b32.xlu0 %v4029, 80
      %v4184 = vpop.permute.xlu0 %4183
      %4185 = vrot.lane.b32.xlu0 %v4030, 80
      %v4186 = vpop.permute.xlu0 %4185
      %4187 = vrot.lane.b32.xlu0 %v4031, 80
      %v4188 = vpop.permute.xlu0 %4187
      %4189 = vrot.lane.b32.xlu0 %v4032, 80
      %v4190 = vpop.permute.xlu0 %4189
      %4191 = vrot.lane.b32.xlu0 %v4033, 80
      %v4192 = vpop.permute.xlu0 %4191
      %4193 = vrot.lane.b32.xlu0 %v4034, 80
      %v4194 = vpop.permute.xlu0 %4193
      %4195 = vrot.lane.b32.xlu0 %v4035, 80
      %v4196 = vpop.permute.xlu0 %4195
      %4197 = vrot.lane.b32.xlu0 %v4036, 80
      %v4198 = vpop.permute.xlu0 %4197
      %4199 = vrot.lane.b32.xlu0 %v4037, 80
      %v4200 = vpop.permute.xlu0 %4199
      %4201 = vrot.lane.b32.xlu0 %v4038, 80
      %v4202 = vpop.permute.xlu0 %4201
      %4203 = vrot.lane.b32.xlu0 %v4039, 80
      %v4204 = vpop.permute.xlu0 %4203
      %4205 = vrot.lane.b32.xlu0 %v4040, 80
      %v4206 = vpop.permute.xlu0 %4205
      %4207 = vrot.lane.b32.xlu0 %v4041, 80
      %v4208 = vpop.permute.xlu0 %4207
      %4209 = vrot.lane.b32.xlu0 %v4042, 80
      %v4210 = vpop.permute.xlu0 %4209
      %4211 = vrot.lane.b32.xlu0 %v4043, 80
      %v4212 = vpop.permute.xlu0 %4211
      %4213 = vrot.lane.b32.xlu0 %v4044, 80
      %v4214 = vpop.permute.xlu0 %4213
      %4215 = vrot.lane.b32.xlu0 %v4045, 80
      %v4216 = vpop.permute.xlu0 %4215
      %4217 = vrot.lane.b32.xlu0 %v4046, 80
      %v4218 = vpop.permute.xlu0 %4217
      %4219 = vrot.lane.b32.xlu0 %v4047, 80
      %v4220 = vpop.permute.xlu0 %4219
      %4221 = vrot.lane.b32.xlu0 %v4048, 80
      %v4222 = vpop.permute.xlu0 %4221
      %4223 = vrot.lane.b32.xlu0 %v4049, 80
      %v4224 = vpop.permute.xlu0 %4223
      %4225 = vrot.lane.b32.xlu0 %v4050, 80
      %v4226 = vpop.permute.xlu0 %4225
      %4227 = vrot.lane.b32.xlu0 %v4051, 80
      %v4228 = vpop.permute.xlu0 %4227
      %4229 = vrot.lane.b32.xlu0 %v4052, 80
      %v4230 = vpop.permute.xlu0 %4229
      %4231 = vrot.lane.b32.xlu0 %v4053, 80
      %v4232 = vpop.permute.xlu0 %4231
      %4233 = vrot.lane.b32.xlu0 %v4054, 80
      %v4234 = vpop.permute.xlu0 %4233
      %4235 = vrot.lane.b32.xlu0 %v4055, 80
      %v4236 = vpop.permute.xlu0 %4235
      %4237 = vrot.lane.b32.xlu0 %v4056, 80
      %v4238 = vpop.permute.xlu0 %4237
      %4239 = vrot.lane.b32.xlu0 %v4057, 80
      %v4240 = vpop.permute.xlu0 %4239
      %4241 = vrot.lane.b32.xlu0 %v4058, 80
      %v4242 = vpop.permute.xlu0 %4241
      %4243 = vrot.lane.b32.xlu0 %v4059, 80
      %v4244 = vpop.permute.xlu0 %4243
      %4245 = vrot.lane.b32.xlu0 %v4060, 80
      %v4246 = vpop.permute.xlu0 %4245
      %4247 = vrot.lane.b32.xlu0 %v4061, 80
      %v4248 = vpop.permute.xlu0 %4247
      %4249 = vrot.lane.b32.xlu0 %v4062, 80
      %v4250 = vpop.permute.xlu0 %4249
      %4251 = vrot.lane.b32.xlu0 %v4063, 80
      %v4252 = vpop.permute.xlu0 %4251
      %4253 = vrot.lane.b32.xlu0 %v4064, 80
      %v4254 = vpop.permute.xlu0 %4253
      %4255 = vrot.lane.b32.xlu0 %v4065, 80
      %v4256 = vpop.permute.xlu0 %4255
      %4257 = vrot.lane.b32.xlu0 %v4066, 80
      %v4258 = vpop.permute.xlu0 %4257
      %s4323 = scalar_lea.vmem %s226, 128
      %4324 = vst.msk [vmem:[%s4323] sm:$0xff] %vm3040, %v4132
      %4325 = vst.msk [vmem:[%s4323 + $0x10] sm:$0xff] %vm3040, %v4134
      %4326 = vst.msk [vmem:[%s4323 + $0x20] sm:$0xff] %vm3040, %v4136
      %4327 = vst.msk [vmem:[%s4323 + $0x30] sm:$0xff] %vm3040, %v4138
      %4328 = vst.msk [vmem:[%s4323 + $0x40] sm:$0xff] %vm3040, %v4140
      %4329 = vst.msk [vmem:[%s4323 + $0x50] sm:$0xff] %vm3040, %v4142
      %4330 = vst.msk [vmem:[%s4323 + $0x60] sm:$0xff] %vm3040, %v4144
      %4331 = vst.msk [vmem:[%s4323 + $0x70] sm:$0xff] %vm3040, %v4146
      %4332 = vst.msk [vmem:[%s4323 + $0x100] sm:$0xff] %vm3040, %v4148
      %4333 = vst.msk [vmem:[%s4323 + $0x110] sm:$0xff] %vm3040, %v4150
      %4334 = vst.msk [vmem:[%s4323 + $0x120] sm:$0xff] %vm3040, %v4152
      %4335 = vst.msk [vmem:[%s4323 + $0x130] sm:$0xff] %vm3040, %v4154
      %4336 = vst.msk [vmem:[%s4323 + $0x140] sm:$0xff] %vm3040, %v4156
      %4337 = vst.msk [vmem:[%s4323 + $0x150] sm:$0xff] %vm3040, %v4158
      %4338 = vst.msk [vmem:[%s4323 + $0x160] sm:$0xff] %vm3040, %v4160
      %4339 = vst.msk [vmem:[%s4323 + $0x170] sm:$0xff] %vm3040, %v4162
      %4340 = vst.msk [vmem:[%s4323 + $0x200] sm:$0xff] %vm3040, %v4164
      %4341 = vst.msk [vmem:[%s4323 + $0x210] sm:$0xff] %vm3040, %v4166
      %4342 = vst.msk [vmem:[%s4323 + $0x220] sm:$0xff] %vm3040, %v4168
      %4343 = vst.msk [vmem:[%s4323 + $0x230] sm:$0xff] %vm3040, %v4170
      %4344 = vst.msk [vmem:[%s4323 + $0x240] sm:$0xff] %vm3040, %v4172
      %4345 = vst.msk [vmem:[%s4323 + $0x250] sm:$0xff] %vm3040, %v4174
      %4346 = vst.msk [vmem:[%s4323 + $0x260] sm:$0xff] %vm3040, %v4176
      %4347 = vst.msk [vmem:[%s4323 + $0x270] sm:$0xff] %vm3040, %v4178
      %4348 = vst.msk [vmem:[%s4323 + $0x300] sm:$0xff] %vm3040, %v4180
      %4349 = vst.msk [vmem:[%s4323 + $0x310] sm:$0xff] %vm3040, %v4182
      %4350 = vst.msk [vmem:[%s4323 + $0x320] sm:$0xff] %vm3040, %v4184
      %4351 = vst.msk [vmem:[%s4323 + $0x330] sm:$0xff] %vm3040, %v4186
      %4352 = vst.msk [vmem:[%s4323 + $0x340] sm:$0xff] %vm3040, %v4188
      %4353 = vst.msk [vmem:[%s4323 + $0x350] sm:$0xff] %vm3040, %v4190
      %4354 = vst.msk [vmem:[%s4323 + $0x360] sm:$0xff] %vm3040, %v4192
      %4355 = vst.msk [vmem:[%s4323 + $0x370] sm:$0xff] %vm3040, %v4194
      %4356 = vst.msk [vmem:[%s4323 + $0x400] sm:$0xff] %vm3040, %v4196
      %4357 = vst.msk [vmem:[%s4323 + $0x410] sm:$0xff] %vm3040, %v4198
      %4358 = vst.msk [vmem:[%s4323 + $0x420] sm:$0xff] %vm3040, %v4200
      %4359 = vst.msk [vmem:[%s4323 + $0x430] sm:$0xff] %vm3040, %v4202
      %4360 = vst.msk [vmem:[%s4323 + $0x440] sm:$0xff] %vm3040, %v4204
      %4361 = vst.msk [vmem:[%s4323 + $0x450] sm:$0xff] %vm3040, %v4206
      %4362 = vst.msk [vmem:[%s4323 + $0x460] sm:$0xff] %vm3040, %v4208
      %4363 = vst.msk [vmem:[%s4323 + $0x470] sm:$0xff] %vm3040, %v4210
      %4364 = vst.msk [vmem:[%s4323 + $0x500] sm:$0xff] %vm3040, %v4212
      %4365 = vst.msk [vmem:[%s4323 + $0x510] sm:$0xff] %vm3040, %v4214
      %4366 = vst.msk [vmem:[%s4323 + $0x520] sm:$0xff] %vm3040, %v4216
      %4367 = vst.msk [vmem:[%s4323 + $0x530] sm:$0xff] %vm3040, %v4218
      %4368 = vst.msk [vmem:[%s4323 + $0x540] sm:$0xff] %vm3040, %v4220
      %4369 = vst.msk [vmem:[%s4323 + $0x550] sm:$0xff] %vm3040, %v4222
      %4370 = vst.msk [vmem:[%s4323 + $0x560] sm:$0xff] %vm3040, %v4224
      %4371 = vst.msk [vmem:[%s4323 + $0x570] sm:$0xff] %vm3040, %v4226
      %4372 = vst.msk [vmem:[%s4323 + $0x600] sm:$0xff] %vm3040, %v4228
      %4373 = vst.msk [vmem:[%s4323 + $0x610] sm:$0xff] %vm3040, %v4230
      %4374 = vst.msk [vmem:[%s4323 + $0x620] sm:$0xff] %vm3040, %v4232
      %4375 = vst.msk [vmem:[%s4323 + $0x630] sm:$0xff] %vm3040, %v4234
      %4376 = vst.msk [vmem:[%s4323 + $0x640] sm:$0xff] %vm3040, %v4236
      %4377 = vst.msk [vmem:[%s4323 + $0x650] sm:$0xff] %vm3040, %v4238
      %4378 = vst.msk [vmem:[%s4323 + $0x660] sm:$0xff] %vm3040, %v4240
      %4379 = vst.msk [vmem:[%s4323 + $0x670] sm:$0xff] %vm3040, %v4242
      %4380 = vst.msk [vmem:[%s4323 + $0x700] sm:$0xff] %vm3040, %v4244
      %4381 = vst.msk [vmem:[%s4323 + $0x710] sm:$0xff] %vm3040, %v4246
      %4382 = vst.msk [vmem:[%s4323 + $0x720] sm:$0xff] %vm3040, %v4248
      %4383 = vst.msk [vmem:[%s4323 + $0x730] sm:$0xff] %vm3040, %v4250
      %4384 = vst.msk [vmem:[%s4323 + $0x740] sm:$0xff] %vm3040, %v4252
      %4385 = vst.msk [vmem:[%s4323 + $0x750] sm:$0xff] %vm3040, %v4254
      %4386 = vst.msk [vmem:[%s4323 + $0x760] sm:$0xff] %vm3040, %v4256
      %4387 = vst.msk [vmem:[%s4323 + $0x770] sm:$0xff] %vm3040, %v4258
      %v4388 = vld [vmem:[#allocation2] sm:$0xff]
      %v4389 = vld [vmem:[#allocation2 + $0x8] sm:$0xff]
      %v4390 = vld [vmem:[#allocation2 + $0x10] sm:$0xff]
      %v4391 = vld [vmem:[#allocation2 + $0x18] sm:$0xff]
      %v4392 = vld [vmem:[#allocation2 + $0x20] sm:$0xff]
      %v4393 = vld [vmem:[#allocation2 + $0x28] sm:$0xff]
      %v4394 = vld [vmem:[#allocation2 + $0x30] sm:$0xff]
      %v4395 = vld [vmem:[#allocation2 + $0x38] sm:$0xff]
      %v4396 = vld [vmem:[#allocation2 + $0x40] sm:$0xff]
      %v4397 = vld [vmem:[#allocation2 + $0x48] sm:$0xff]
      %v4398 = vld [vmem:[#allocation2 + $0x50] sm:$0xff]
      %v4399 = vld [vmem:[#allocation2 + $0x58] sm:$0xff]
      %v4400 = vld [vmem:[#allocation2 + $0x60] sm:$0xff]
      %v4401 = vld [vmem:[#allocation2 + $0x68] sm:$0xff]
      %v4402 = vld [vmem:[#allocation2 + $0x70] sm:$0xff]
      %v4403 = vld [vmem:[#allocation2 + $0x78] sm:$0xff]
      %v4404 = vld [vmem:[#allocation2 + $0x80] sm:$0xff]
      %v4405 = vld [vmem:[#allocation2 + $0x88] sm:$0xff]
      %v4406 = vld [vmem:[#allocation2 + $0x90] sm:$0xff]
      %v4407 = vld [vmem:[#allocation2 + $0x98] sm:$0xff]
      %v4408 = vld [vmem:[#allocation2 + $0xa0] sm:$0xff]
      %v4409 = vld [vmem:[#allocation2 + $0xa8] sm:$0xff]
      %v4410 = vld [vmem:[#allocation2 + $0xb0] sm:$0xff]
      %v4411 = vld [vmem:[#allocation2 + $0xb8] sm:$0xff]
      %v4412 = vld [vmem:[#allocation2 + $0xc0] sm:$0xff]
      %v4413 = vld [vmem:[#allocation2 + $0xc8] sm:$0xff]
      %v4414 = vld [vmem:[#allocation2 + $0xd0] sm:$0xff]
      %v4415 = vld [vmem:[#allocation2 + $0xd8] sm:$0xff]
      %v4416 = vld [vmem:[#allocation2 + $0xe0] sm:$0xff]
      %v4417 = vld [vmem:[#allocation2 + $0xe8] sm:$0xff]
      %v4418 = vld [vmem:[#allocation2 + $0xf0] sm:$0xff]
      %v4419 = vld [vmem:[#allocation2 + $0xf8] sm:$0xff]
      %v4420 = vld [vmem:[#allocation2 + $0x100] sm:$0xff]
      %v4421 = vld [vmem:[#allocation2 + $0x108] sm:$0xff]
      %v4422 = vld [vmem:[#allocation2 + $0x110] sm:$0xff]
      %v4423 = vld [vmem:[#allocation2 + $0x118] sm:$0xff]
      %v4424 = vld [vmem:[#allocation2 + $0x120] sm:$0xff]
      %v4425 = vld [vmem:[#allocation2 + $0x128] sm:$0xff]
      %v4426 = vld [vmem:[#allocation2 + $0x130] sm:$0xff]
      %v4427 = vld [vmem:[#allocation2 + $0x138] sm:$0xff]
      %v4428 = vld [vmem:[#allocation2 + $0x140] sm:$0xff]
      %v4429 = vld [vmem:[#allocation2 + $0x148] sm:$0xff]
      %v4430 = vld [vmem:[#allocation2 + $0x150] sm:$0xff]
      %v4431 = vld [vmem:[#allocation2 + $0x158] sm:$0xff]
      %v4432 = vld [vmem:[#allocation2 + $0x160] sm:$0xff]
      %v4433 = vld [vmem:[#allocation2 + $0x168] sm:$0xff]
      %v4434 = vld [vmem:[#allocation2 + $0x170] sm:$0xff]
      %v4435 = vld [vmem:[#allocation2 + $0x178] sm:$0xff]
      %v4436 = vld [vmem:[#allocation2 + $0x180] sm:$0xff]
      %v4437 = vld [vmem:[#allocation2 + $0x188] sm:$0xff]
      %v4438 = vld [vmem:[#allocation2 + $0x190] sm:$0xff]
      %v4439 = vld [vmem:[#allocation2 + $0x198] sm:$0xff]
      %v4440 = vld [vmem:[#allocation2 + $0x1a0] sm:$0xff]
      %v4441 = vld [vmem:[#allocation2 + $0x1a8] sm:$0xff]
      %v4442 = vld [vmem:[#allocation2 + $0x1b0] sm:$0xff]
      %v4443 = vld [vmem:[#allocation2 + $0x1b8] sm:$0xff]
      %v4444 = vld [vmem:[#allocation2 + $0x1c0] sm:$0xff]
      %v4445 = vld [vmem:[#allocation2 + $0x1c8] sm:$0xff]
      %v4446 = vld [vmem:[#allocation2 + $0x1d0] sm:$0xff]
      %v4447 = vld [vmem:[#allocation2 + $0x1d8] sm:$0xff]
      %v4448 = vld [vmem:[#allocation2 + $0x1e0] sm:$0xff]
      %v4449 = vld [vmem:[#allocation2 + $0x1e8] sm:$0xff]
      %v4450 = vld [vmem:[#allocation2 + $0x1f0] sm:$0xff]
      %v4451 = vld [vmem:[#allocation2 + $0x1f8] sm:$0xff]
      %4516 = vrot.lane.b32.xlu0 %v4388, 96
      %v4517 = vpop.permute.xlu0 %4516
      %4518 = vrot.lane.b32.xlu0 %v4389, 96
      %v4519 = vpop.permute.xlu0 %4518
      %4520 = vrot.lane.b32.xlu0 %v4390, 96
      %v4521 = vpop.permute.xlu0 %4520
      %4522 = vrot.lane.b32.xlu0 %v4391, 96
      %v4523 = vpop.permute.xlu0 %4522
      %4524 = vrot.lane.b32.xlu0 %v4392, 96
      %v4525 = vpop.permute.xlu0 %4524
      %4526 = vrot.lane.b32.xlu0 %v4393, 96
      %v4527 = vpop.permute.xlu0 %4526
      %4528 = vrot.lane.b32.xlu0 %v4394, 96
      %v4529 = vpop.permute.xlu0 %4528
      %4530 = vrot.lane.b32.xlu0 %v4395, 96
      %v4531 = vpop.permute.xlu0 %4530
      %4532 = vrot.lane.b32.xlu0 %v4396, 96
      %v4533 = vpop.permute.xlu0 %4532
      %4534 = vrot.lane.b32.xlu0 %v4397, 96
      %v4535 = vpop.permute.xlu0 %4534
      %4536 = vrot.lane.b32.xlu0 %v4398, 96
      %v4537 = vpop.permute.xlu0 %4536
      %4538 = vrot.lane.b32.xlu0 %v4399, 96
      %v4539 = vpop.permute.xlu0 %4538
      %4540 = vrot.lane.b32.xlu0 %v4400, 96
      %v4541 = vpop.permute.xlu0 %4540
      %4542 = vrot.lane.b32.xlu0 %v4401, 96
      %v4543 = vpop.permute.xlu0 %4542
      %4544 = vrot.lane.b32.xlu0 %v4402, 96
      %v4545 = vpop.permute.xlu0 %4544
      %4546 = vrot.lane.b32.xlu0 %v4403, 96
      %v4547 = vpop.permute.xlu0 %4546
      %4548 = vrot.lane.b32.xlu0 %v4404, 96
      %v4549 = vpop.permute.xlu0 %4548
      %4550 = vrot.lane.b32.xlu0 %v4405, 96
      %v4551 = vpop.permute.xlu0 %4550
      %4552 = vrot.lane.b32.xlu0 %v4406, 96
      %v4553 = vpop.permute.xlu0 %4552
      %4554 = vrot.lane.b32.xlu0 %v4407, 96
      %v4555 = vpop.permute.xlu0 %4554
      %4556 = vrot.lane.b32.xlu0 %v4408, 96
      %v4557 = vpop.permute.xlu0 %4556
      %4558 = vrot.lane.b32.xlu0 %v4409, 96
      %v4559 = vpop.permute.xlu0 %4558
      %4560 = vrot.lane.b32.xlu0 %v4410, 96
      %v4561 = vpop.permute.xlu0 %4560
      %4562 = vrot.lane.b32.xlu0 %v4411, 96
      %v4563 = vpop.permute.xlu0 %4562
      %4564 = vrot.lane.b32.xlu0 %v4412, 96
      %v4565 = vpop.permute.xlu0 %4564
      %4566 = vrot.lane.b32.xlu0 %v4413, 96
      %v4567 = vpop.permute.xlu0 %4566
      %4568 = vrot.lane.b32.xlu0 %v4414, 96
      %v4569 = vpop.permute.xlu0 %4568
      %4570 = vrot.lane.b32.xlu0 %v4415, 96
      %v4571 = vpop.permute.xlu0 %4570
      %4572 = vrot.lane.b32.xlu0 %v4416, 96
      %v4573 = vpop.permute.xlu0 %4572
      %4574 = vrot.lane.b32.xlu0 %v4417, 96
      %v4575 = vpop.permute.xlu0 %4574
      %4576 = vrot.lane.b32.xlu0 %v4418, 96
      %v4577 = vpop.permute.xlu0 %4576
      %4578 = vrot.lane.b32.xlu0 %v4419, 96
      %v4579 = vpop.permute.xlu0 %4578
      %4580 = vrot.lane.b32.xlu0 %v4420, 96
      %v4581 = vpop.permute.xlu0 %4580
      %4582 = vrot.lane.b32.xlu0 %v4421, 96
      %v4583 = vpop.permute.xlu0 %4582
      %4584 = vrot.lane.b32.xlu0 %v4422, 96
      %v4585 = vpop.permute.xlu0 %4584
      %4586 = vrot.lane.b32.xlu0 %v4423, 96
      %v4587 = vpop.permute.xlu0 %4586
      %4588 = vrot.lane.b32.xlu0 %v4424, 96
      %v4589 = vpop.permute.xlu0 %4588
      %4590 = vrot.lane.b32.xlu0 %v4425, 96
      %v4591 = vpop.permute.xlu0 %4590
      %4592 = vrot.lane.b32.xlu0 %v4426, 96
      %v4593 = vpop.permute.xlu0 %4592
      %4594 = vrot.lane.b32.xlu0 %v4427, 96
      %v4595 = vpop.permute.xlu0 %4594
      %4596 = vrot.lane.b32.xlu0 %v4428, 96
      %v4597 = vpop.permute.xlu0 %4596
      %4598 = vrot.lane.b32.xlu0 %v4429, 96
      %v4599 = vpop.permute.xlu0 %4598
      %4600 = vrot.lane.b32.xlu0 %v4430, 96
      %v4601 = vpop.permute.xlu0 %4600
      %4602 = vrot.lane.b32.xlu0 %v4431, 96
      %v4603 = vpop.permute.xlu0 %4602
      %4604 = vrot.lane.b32.xlu0 %v4432, 96
      %v4605 = vpop.permute.xlu0 %4604
      %4606 = vrot.lane.b32.xlu0 %v4433, 96
      %v4607 = vpop.permute.xlu0 %4606
      %4608 = vrot.lane.b32.xlu0 %v4434, 96
      %v4609 = vpop.permute.xlu0 %4608
      %4610 = vrot.lane.b32.xlu0 %v4435, 96
      %v4611 = vpop.permute.xlu0 %4610
      %4612 = vrot.lane.b32.xlu0 %v4436, 96
      %v4613 = vpop.permute.xlu0 %4612
      %4614 = vrot.lane.b32.xlu0 %v4437, 96
      %v4615 = vpop.permute.xlu0 %4614
      %4616 = vrot.lane.b32.xlu0 %v4438, 96
      %v4617 = vpop.permute.xlu0 %4616
      %4618 = vrot.lane.b32.xlu0 %v4439, 96
      %v4619 = vpop.permute.xlu0 %4618
      %4620 = vrot.lane.b32.xlu0 %v4440, 96
      %v4621 = vpop.permute.xlu0 %4620
      %4622 = vrot.lane.b32.xlu0 %v4441, 96
      %v4623 = vpop.permute.xlu0 %4622
      %4624 = vrot.lane.b32.xlu0 %v4442, 96
      %v4625 = vpop.permute.xlu0 %4624
      %4626 = vrot.lane.b32.xlu0 %v4443, 96
      %v4627 = vpop.permute.xlu0 %4626
      %4628 = vrot.lane.b32.xlu0 %v4444, 96
      %v4629 = vpop.permute.xlu0 %4628
      %4630 = vrot.lane.b32.xlu0 %v4445, 96
      %v4631 = vpop.permute.xlu0 %4630
      %4632 = vrot.lane.b32.xlu0 %v4446, 96
      %v4633 = vpop.permute.xlu0 %4632
      %4634 = vrot.lane.b32.xlu0 %v4447, 96
      %v4635 = vpop.permute.xlu0 %4634
      %4636 = vrot.lane.b32.xlu0 %v4448, 96
      %v4637 = vpop.permute.xlu0 %4636
      %4638 = vrot.lane.b32.xlu0 %v4449, 96
      %v4639 = vpop.permute.xlu0 %4638
      %4640 = vrot.lane.b32.xlu0 %v4450, 96
      %v4641 = vpop.permute.xlu0 %4640
      %4642 = vrot.lane.b32.xlu0 %v4451, 96
      %v4643 = vpop.permute.xlu0 %4642
      %4708 = vst.msk [vmem:[%s4323] sm:$0xff] %vm3425, %v4517
      %4709 = vst.msk [vmem:[%s4323 + $0x10] sm:$0xff] %vm3425, %v4519
      %4710 = vst.msk [vmem:[%s4323 + $0x20] sm:$0xff] %vm3425, %v4521
      %4711 = vst.msk [vmem:[%s4323 + $0x30] sm:$0xff] %vm3425, %v4523
      %4712 = vst.msk [vmem:[%s4323 + $0x40] sm:$0xff] %vm3425, %v4525
      %4713 = vst.msk [vmem:[%s4323 + $0x50] sm:$0xff] %vm3425, %v4527
      %4714 = vst.msk [vmem:[%s4323 + $0x60] sm:$0xff] %vm3425, %v4529
      %4715 = vst.msk [vmem:[%s4323 + $0x70] sm:$0xff] %vm3425, %v4531
      %4716 = vst.msk [vmem:[%s4323 + $0x100] sm:$0xff] %vm3425, %v4533
      %4717 = vst.msk [vmem:[%s4323 + $0x110] sm:$0xff] %vm3425, %v4535
      %4718 = vst.msk [vmem:[%s4323 + $0x120] sm:$0xff] %vm3425, %v4537
      %4719 = vst.msk [vmem:[%s4323 + $0x130] sm:$0xff] %vm3425, %v4539
      %4720 = vst.msk [vmem:[%s4323 + $0x140] sm:$0xff] %vm3425, %v4541
      %4721 = vst.msk [vmem:[%s4323 + $0x150] sm:$0xff] %vm3425, %v4543
      %4722 = vst.msk [vmem:[%s4323 + $0x160] sm:$0xff] %vm3425, %v4545
      %4723 = vst.msk [vmem:[%s4323 + $0x170] sm:$0xff] %vm3425, %v4547
      %4724 = vst.msk [vmem:[%s4323 + $0x200] sm:$0xff] %vm3425, %v4549
      %4725 = vst.msk [vmem:[%s4323 + $0x210] sm:$0xff] %vm3425, %v4551
      %4726 = vst.msk [vmem:[%s4323 + $0x220] sm:$0xff] %vm3425, %v4553
      %4727 = vst.msk [vmem:[%s4323 + $0x230] sm:$0xff] %vm3425, %v4555
      %4728 = vst.msk [vmem:[%s4323 + $0x240] sm:$0xff] %vm3425, %v4557
      %4729 = vst.msk [vmem:[%s4323 + $0x250] sm:$0xff] %vm3425, %v4559
      %4730 = vst.msk [vmem:[%s4323 + $0x260] sm:$0xff] %vm3425, %v4561
      %4731 = vst.msk [vmem:[%s4323 + $0x270] sm:$0xff] %vm3425, %v4563
      %4732 = vst.msk [vmem:[%s4323 + $0x300] sm:$0xff] %vm3425, %v4565
      %4733 = vst.msk [vmem:[%s4323 + $0x310] sm:$0xff] %vm3425, %v4567
      %4734 = vst.msk [vmem:[%s4323 + $0x320] sm:$0xff] %vm3425, %v4569
      %4735 = vst.msk [vmem:[%s4323 + $0x330] sm:$0xff] %vm3425, %v4571
      %4736 = vst.msk [vmem:[%s4323 + $0x340] sm:$0xff] %vm3425, %v4573
      %4737 = vst.msk [vmem:[%s4323 + $0x350] sm:$0xff] %vm3425, %v4575
      %4738 = vst.msk [vmem:[%s4323 + $0x360] sm:$0xff] %vm3425, %v4577
      %4739 = vst.msk [vmem:[%s4323 + $0x370] sm:$0xff] %vm3425, %v4579
      %4740 = vst.msk [vmem:[%s4323 + $0x400] sm:$0xff] %vm3425, %v4581
      %4741 = vst.msk [vmem:[%s4323 + $0x410] sm:$0xff] %vm3425, %v4583
      %4742 = vst.msk [vmem:[%s4323 + $0x420] sm:$0xff] %vm3425, %v4585
      %4743 = vst.msk [vmem:[%s4323 + $0x430] sm:$0xff] %vm3425, %v4587
      %4744 = vst.msk [vmem:[%s4323 + $0x440] sm:$0xff] %vm3425, %v4589
      %4745 = vst.msk [vmem:[%s4323 + $0x450] sm:$0xff] %vm3425, %v4591
      %4746 = vst.msk [vmem:[%s4323 + $0x460] sm:$0xff] %vm3425, %v4593
      %4747 = vst.msk [vmem:[%s4323 + $0x470] sm:$0xff] %vm3425, %v4595
      %4748 = vst.msk [vmem:[%s4323 + $0x500] sm:$0xff] %vm3425, %v4597
      %4749 = vst.msk [vmem:[%s4323 + $0x510] sm:$0xff] %vm3425, %v4599
      %4750 = vst.msk [vmem:[%s4323 + $0x520] sm:$0xff] %vm3425, %v4601
      %4751 = vst.msk [vmem:[%s4323 + $0x530] sm:$0xff] %vm3425, %v4603
      %4752 = vst.msk [vmem:[%s4323 + $0x540] sm:$0xff] %vm3425, %v4605
      %4753 = vst.msk [vmem:[%s4323 + $0x550] sm:$0xff] %vm3425, %v4607
      %4754 = vst.msk [vmem:[%s4323 + $0x560] sm:$0xff] %vm3425, %v4609
      %4755 = vst.msk [vmem:[%s4323 + $0x570] sm:$0xff] %vm3425, %v4611
      %4756 = vst.msk [vmem:[%s4323 + $0x600] sm:$0xff] %vm3425, %v4613
      %4757 = vst.msk [vmem:[%s4323 + $0x610] sm:$0xff] %vm3425, %v4615
      %4758 = vst.msk [vmem:[%s4323 + $0x620] sm:$0xff] %vm3425, %v4617
      %4759 = vst.msk [vmem:[%s4323 + $0x630] sm:$0xff] %vm3425, %v4619
      %4760 = vst.msk [vmem:[%s4323 + $0x640] sm:$0xff] %vm3425, %v4621
      %4761 = vst.msk [vmem:[%s4323 + $0x650] sm:$0xff] %vm3425, %v4623
      %4762 = vst.msk [vmem:[%s4323 + $0x660] sm:$0xff] %vm3425, %v4625
      %4763 = vst.msk [vmem:[%s4323 + $0x670] sm:$0xff] %vm3425, %v4627
      %4764 = vst.msk [vmem:[%s4323 + $0x700] sm:$0xff] %vm3425, %v4629
      %4765 = vst.msk [vmem:[%s4323 + $0x710] sm:$0xff] %vm3425, %v4631
      %4766 = vst.msk [vmem:[%s4323 + $0x720] sm:$0xff] %vm3425, %v4633
      %4767 = vst.msk [vmem:[%s4323 + $0x730] sm:$0xff] %vm3425, %v4635
      %4768 = vst.msk [vmem:[%s4323 + $0x740] sm:$0xff] %vm3425, %v4637
      %4769 = vst.msk [vmem:[%s4323 + $0x750] sm:$0xff] %vm3425, %v4639
      %4770 = vst.msk [vmem:[%s4323 + $0x760] sm:$0xff] %vm3425, %v4641
      %4771 = vst.msk [vmem:[%s4323 + $0x770] sm:$0xff] %vm3425, %v4643
      %v4772 = vld [vmem:[#allocation2] sm:$0xff]
      %v4773 = vld [vmem:[#allocation2 + $0x8] sm:$0xff]
      %v4774 = vld [vmem:[#allocation2 + $0x10] sm:$0xff]
      %v4775 = vld [vmem:[#allocation2 + $0x18] sm:$0xff]
      %v4776 = vld [vmem:[#allocation2 + $0x20] sm:$0xff]
      %v4777 = vld [vmem:[#allocation2 + $0x28] sm:$0xff]
      %v4778 = vld [vmem:[#allocation2 + $0x30] sm:$0xff]
      %v4779 = vld [vmem:[#allocation2 + $0x38] sm:$0xff]
      %v4780 = vld [vmem:[#allocation2 + $0x40] sm:$0xff]
      %v4781 = vld [vmem:[#allocation2 + $0x48] sm:$0xff]
      %v4782 = vld [vmem:[#allocation2 + $0x50] sm:$0xff]
      %v4783 = vld [vmem:[#allocation2 + $0x58] sm:$0xff]
      %v4784 = vld [vmem:[#allocation2 + $0x60] sm:$0xff]
      %v4785 = vld [vmem:[#allocation2 + $0x68] sm:$0xff]
      %v4786 = vld [vmem:[#allocation2 + $0x70] sm:$0xff]
      %v4787 = vld [vmem:[#allocation2 + $0x78] sm:$0xff]
      %v4788 = vld [vmem:[#allocation2 + $0x80] sm:$0xff]
      %v4789 = vld [vmem:[#allocation2 + $0x88] sm:$0xff]
      %v4790 = vld [vmem:[#allocation2 + $0x90] sm:$0xff]
      %v4791 = vld [vmem:[#allocation2 + $0x98] sm:$0xff]
      %v4792 = vld [vmem:[#allocation2 + $0xa0] sm:$0xff]
      %v4793 = vld [vmem:[#allocation2 + $0xa8] sm:$0xff]
      %v4794 = vld [vmem:[#allocation2 + $0xb0] sm:$0xff]
      %v4795 = vld [vmem:[#allocation2 + $0xb8] sm:$0xff]
      %v4796 = vld [vmem:[#allocation2 + $0xc0] sm:$0xff]
      %v4797 = vld [vmem:[#allocation2 + $0xc8] sm:$0xff]
      %v4798 = vld [vmem:[#allocation2 + $0xd0] sm:$0xff]
      %v4799 = vld [vmem:[#allocation2 + $0xd8] sm:$0xff]
      %v4800 = vld [vmem:[#allocation2 + $0xe0] sm:$0xff]
      %v4801 = vld [vmem:[#allocation2 + $0xe8] sm:$0xff]
      %v4802 = vld [vmem:[#allocation2 + $0xf0] sm:$0xff]
      %v4803 = vld [vmem:[#allocation2 + $0xf8] sm:$0xff]
      %v4804 = vld [vmem:[#allocation2 + $0x100] sm:$0xff]
      %v4805 = vld [vmem:[#allocation2 + $0x108] sm:$0xff]
      %v4806 = vld [vmem:[#allocation2 + $0x110] sm:$0xff]
      %v4807 = vld [vmem:[#allocation2 + $0x118] sm:$0xff]
      %v4808 = vld [vmem:[#allocation2 + $0x120] sm:$0xff]
      %v4809 = vld [vmem:[#allocation2 + $0x128] sm:$0xff]
      %v4810 = vld [vmem:[#allocation2 + $0x130] sm:$0xff]
      %v4811 = vld [vmem:[#allocation2 + $0x138] sm:$0xff]
      %v4812 = vld [vmem:[#allocation2 + $0x140] sm:$0xff]
      %v4813 = vld [vmem:[#allocation2 + $0x148] sm:$0xff]
      %v4814 = vld [vmem:[#allocation2 + $0x150] sm:$0xff]
      %v4815 = vld [vmem:[#allocation2 + $0x158] sm:$0xff]
      %v4816 = vld [vmem:[#allocation2 + $0x160] sm:$0xff]
      %v4817 = vld [vmem:[#allocation2 + $0x168] sm:$0xff]
      %v4818 = vld [vmem:[#allocation2 + $0x170] sm:$0xff]
      %v4819 = vld [vmem:[#allocation2 + $0x178] sm:$0xff]
      %v4820 = vld [vmem:[#allocation2 + $0x180] sm:$0xff]
      %v4821 = vld [vmem:[#allocation2 + $0x188] sm:$0xff]
      %v4822 = vld [vmem:[#allocation2 + $0x190] sm:$0xff]
      %v4823 = vld [vmem:[#allocation2 + $0x198] sm:$0xff]
      %v4824 = vld [vmem:[#allocation2 + $0x1a0] sm:$0xff]
      %v4825 = vld [vmem:[#allocation2 + $0x1a8] sm:$0xff]
      %v4826 = vld [vmem:[#allocation2 + $0x1b0] sm:$0xff]
      %v4827 = vld [vmem:[#allocation2 + $0x1b8] sm:$0xff]
      %v4828 = vld [vmem:[#allocation2 + $0x1c0] sm:$0xff]
      %v4829 = vld [vmem:[#allocation2 + $0x1c8] sm:$0xff]
      %v4830 = vld [vmem:[#allocation2 + $0x1d0] sm:$0xff]
      %v4831 = vld [vmem:[#allocation2 + $0x1d8] sm:$0xff]
      %v4832 = vld [vmem:[#allocation2 + $0x1e0] sm:$0xff]
      %v4833 = vld [vmem:[#allocation2 + $0x1e8] sm:$0xff]
      %v4834 = vld [vmem:[#allocation2 + $0x1f0] sm:$0xff]
      %v4835 = vld [vmem:[#allocation2 + $0x1f8] sm:$0xff]
      %4900 = vrot.lane.b32.xlu0 %v4772, 48
      %v4901 = vpop.permute.xlu0 %4900
      %4902 = vrot.lane.b32.xlu0 %v4773, 48
      %v4903 = vpop.permute.xlu0 %4902
      %4904 = vrot.lane.b32.xlu0 %v4774, 48
      %v4905 = vpop.permute.xlu0 %4904
      %4906 = vrot.lane.b32.xlu0 %v4775, 48
      %v4907 = vpop.permute.xlu0 %4906
      %4908 = vrot.lane.b32.xlu0 %v4776, 48
      %v4909 = vpop.permute.xlu0 %4908
      %4910 = vrot.lane.b32.xlu0 %v4777, 48
      %v4911 = vpop.permute.xlu0 %4910
      %4912 = vrot.lane.b32.xlu0 %v4778, 48
      %v4913 = vpop.permute.xlu0 %4912
      %4914 = vrot.lane.b32.xlu0 %v4779, 48
      %v4915 = vpop.permute.xlu0 %4914
      %4916 = vrot.lane.b32.xlu0 %v4780, 48
      %v4917 = vpop.permute.xlu0 %4916
      %4918 = vrot.lane.b32.xlu0 %v4781, 48
      %v4919 = vpop.permute.xlu0 %4918
      %4920 = vrot.lane.b32.xlu0 %v4782, 48
      %v4921 = vpop.permute.xlu0 %4920
      %4922 = vrot.lane.b32.xlu0 %v4783, 48
      %v4923 = vpop.permute.xlu0 %4922
      %4924 = vrot.lane.b32.xlu0 %v4784, 48
      %v4925 = vpop.permute.xlu0 %4924
      %4926 = vrot.lane.b32.xlu0 %v4785, 48
      %v4927 = vpop.permute.xlu0 %4926
      %4928 = vrot.lane.b32.xlu0 %v4786, 48
      %v4929 = vpop.permute.xlu0 %4928
      %4930 = vrot.lane.b32.xlu0 %v4787, 48
      %v4931 = vpop.permute.xlu0 %4930
      %4932 = vrot.lane.b32.xlu0 %v4788, 48
      %v4933 = vpop.permute.xlu0 %4932
      %4934 = vrot.lane.b32.xlu0 %v4789, 48
      %v4935 = vpop.permute.xlu0 %4934
      %4936 = vrot.lane.b32.xlu0 %v4790, 48
      %v4937 = vpop.permute.xlu0 %4936
      %4938 = vrot.lane.b32.xlu0 %v4791, 48
      %v4939 = vpop.permute.xlu0 %4938
      %4940 = vrot.lane.b32.xlu0 %v4792, 48
      %v4941 = vpop.permute.xlu0 %4940
      %4942 = vrot.lane.b32.xlu0 %v4793, 48
      %v4943 = vpop.permute.xlu0 %4942
      %4944 = vrot.lane.b32.xlu0 %v4794, 48
      %v4945 = vpop.permute.xlu0 %4944
      %4946 = vrot.lane.b32.xlu0 %v4795, 48
      %v4947 = vpop.permute.xlu0 %4946
      %4948 = vrot.lane.b32.xlu0 %v4796, 48
      %v4949 = vpop.permute.xlu0 %4948
      %4950 = vrot.lane.b32.xlu0 %v4797, 48
      %v4951 = vpop.permute.xlu0 %4950
      %4952 = vrot.lane.b32.xlu0 %v4798, 48
      %v4953 = vpop.permute.xlu0 %4952
      %4954 = vrot.lane.b32.xlu0 %v4799, 48
      %v4955 = vpop.permute.xlu0 %4954
      %4956 = vrot.lane.b32.xlu0 %v4800, 48
      %v4957 = vpop.permute.xlu0 %4956
      %4958 = vrot.lane.b32.xlu0 %v4801, 48
      %v4959 = vpop.permute.xlu0 %4958
      %4960 = vrot.lane.b32.xlu0 %v4802, 48
      %v4961 = vpop.permute.xlu0 %4960
      %4962 = vrot.lane.b32.xlu0 %v4803, 48
      %v4963 = vpop.permute.xlu0 %4962
      %4964 = vrot.lane.b32.xlu0 %v4804, 48
      %v4965 = vpop.permute.xlu0 %4964
      %4966 = vrot.lane.b32.xlu0 %v4805, 48
      %v4967 = vpop.permute.xlu0 %4966
      %4968 = vrot.lane.b32.xlu0 %v4806, 48
      %v4969 = vpop.permute.xlu0 %4968
      %4970 = vrot.lane.b32.xlu0 %v4807, 48
      %v4971 = vpop.permute.xlu0 %4970
      %4972 = vrot.lane.b32.xlu0 %v4808, 48
      %v4973 = vpop.permute.xlu0 %4972
      %4974 = vrot.lane.b32.xlu0 %v4809, 48
      %v4975 = vpop.permute.xlu0 %4974
      %4976 = vrot.lane.b32.xlu0 %v4810, 48
      %v4977 = vpop.permute.xlu0 %4976
      %4978 = vrot.lane.b32.xlu0 %v4811, 48
      %v4979 = vpop.permute.xlu0 %4978
      %4980 = vrot.lane.b32.xlu0 %v4812, 48
      %v4981 = vpop.permute.xlu0 %4980
      %4982 = vrot.lane.b32.xlu0 %v4813, 48
      %v4983 = vpop.permute.xlu0 %4982
      %4984 = vrot.lane.b32.xlu0 %v4814, 48
      %v4985 = vpop.permute.xlu0 %4984
      %4986 = vrot.lane.b32.xlu0 %v4815, 48
      %v4987 = vpop.permute.xlu0 %4986
      %4988 = vrot.lane.b32.xlu0 %v4816, 48
      %v4989 = vpop.permute.xlu0 %4988
      %4990 = vrot.lane.b32.xlu0 %v4817, 48
      %v4991 = vpop.permute.xlu0 %4990
      %4992 = vrot.lane.b32.xlu0 %v4818, 48
      %v4993 = vpop.permute.xlu0 %4992
      %4994 = vrot.lane.b32.xlu0 %v4819, 48
      %v4995 = vpop.permute.xlu0 %4994
      %4996 = vrot.lane.b32.xlu0 %v4820, 48
      %v4997 = vpop.permute.xlu0 %4996
      %4998 = vrot.lane.b32.xlu0 %v4821, 48
      %v4999 = vpop.permute.xlu0 %4998
      %5000 = vrot.lane.b32.xlu0 %v4822, 48
      %v5001 = vpop.permute.xlu0 %5000
      %5002 = vrot.lane.b32.xlu0 %v4823, 48
      %v5003 = vpop.permute.xlu0 %5002
      %5004 = vrot.lane.b32.xlu0 %v4824, 48
      %v5005 = vpop.permute.xlu0 %5004
      %5006 = vrot.lane.b32.xlu0 %v4825, 48
      %v5007 = vpop.permute.xlu0 %5006
      %5008 = vrot.lane.b32.xlu0 %v4826, 48
      %v5009 = vpop.permute.xlu0 %5008
      %5010 = vrot.lane.b32.xlu0 %v4827, 48
      %v5011 = vpop.permute.xlu0 %5010
      %5012 = vrot.lane.b32.xlu0 %v4828, 48
      %v5013 = vpop.permute.xlu0 %5012
      %5014 = vrot.lane.b32.xlu0 %v4829, 48
      %v5015 = vpop.permute.xlu0 %5014
      %5016 = vrot.lane.b32.xlu0 %v4830, 48
      %v5017 = vpop.permute.xlu0 %5016
      %5018 = vrot.lane.b32.xlu0 %v4831, 48
      %v5019 = vpop.permute.xlu0 %5018
      %5020 = vrot.lane.b32.xlu0 %v4832, 48
      %v5021 = vpop.permute.xlu0 %5020
      %5022 = vrot.lane.b32.xlu0 %v4833, 48
      %v5023 = vpop.permute.xlu0 %5022
      %5024 = vrot.lane.b32.xlu0 %v4834, 48
      %v5025 = vpop.permute.xlu0 %5024
      %5026 = vrot.lane.b32.xlu0 %v4835, 48
      %v5027 = vpop.permute.xlu0 %5026
      %s5092 = scalar_lea.vmem %s226, 136
      %5093 = vst.msk [vmem:[%s5092] sm:$0xff] %vm3040, %v4901
      %5094 = vst.msk [vmem:[%s5092 + $0x10] sm:$0xff] %vm3040, %v4903
      %5095 = vst.msk [vmem:[%s5092 + $0x20] sm:$0xff] %vm3040, %v4905
      %5096 = vst.msk [vmem:[%s5092 + $0x30] sm:$0xff] %vm3040, %v4907
      %5097 = vst.msk [vmem:[%s5092 + $0x40] sm:$0xff] %vm3040, %v4909
      %5098 = vst.msk [vmem:[%s5092 + $0x50] sm:$0xff] %vm3040, %v4911
      %5099 = vst.msk [vmem:[%s5092 + $0x60] sm:$0xff] %vm3040, %v4913
      %5100 = vst.msk [vmem:[%s5092 + $0x70] sm:$0xff] %vm3040, %v4915
      %5101 = vst.msk [vmem:[%s5092 + $0x100] sm:$0xff] %vm3040, %v4917
      %5102 = vst.msk [vmem:[%s5092 + $0x110] sm:$0xff] %vm3040, %v4919
      %5103 = vst.msk [vmem:[%s5092 + $0x120] sm:$0xff] %vm3040, %v4921
      %5104 = vst.msk [vmem:[%s5092 + $0x130] sm:$0xff] %vm3040, %v4923
      %5105 = vst.msk [vmem:[%s5092 + $0x140] sm:$0xff] %vm3040, %v4925
      %5106 = vst.msk [vmem:[%s5092 + $0x150] sm:$0xff] %vm3040, %v4927
      %5107 = vst.msk [vmem:[%s5092 + $0x160] sm:$0xff] %vm3040, %v4929
      %5108 = vst.msk [vmem:[%s5092 + $0x170] sm:$0xff] %vm3040, %v4931
      %5109 = vst.msk [vmem:[%s5092 + $0x200] sm:$0xff] %vm3040, %v4933
      %5110 = vst.msk [vmem:[%s5092 + $0x210] sm:$0xff] %vm3040, %v4935
      %5111 = vst.msk [vmem:[%s5092 + $0x220] sm:$0xff] %vm3040, %v4937
      %5112 = vst.msk [vmem:[%s5092 + $0x230] sm:$0xff] %vm3040, %v4939
      %5113 = vst.msk [vmem:[%s5092 + $0x240] sm:$0xff] %vm3040, %v4941
      %5114 = vst.msk [vmem:[%s5092 + $0x250] sm:$0xff] %vm3040, %v4943
      %5115 = vst.msk [vmem:[%s5092 + $0x260] sm:$0xff] %vm3040, %v4945
      %5116 = vst.msk [vmem:[%s5092 + $0x270] sm:$0xff] %vm3040, %v4947
      %5117 = vst.msk [vmem:[%s5092 + $0x300] sm:$0xff] %vm3040, %v4949
      %5118 = vst.msk [vmem:[%s5092 + $0x310] sm:$0xff] %vm3040, %v4951
      %5119 = vst.msk [vmem:[%s5092 + $0x320] sm:$0xff] %vm3040, %v4953
      %5120 = vst.msk [vmem:[%s5092 + $0x330] sm:$0xff] %vm3040, %v4955
      %5121 = vst.msk [vmem:[%s5092 + $0x340] sm:$0xff] %vm3040, %v4957
      %5122 = vst.msk [vmem:[%s5092 + $0x350] sm:$0xff] %vm3040, %v4959
      %5123 = vst.msk [vmem:[%s5092 + $0x360] sm:$0xff] %vm3040, %v4961
      %5124 = vst.msk [vmem:[%s5092 + $0x370] sm:$0xff] %vm3040, %v4963
      %5125 = vst.msk [vmem:[%s5092 + $0x400] sm:$0xff] %vm3040, %v4965
      %5126 = vst.msk [vmem:[%s5092 + $0x410] sm:$0xff] %vm3040, %v4967
      %5127 = vst.msk [vmem:[%s5092 + $0x420] sm:$0xff] %vm3040, %v4969
      %5128 = vst.msk [vmem:[%s5092 + $0x430] sm:$0xff] %vm3040, %v4971
      %5129 = vst.msk [vmem:[%s5092 + $0x440] sm:$0xff] %vm3040, %v4973
      %5130 = vst.msk [vmem:[%s5092 + $0x450] sm:$0xff] %vm3040, %v4975
      %5131 = vst.msk [vmem:[%s5092 + $0x460] sm:$0xff] %vm3040, %v4977
      %5132 = vst.msk [vmem:[%s5092 + $0x470] sm:$0xff] %vm3040, %v4979
      %5133 = vst.msk [vmem:[%s5092 + $0x500] sm:$0xff] %vm3040, %v4981
      %5134 = vst.msk [vmem:[%s5092 + $0x510] sm:$0xff] %vm3040, %v4983
      %5135 = vst.msk [vmem:[%s5092 + $0x520] sm:$0xff] %vm3040, %v4985
      %5136 = vst.msk [vmem:[%s5092 + $0x530] sm:$0xff] %vm3040, %v4987
      %5137 = vst.msk [vmem:[%s5092 + $0x540] sm:$0xff] %vm3040, %v4989
      %5138 = vst.msk [vmem:[%s5092 + $0x550] sm:$0xff] %vm3040, %v4991
      %5139 = vst.msk [vmem:[%s5092 + $0x560] sm:$0xff] %vm3040, %v4993
      %5140 = vst.msk [vmem:[%s5092 + $0x570] sm:$0xff] %vm3040, %v4995
      %5141 = vst.msk [vmem:[%s5092 + $0x600] sm:$0xff] %vm3040, %v4997
      %5142 = vst.msk [vmem:[%s5092 + $0x610] sm:$0xff] %vm3040, %v4999
      %5143 = vst.msk [vmem:[%s5092 + $0x620] sm:$0xff] %vm3040, %v5001
      %5144 = vst.msk [vmem:[%s5092 + $0x630] sm:$0xff] %vm3040, %v5003
      %5145 = vst.msk [vmem:[%s5092 + $0x640] sm:$0xff] %vm3040, %v5005
      %5146 = vst.msk [vmem:[%s5092 + $0x650] sm:$0xff] %vm3040, %v5007
      %5147 = vst.msk [vmem:[%s5092 + $0x660] sm:$0xff] %vm3040, %v5009
      %5148 = vst.msk [vmem:[%s5092 + $0x670] sm:$0xff] %vm3040, %v5011
      %5149 = vst.msk [vmem:[%s5092 + $0x700] sm:$0xff] %vm3040, %v5013
      %5150 = vst.msk [vmem:[%s5092 + $0x710] sm:$0xff] %vm3040, %v5015
      %5151 = vst.msk [vmem:[%s5092 + $0x720] sm:$0xff] %vm3040, %v5017
      %5152 = vst.msk [vmem:[%s5092 + $0x730] sm:$0xff] %vm3040, %v5019
      %5153 = vst.msk [vmem:[%s5092 + $0x740] sm:$0xff] %vm3040, %v5021
      %5154 = vst.msk [vmem:[%s5092 + $0x750] sm:$0xff] %vm3040, %v5023
      %5155 = vst.msk [vmem:[%s5092 + $0x760] sm:$0xff] %vm3040, %v5025
      %5156 = vst.msk [vmem:[%s5092 + $0x770] sm:$0xff] %vm3040, %v5027
      %v5157 = vld [vmem:[#allocation2] sm:$0xff]
      %v5158 = vld [vmem:[#allocation2 + $0x8] sm:$0xff]
      %v5159 = vld [vmem:[#allocation2 + $0x10] sm:$0xff]
      %v5160 = vld [vmem:[#allocation2 + $0x18] sm:$0xff]
      %v5161 = vld [vmem:[#allocation2 + $0x20] sm:$0xff]
      %v5162 = vld [vmem:[#allocation2 + $0x28] sm:$0xff]
      %v5163 = vld [vmem:[#allocation2 + $0x30] sm:$0xff]
      %v5164 = vld [vmem:[#allocation2 + $0x38] sm:$0xff]
      %v5165 = vld [vmem:[#allocation2 + $0x40] sm:$0xff]
      %v5166 = vld [vmem:[#allocation2 + $0x48] sm:$0xff]
      %v5167 = vld [vmem:[#allocation2 + $0x50] sm:$0xff]
      %v5168 = vld [vmem:[#allocation2 + $0x58] sm:$0xff]
      %v5169 = vld [vmem:[#allocation2 + $0x60] sm:$0xff]
      %v5170 = vld [vmem:[#allocation2 + $0x68] sm:$0xff]
      %v5171 = vld [vmem:[#allocation2 + $0x70] sm:$0xff]
      %v5172 = vld [vmem:[#allocation2 + $0x78] sm:$0xff]
      %v5173 = vld [vmem:[#allocation2 + $0x80] sm:$0xff]
      %v5174 = vld [vmem:[#allocation2 + $0x88] sm:$0xff]
      %v5175 = vld [vmem:[#allocation2 + $0x90] sm:$0xff]
      %v5176 = vld [vmem:[#allocation2 + $0x98] sm:$0xff]
      %v5177 = vld [vmem:[#allocation2 + $0xa0] sm:$0xff]
      %v5178 = vld [vmem:[#allocation2 + $0xa8] sm:$0xff]
      %v5179 = vld [vmem:[#allocation2 + $0xb0] sm:$0xff]
      %v5180 = vld [vmem:[#allocation2 + $0xb8] sm:$0xff]
      %v5181 = vld [vmem:[#allocation2 + $0xc0] sm:$0xff]
      %v5182 = vld [vmem:[#allocation2 + $0xc8] sm:$0xff]
      %v5183 = vld [vmem:[#allocation2 + $0xd0] sm:$0xff]
      %v5184 = vld [vmem:[#allocation2 + $0xd8] sm:$0xff]
      %v5185 = vld [vmem:[#allocation2 + $0xe0] sm:$0xff]
      %v5186 = vld [vmem:[#allocation2 + $0xe8] sm:$0xff]
      %v5187 = vld [vmem:[#allocation2 + $0xf0] sm:$0xff]
      %v5188 = vld [vmem:[#allocation2 + $0xf8] sm:$0xff]
      %v5189 = vld [vmem:[#allocation2 + $0x100] sm:$0xff]
      %v5190 = vld [vmem:[#allocation2 + $0x108] sm:$0xff]
      %v5191 = vld [vmem:[#allocation2 + $0x110] sm:$0xff]
      %v5192 = vld [vmem:[#allocation2 + $0x118] sm:$0xff]
      %v5193 = vld [vmem:[#allocation2 + $0x120] sm:$0xff]
      %v5194 = vld [vmem:[#allocation2 + $0x128] sm:$0xff]
      %v5195 = vld [vmem:[#allocation2 + $0x130] sm:$0xff]
      %v5196 = vld [vmem:[#allocation2 + $0x138] sm:$0xff]
      %v5197 = vld [vmem:[#allocation2 + $0x140] sm:$0xff]
      %v5198 = vld [vmem:[#allocation2 + $0x148] sm:$0xff]
      %v5199 = vld [vmem:[#allocation2 + $0x150] sm:$0xff]
      %v5200 = vld [vmem:[#allocation2 + $0x158] sm:$0xff]
      %v5201 = vld [vmem:[#allocation2 + $0x160] sm:$0xff]
      %v5202 = vld [vmem:[#allocation2 + $0x168] sm:$0xff]
      %v5203 = vld [vmem:[#allocation2 + $0x170] sm:$0xff]
      %v5204 = vld [vmem:[#allocation2 + $0x178] sm:$0xff]
      %v5205 = vld [vmem:[#allocation2 + $0x180] sm:$0xff]
      %v5206 = vld [vmem:[#allocation2 + $0x188] sm:$0xff]
      %v5207 = vld [vmem:[#allocation2 + $0x190] sm:$0xff]
      %v5208 = vld [vmem:[#allocation2 + $0x198] sm:$0xff]
      %v5209 = vld [vmem:[#allocation2 + $0x1a0] sm:$0xff]
      %v5210 = vld [vmem:[#allocation2 + $0x1a8] sm:$0xff]
      %v5211 = vld [vmem:[#allocation2 + $0x1b0] sm:$0xff]
      %v5212 = vld [vmem:[#allocation2 + $0x1b8] sm:$0xff]
      %v5213 = vld [vmem:[#allocation2 + $0x1c0] sm:$0xff]
      %v5214 = vld [vmem:[#allocation2 + $0x1c8] sm:$0xff]
      %v5215 = vld [vmem:[#allocation2 + $0x1d0] sm:$0xff]
      %v5216 = vld [vmem:[#allocation2 + $0x1d8] sm:$0xff]
      %v5217 = vld [vmem:[#allocation2 + $0x1e0] sm:$0xff]
      %v5218 = vld [vmem:[#allocation2 + $0x1e8] sm:$0xff]
      %v5219 = vld [vmem:[#allocation2 + $0x1f0] sm:$0xff]
      %v5220 = vld [vmem:[#allocation2 + $0x1f8] sm:$0xff]
      %5285 = vrot.lane.b32.xlu0 %v5157, 64
      %v5286 = vpop.permute.xlu0 %5285
      %5287 = vrot.lane.b32.xlu0 %v5158, 64
      %v5288 = vpop.permute.xlu0 %5287
      %5289 = vrot.lane.b32.xlu0 %v5159, 64
      %v5290 = vpop.permute.xlu0 %5289
      %5291 = vrot.lane.b32.xlu0 %v5160, 64
      %v5292 = vpop.permute.xlu0 %5291
      %5293 = vrot.lane.b32.xlu0 %v5161, 64
      %v5294 = vpop.permute.xlu0 %5293
      %5295 = vrot.lane.b32.xlu0 %v5162, 64
      %v5296 = vpop.permute.xlu0 %5295
      %5297 = vrot.lane.b32.xlu0 %v5163, 64
      %v5298 = vpop.permute.xlu0 %5297
      %5299 = vrot.lane.b32.xlu0 %v5164, 64
      %v5300 = vpop.permute.xlu0 %5299
      %5301 = vrot.lane.b32.xlu0 %v5165, 64
      %v5302 = vpop.permute.xlu0 %5301
      %5303 = vrot.lane.b32.xlu0 %v5166, 64
      %v5304 = vpop.permute.xlu0 %5303
      %5305 = vrot.lane.b32.xlu0 %v5167, 64
      %v5306 = vpop.permute.xlu0 %5305
      %5307 = vrot.lane.b32.xlu0 %v5168, 64
      %v5308 = vpop.permute.xlu0 %5307
      %5309 = vrot.lane.b32.xlu0 %v5169, 64
      %v5310 = vpop.permute.xlu0 %5309
      %5311 = vrot.lane.b32.xlu0 %v5170, 64
      %v5312 = vpop.permute.xlu0 %5311
      %5313 = vrot.lane.b32.xlu0 %v5171, 64
      %v5314 = vpop.permute.xlu0 %5313
      %5315 = vrot.lane.b32.xlu0 %v5172, 64
      %v5316 = vpop.permute.xlu0 %5315
      %5317 = vrot.lane.b32.xlu0 %v5173, 64
      %v5318 = vpop.permute.xlu0 %5317
      %5319 = vrot.lane.b32.xlu0 %v5174, 64
      %v5320 = vpop.permute.xlu0 %5319
      %5321 = vrot.lane.b32.xlu0 %v5175, 64
      %v5322 = vpop.permute.xlu0 %5321
      %5323 = vrot.lane.b32.xlu0 %v5176, 64
      %v5324 = vpop.permute.xlu0 %5323
      %5325 = vrot.lane.b32.xlu0 %v5177, 64
      %v5326 = vpop.permute.xlu0 %5325
      %5327 = vrot.lane.b32.xlu0 %v5178, 64
      %v5328 = vpop.permute.xlu0 %5327
      %5329 = vrot.lane.b32.xlu0 %v5179, 64
      %v5330 = vpop.permute.xlu0 %5329
      %5331 = vrot.lane.b32.xlu0 %v5180, 64
      %v5332 = vpop.permute.xlu0 %5331
      %5333 = vrot.lane.b32.xlu0 %v5181, 64
      %v5334 = vpop.permute.xlu0 %5333
      %5335 = vrot.lane.b32.xlu0 %v5182, 64
      %v5336 = vpop.permute.xlu0 %5335
      %5337 = vrot.lane.b32.xlu0 %v5183, 64
      %v5338 = vpop.permute.xlu0 %5337
      %5339 = vrot.lane.b32.xlu0 %v5184, 64
      %v5340 = vpop.permute.xlu0 %5339
      %5341 = vrot.lane.b32.xlu0 %v5185, 64
      %v5342 = vpop.permute.xlu0 %5341
      %5343 = vrot.lane.b32.xlu0 %v5186, 64
      %v5344 = vpop.permute.xlu0 %5343
      %5345 = vrot.lane.b32.xlu0 %v5187, 64
      %v5346 = vpop.permute.xlu0 %5345
      %5347 = vrot.lane.b32.xlu0 %v5188, 64
      %v5348 = vpop.permute.xlu0 %5347
      %5349 = vrot.lane.b32.xlu0 %v5189, 64
      %v5350 = vpop.permute.xlu0 %5349
      %5351 = vrot.lane.b32.xlu0 %v5190, 64
      %v5352 = vpop.permute.xlu0 %5351
      %5353 = vrot.lane.b32.xlu0 %v5191, 64
      %v5354 = vpop.permute.xlu0 %5353
      %5355 = vrot.lane.b32.xlu0 %v5192, 64
      %v5356 = vpop.permute.xlu0 %5355
      %5357 = vrot.lane.b32.xlu0 %v5193, 64
      %v5358 = vpop.permute.xlu0 %5357
      %5359 = vrot.lane.b32.xlu0 %v5194, 64
      %v5360 = vpop.permute.xlu0 %5359
      %5361 = vrot.lane.b32.xlu0 %v5195, 64
      %v5362 = vpop.permute.xlu0 %5361
      %5363 = vrot.lane.b32.xlu0 %v5196, 64
      %v5364 = vpop.permute.xlu0 %5363
      %5365 = vrot.lane.b32.xlu0 %v5197, 64
      %v5366 = vpop.permute.xlu0 %5365
      %5367 = vrot.lane.b32.xlu0 %v5198, 64
      %v5368 = vpop.permute.xlu0 %5367
      %5369 = vrot.lane.b32.xlu0 %v5199, 64
      %v5370 = vpop.permute.xlu0 %5369
      %5371 = vrot.lane.b32.xlu0 %v5200, 64
      %v5372 = vpop.permute.xlu0 %5371
      %5373 = vrot.lane.b32.xlu0 %v5201, 64
      %v5374 = vpop.permute.xlu0 %5373
      %5375 = vrot.lane.b32.xlu0 %v5202, 64
      %v5376 = vpop.permute.xlu0 %5375
      %5377 = vrot.lane.b32.xlu0 %v5203, 64
      %v5378 = vpop.permute.xlu0 %5377
      %5379 = vrot.lane.b32.xlu0 %v5204, 64
      %v5380 = vpop.permute.xlu0 %5379
      %5381 = vrot.lane.b32.xlu0 %v5205, 64
      %v5382 = vpop.permute.xlu0 %5381
      %5383 = vrot.lane.b32.xlu0 %v5206, 64
      %v5384 = vpop.permute.xlu0 %5383
      %5385 = vrot.lane.b32.xlu0 %v5207, 64
      %v5386 = vpop.permute.xlu0 %5385
      %5387 = vrot.lane.b32.xlu0 %v5208, 64
      %v5388 = vpop.permute.xlu0 %5387
      %5389 = vrot.lane.b32.xlu0 %v5209, 64
      %v5390 = vpop.permute.xlu0 %5389
      %5391 = vrot.lane.b32.xlu0 %v5210, 64
      %v5392 = vpop.permute.xlu0 %5391
      %5393 = vrot.lane.b32.xlu0 %v5211, 64
      %v5394 = vpop.permute.xlu0 %5393
      %5395 = vrot.lane.b32.xlu0 %v5212, 64
      %v5396 = vpop.permute.xlu0 %5395
      %5397 = vrot.lane.b32.xlu0 %v5213, 64
      %v5398 = vpop.permute.xlu0 %5397
      %5399 = vrot.lane.b32.xlu0 %v5214, 64
      %v5400 = vpop.permute.xlu0 %5399
      %5401 = vrot.lane.b32.xlu0 %v5215, 64
      %v5402 = vpop.permute.xlu0 %5401
      %5403 = vrot.lane.b32.xlu0 %v5216, 64
      %v5404 = vpop.permute.xlu0 %5403
      %5405 = vrot.lane.b32.xlu0 %v5217, 64
      %v5406 = vpop.permute.xlu0 %5405
      %5407 = vrot.lane.b32.xlu0 %v5218, 64
      %v5408 = vpop.permute.xlu0 %5407
      %5409 = vrot.lane.b32.xlu0 %v5219, 64
      %v5410 = vpop.permute.xlu0 %5409
      %5411 = vrot.lane.b32.xlu0 %v5220, 64
      %v5412 = vpop.permute.xlu0 %5411
      %5477 = vst.msk [vmem:[%s5092] sm:$0xff] %vm3425, %v5286
      %5478 = vst.msk [vmem:[%s5092 + $0x10] sm:$0xff] %vm3425, %v5288
      %5479 = vst.msk [vmem:[%s5092 + $0x20] sm:$0xff] %vm3425, %v5290
      %5480 = vst.msk [vmem:[%s5092 + $0x30] sm:$0xff] %vm3425, %v5292
      %5481 = vst.msk [vmem:[%s5092 + $0x40] sm:$0xff] %vm3425, %v5294
      %5482 = vst.msk [vmem:[%s5092 + $0x50] sm:$0xff] %vm3425, %v5296
      %5483 = vst.msk [vmem:[%s5092 + $0x60] sm:$0xff] %vm3425, %v5298
      %5484 = vst.msk [vmem:[%s5092 + $0x70] sm:$0xff] %vm3425, %v5300
      %5485 = vst.msk [vmem:[%s5092 + $0x100] sm:$0xff] %vm3425, %v5302
      %5486 = vst.msk [vmem:[%s5092 + $0x110] sm:$0xff] %vm3425, %v5304
      %5487 = vst.msk [vmem:[%s5092 + $0x120] sm:$0xff] %vm3425, %v5306
      %5488 = vst.msk [vmem:[%s5092 + $0x130] sm:$0xff] %vm3425, %v5308
      %5489 = vst.msk [vmem:[%s5092 + $0x140] sm:$0xff] %vm3425, %v5310
      %5490 = vst.msk [vmem:[%s5092 + $0x150] sm:$0xff] %vm3425, %v5312
      %5491 = vst.msk [vmem:[%s5092 + $0x160] sm:$0xff] %vm3425, %v5314
      %5492 = vst.msk [vmem:[%s5092 + $0x170] sm:$0xff] %vm3425, %v5316
      %5493 = vst.msk [vmem:[%s5092 + $0x200] sm:$0xff] %vm3425, %v5318
      %5494 = vst.msk [vmem:[%s5092 + $0x210] sm:$0xff] %vm3425, %v5320
      %5495 = vst.msk [vmem:[%s5092 + $0x220] sm:$0xff] %vm3425, %v5322
      %5496 = vst.msk [vmem:[%s5092 + $0x230] sm:$0xff] %vm3425, %v5324
      %5497 = vst.msk [vmem:[%s5092 + $0x240] sm:$0xff] %vm3425, %v5326
      %5498 = vst.msk [vmem:[%s5092 + $0x250] sm:$0xff] %vm3425, %v5328
      %5499 = vst.msk [vmem:[%s5092 + $0x260] sm:$0xff] %vm3425, %v5330
      %5500 = vst.msk [vmem:[%s5092 + $0x270] sm:$0xff] %vm3425, %v5332
      %5501 = vst.msk [vmem:[%s5092 + $0x300] sm:$0xff] %vm3425, %v5334
      %5502 = vst.msk [vmem:[%s5092 + $0x310] sm:$0xff] %vm3425, %v5336
      %5503 = vst.msk [vmem:[%s5092 + $0x320] sm:$0xff] %vm3425, %v5338
      %5504 = vst.msk [vmem:[%s5092 + $0x330] sm:$0xff] %vm3425, %v5340
      %5505 = vst.msk [vmem:[%s5092 + $0x340] sm:$0xff] %vm3425, %v5342
      %5506 = vst.msk [vmem:[%s5092 + $0x350] sm:$0xff] %vm3425, %v5344
      %5507 = vst.msk [vmem:[%s5092 + $0x360] sm:$0xff] %vm3425, %v5346
      %5508 = vst.msk [vmem:[%s5092 + $0x370] sm:$0xff] %vm3425, %v5348
      %5509 = vst.msk [vmem:[%s5092 + $0x400] sm:$0xff] %vm3425, %v5350
      %5510 = vst.msk [vmem:[%s5092 + $0x410] sm:$0xff] %vm3425, %v5352
      %5511 = vst.msk [vmem:[%s5092 + $0x420] sm:$0xff] %vm3425, %v5354
      %5512 = vst.msk [vmem:[%s5092 + $0x430] sm:$0xff] %vm3425, %v5356
      %5513 = vst.msk [vmem:[%s5092 + $0x440] sm:$0xff] %vm3425, %v5358
      %5514 = vst.msk [vmem:[%s5092 + $0x450] sm:$0xff] %vm3425, %v5360
      %5515 = vst.msk [vmem:[%s5092 + $0x460] sm:$0xff] %vm3425, %v5362
      %5516 = vst.msk [vmem:[%s5092 + $0x470] sm:$0xff] %vm3425, %v5364
      %5517 = vst.msk [vmem:[%s5092 + $0x500] sm:$0xff] %vm3425, %v5366
      %5518 = vst.msk [vmem:[%s5092 + $0x510] sm:$0xff] %vm3425, %v5368
      %5519 = vst.msk [vmem:[%s5092 + $0x520] sm:$0xff] %vm3425, %v5370
      %5520 = vst.msk [vmem:[%s5092 + $0x530] sm:$0xff] %vm3425, %v5372
      %5521 = vst.msk [vmem:[%s5092 + $0x540] sm:$0xff] %vm3425, %v5374
      %5522 = vst.msk [vmem:[%s5092 + $0x550] sm:$0xff] %vm3425, %v5376
      %5523 = vst.msk [vmem:[%s5092 + $0x560] sm:$0xff] %vm3425, %v5378
      %5524 = vst.msk [vmem:[%s5092 + $0x570] sm:$0xff] %vm3425, %v5380
      %5525 = vst.msk [vmem:[%s5092 + $0x600] sm:$0xff] %vm3425, %v5382
      %5526 = vst.msk [vmem:[%s5092 + $0x610] sm:$0xff] %vm3425, %v5384
      %5527 = vst.msk [vmem:[%s5092 + $0x620] sm:$0xff] %vm3425, %v5386
      %5528 = vst.msk [vmem:[%s5092 + $0x630] sm:$0xff] %vm3425, %v5388
      %5529 = vst.msk [vmem:[%s5092 + $0x640] sm:$0xff] %vm3425, %v5390
      %5530 = vst.msk [vmem:[%s5092 + $0x650] sm:$0xff] %vm3425, %v5392
      %5531 = vst.msk [vmem:[%s5092 + $0x660] sm:$0xff] %vm3425, %v5394
      %5532 = vst.msk [vmem:[%s5092 + $0x670] sm:$0xff] %vm3425, %v5396
      %5533 = vst.msk [vmem:[%s5092 + $0x700] sm:$0xff] %vm3425, %v5398
      %5534 = vst.msk [vmem:[%s5092 + $0x710] sm:$0xff] %vm3425, %v5400
      %5535 = vst.msk [vmem:[%s5092 + $0x720] sm:$0xff] %vm3425, %v5402
      %5536 = vst.msk [vmem:[%s5092 + $0x730] sm:$0xff] %vm3425, %v5404
      %5537 = vst.msk [vmem:[%s5092 + $0x740] sm:$0xff] %vm3425, %v5406
      %5538 = vst.msk [vmem:[%s5092 + $0x750] sm:$0xff] %vm3425, %v5408
      %5539 = vst.msk [vmem:[%s5092 + $0x760] sm:$0xff] %vm3425, %v5410
      %5540 = vst.msk [vmem:[%s5092 + $0x770] sm:$0xff] %vm3425, %v5412
      %s5541 = smul.u32 8, %s15
      %p5542 = scmp.lt.s32.totalorder %s5541, 15
      %s5543 = scalar_select %p5542, %s5541, 15
      %s5544 = smul.addr %s5543, 32
      %s5545 = smul.addr %s5544, 8
      %s5546 = scalar_lea.vmem %s4, %s5545
      // Predicated region
      $region37: #{upconcat.1} parent=35 // pred_check
        %p5547 = pneg %p127
      $region38: #{upconcat.1} parent=35 // pred_check_branch
        %5549 = sbr.rel (%p5547) target = $region40
      $region39: #{upconcat.1} parent=35 // pred_region
        %s5550 = smul.u32 8, %s15
      $region40: #{upconcat.1} parent=35 // pred_fallthru
        _
    $region36: #{upconcat.1} parent=5 // pred_fallthru
      _
    %p5551 = scmp.le.s32.totalorder 2, %s10
    // Predicated region
    $region41: #{upconcat.1} parent=5 // pred_check
      %p5552 = pneg %p5551
    $region42: #{upconcat.1} parent=5 // pred_check_branch
      %5554 = sbr.rel (%p5552) target = $region44
    $region43: #{upconcat.1} parent=5 // pred_region
      %s5555 = ssub.s32 %s10, 2
      // Predicated region
      $region45: #{upconcat.1} parent=43 // pred_check
        %p5556 = pneg %p133
      $region46: #{upconcat.1} parent=43 // pred_check_branch
        %5558 = sbr.rel (%p5556) target = $region48
      $region47: #{upconcat.1} parent=43 // pred_region
        %s5559 = smul.u32 8, %s16
        %p5560 = scmp.lt.s32.totalorder %s5559, 15
        %s5561 = scalar_select %p5560, %s5559, 15
        %s5562 = smul.addr %s5561, 32
        %s5563 = smul.addr %s5562, 8
        %s5564 = scalar_lea.vmem %s4, %s5563
      $region48: #{upconcat.1} parent=43 // pred_fallthru
        _
    $region44: #{upconcat.1} parent=5 // pred_fallthru
      _
  $region6: #{upconcat.1} parent=0 // loop_footer
    %s14 = sadd.s32 1, %s10
  $region7: #{upconcat.1} parent=0 // loop_footer_branch
    %9 = sbr.rel target = $region3
  $region8: #{upconcat.1} parent=0 // loop_exit
    _

</llo_original>
